<compile_context>
chip_gen: v6e
topology: v6e:2x2x1
jax: 0.10.0
libtpu: 0.0.40
codegen_flags: <defaults>
</compile_context>

<pallas_src>
import functools

import numpy as np

import jax
import jax.numpy as jnp
from jax import lax
from jax.experimental import pallas as pl
from jax.experimental.pallas import tpu as pltpu


# ------------------------------ small helpers --------------------------------

def _round_up(x, n):
    return ((x + n - 1) // n) * n


@functools.lru_cache(maxsize=None)
def _tensorcores_per_chip() -> int:
    """Best-effort TensorCores-per-chip detection (v7x => 2, else 1)."""
    try:
        kind = jax.devices()[0].device_kind.lower()
    except Exception:
        return 1
    return 2 if ("v7" in kind or "7x" in kind) else 1


@functools.lru_cache(maxsize=None)
def _roll_mode() -> str:
    """Probe pltpu.roll's rotation direction once; fall back to slice+concat."""
    def _k(x_ref, o_ref):
        o_ref[...] = pltpu.roll(x_ref[...], 1, axis=1)

    try:
        x = jnp.tile(jnp.arange(128, dtype=jnp.float32)[None, :], (8, 1))
        y = pl.pallas_call(
            _k, out_shape=jax.ShapeDtypeStruct((8, 128), jnp.float32))(x)
        first = float(jax.device_get(y)[0, 0])
    except Exception:
        return "concat"
    if first == 127.0:    # matches np.roll: out[i] = x[(i - shift) % n]
        return "np"
    if first == 1.0:      # opposite convention
        return "rev"
    return "concat"


def _build_tap_masks(k, p, h, w):
    """(k*k, h*w) 0/1 masks emulating zero padding, + per-tap 'all ones' flags."""
    m = h * w
    yy, xx = np.divmod(np.arange(m, dtype=np.int64), w)
    rows, trivial = [], []
    for t in range(k * k):
        dy, dx = t // k - p, t % k - p
        ok = ((yy + dy >= 0) & (yy + dy < h) & (xx + dx >= 0) & (xx + dx < w))
        rows.append(ok.astype(np.float32))
        trivial.append(bool(ok.all()))
    return np.stack(rows, axis=0), tuple(trivial)


def _build_stride_sel(h, w, ho, wo, s):
    """(h*w, ho*wo) 0/1 matrix: out[:, po] = acc[:, (s*yo)*w + s*xo]."""
    sel = np.zeros((h * w, ho * wo), np.float32)
    for yo in range(ho):
        for xo in range(wo):
            sel[(s * yo) * w + (s * xo), yo * wo + xo] = 1.0
    return sel


# ----------------------------- fused kernel body ------------------------------

def _make_fused_kernel(layer_cfgs, h0, w0, ipp, trivials, roll_mode):
    """layer_cfgs: tuple of (k, stride, pad, cin(padded), cout, has_sel).

    One grid step processes `ipp` images; activations stay in VMEM/vregs in a
    channel-major (C, H*W) layout the whole time.
    """
    n_layers = len(layer_cfgs)

    def shift_cols(a, delta, m):
        # out[:, pos] = a[:, (pos + delta) % m]   (delta is a static Python int)
        d = delta % m
        if d == 0:
            return a
        if roll_mode == "np":
            return pltpu.roll(a, (m - d) % m, axis=1)
        if roll_mode == "rev":
            return pltpu.roll(a, d, axis=1)
        return jnp.concatenate([a[:, d:], a[:, :d]], axis=1)   # fallback

    def kernel(*refs):
        # Parse refs: x, then per layer (W_packed, bias, masks[, sel]), then outputs.
        pos = 1
        lrefs = []
        for (_, _, _, _, _, has_sel) in layer_cfgs:
            take = 4 if has_sel else 3
            lrefs.append(refs[pos:pos + take])
            pos += take
        o_refs = refs[pos:]

        a_all = refs[0][...]                      # (ipp*cin0, h0*w0), f32
        h, w = h0, w0
        for li, (k, s, p, cin, cout, has_sel) in enumerate(layer_cfgs):
            m = h * w
            w_ref, b_ref, m_ref = lrefs[li][:3]
            W = w_ref[...]                        # (cout, k*k*cin)
            bias = b_ref[...]                     # (cout, 1)
            masks = m_ref[...]                    # (k*k, m)
            sel = lrefs[li][3][...] if has_sel else None   # (m, ho*wo)

            # Rolled (+masked) tap copies of the whole (ipp*cin, m) block;
            # rolls act per-row so images never mix.
            rolled = []
            for t in range(k * k):
                dy, dx = t // k - p, t % k - p
                r = shift_cols(a_all, dy * w + dx, m)
                if not trivials[li][t]:
                    r = r * masks[t:t + 1, :]
                rolled.append(r)

            ho = (h + 2 * p - k) // s + 1
            wo = (w + 2 * p - k) // s + 1
            nxt = []
            for i in range(ipp):
                if ipp == 1:
                    parts = rolled
                else:
                    parts = [r[i * cin:(i + 1) * cin, :] for r in rolled]
                a_pack = jnp.concatenate(parts, axis=0)       # (k*k*cin, m)
                z = jnp.dot(W, a_pack, preferred_element_type=jnp.float32)
                if has_sel:
                    # stride-s subsampling as one constant 0/1 selection matmul
                    z = jnp.dot(z, sel, preferred_element_type=jnp.float32)
                z = z + bias                                  # (cout, ho*wo)
                if ipp == 1:
                    o_refs[li][...] = z.astype(o_refs[li].dtype)
                else:
                    o_refs[li][i * cout:(i + 1) * cout, :] = z.astype(o_refs[li].dtype)
                if li + 1 < n_layers:
                    nxt.append(jnp.maximum(z, 0.0))           # ReLU feeds next layer
            if li + 1 < n_layers:
                a_all = nxt[0] if ipp == 1 else jnp.concatenate(nxt, axis=0)
            h, w = ho, wo

    return kernel


# --------------------------- fused forward wrapper ----------------------------

@functools.partial(jax.jit, static_argnames=("layer_specs", "roll_mode", "n_tc"))
def _forward_impl(x_nchw, params, *, layer_specs, roll_mode, n_tc):
    B, cin0, H, W = x_nchw.shape
    cin0_pad = _round_up(cin0, 8)

    # NCHW -> (B*cin0_pad, H*W): pure reshape (+ channel zero-pad), no transpose.
    x3 = x_nchw.reshape(B, cin0, H * W).astype(jnp.float32)
    if cin0_pad != cin0:
        x3 = jnp.pad(x3, ((0, 0), (0, cin0_pad - cin0), (0, 0)))
    x2d = x3.reshape(B * cin0_pad, H * W)

    # Grid policy: one step on single-TC chips, one step per TC on v7x.
    G = n_tc if (n_tc > 1 and B % n_tc == 0) else 1
    ipp = B // G

    layer_cfgs, trivials = [], []
    kern_args = [x2d]
    in_specs = [pl.BlockSpec((ipp * cin0_pad, H * W), lambda g: (g, 0))]
    out_shapes, out_specs, out_meta = [], [], []

    h, w = H, W
    cin, cin_pad = cin0, cin0_pad
    flops = 0
    bytes_acc = x2d.size * 4

    for (wt, bias), (s, p) in zip(params, layer_specs):
        cout, cin_w, kh, kw = wt.shape
        assert cin_w == cin and kh == kw
        k = kh

        # OIHW -> (Cout, k*k*Cin_pad): packed tap-major / channel-minor.
        wt_p = wt if cin_pad == cin else jnp.pad(
            wt, ((0, 0), (0, cin_pad - cin), (0, 0), (0, 0)))
        w_packed = jnp.transpose(wt_p, (0, 2, 3, 1)).reshape(
            cout, k * k * cin_pad).astype(jnp.float32)
        b2 = bias.reshape(cout, 1).astype(jnp.float32)
        mask_np, triv = _build_tap_masks(k, p, h, w)

        kern_args += [w_packed, b2, jnp.asarray(mask_np)]
        in_specs += [
            pl.BlockSpec((cout, k * k * cin_pad), lambda g: (0, 0)),
            pl.BlockSpec((cout, 1), lambda g: (0, 0)),
            pl.BlockSpec((k * k, h * w), lambda g: (0, 0)),
        ]

        ho = (h + 2 * p - k) // s + 1
        wo = (w + 2 * p - k) // s + 1
        has_sel = (s != 1)
        if has_sel:
            sel_np = _build_stride_sel(h, w, ho, wo, s)
            kern_args.append(jnp.asarray(sel_np))
            in_specs.append(pl.BlockSpec((h * w, ho * wo), lambda g: (0, 0)))

        layer_cfgs.append((k, s, p, cin_pad, cout, has_sel))
        trivials.append(triv)

        out_shapes.append(jax.ShapeDtypeStruct((B * cout, ho * wo), jnp.float32))
        out_specs.append(pl.BlockSpec((ipp * cout, ho * wo), lambda g: (g, 0)))
        out_meta.append((cout, ho, wo))

        flops += 2 * B * (h * w) * (k * k * cin_pad) * cout
        if has_sel:
            flops += 2 * B * cout * (h * w) * (ho * wo)
            bytes_acc += (h * w) * (ho * wo) * 4
        bytes_acc += (w_packed.size + b2.size + mask_np.size) * 4
        bytes_acc += B * cout * ho * wo * 4

        h, w = ho, wo
        cin, cin_pad = cout, cout   # intermediate channel counts are multiples of 8 here

    kernel = _make_fused_kernel(tuple(layer_cfgs), H, W, ipp, tuple(trivials),
                                roll_mode)

    outs = pl.pallas_call(
        kernel,
        out_shape=tuple(out_shapes),
        grid=(G,),
        in_specs=in_specs,
        out_specs=tuple(out_specs),
        compiler_params=pltpu.CompilerParams(
            dimension_semantics=(("parallel",) if G > 1 else ("arbitrary",))),
        cost_estimate=pl.CostEstimate(flops=int(flops), transcendentals=0,
                                      bytes_accessed=int(bytes_acc)),
    )(*kern_args)

    # (B*Cout, Ho*Wo) -> NCHW is a pure reshape: no output transposes.
    return {str((B, cout, ho, wo)): o.reshape(B, cout, ho, wo)
            for (cout, ho, wo), o in zip(out_meta, outs)}


def condition_encoder_forward(x_nchw, params, *, layer_specs):
    """Fused Conditionencoder forward (returns {str(nchw_shape): nchw_array})."""
    return _forward_impl(x_nchw, params, layer_specs=layer_specs,
                         roll_mode=_roll_mode(), n_tc=_tensorcores_per_chip())


# ------------------------------ reference (lax) -------------------------------

def condition_encoder_ref(x_nchw, params, layer_specs):
    out = {}
    x = x_nchw
    for l, ((wt, b), (s, p)) in enumerate(zip(params, layer_specs)):
        if l > 0:
            x = jnp.maximum(x, 0.0)   # ReLU between layers (downsample_layer=='conv')
        x = lax.conv_general_dilated(
            x, wt, window_strides=(s, s), padding=[(p, p), (p, p)],
            dimension_numbers=("NCHW", "OIHW", "NCHW"),
        ) + b[None, :, None, None]
        out[str(tuple(x.shape))] = x
    return out


# ----------------------------------- main --------------------------------------

if __name__ == "__main__":
    key = jax.random.PRNGKey(0)

    # Mirrors Conditionencoder(in_ch=4, up_layers=[UpSample(8,16), UpSample(16,32)],
    #                          downsample_layer='conv').
    in_ch = 4
    layer_cfg = [
        # (cin, cout, k, stride, pad)
        (in_ch, 32, 3, 1, 1),   # l == len(out_channels)
        (32, 16, 3, 1, 1),      # l == len(out_channels) - 1
        (16, 8, 4, 2, 1),       # l == 0, downsample_layer == 'conv'
    ]

    params = []
    layer_specs = []
    for (cin, cout, k, s, p) in layer_cfg:
        key, kw_, kb_ = jax.random.split(key, 3)
        wgt = jax.random.normal(kw_, (cout, cin, k, k), jnp.float32) * 0.05  # OIHW
        b = jax.random.normal(kb_, (cout,), jnp.float32) * 0.05
        params.append((wgt, b))
        layer_specs.append((s, p))
    params = tuple(params)
    layer_specs = tuple(layer_specs)

    # Input in the PyTorch convention (NCHW).
    key, kx = jax.random.split(key)
    x_nchw = jax.random.normal(kx, (2, in_ch, 16, 16), jnp.float32)

    out = condition_encoder_forward(x_nchw, params, layer_specs=layer_specs)
    out = jax.tree_util.tree_map(jax.block_until_ready, out)

    ref = condition_encoder_ref(x_nchw, params, layer_specs)
    for k_ in ref:
        assert k_ in out, f"missing output {k_}"
        err = float(jnp.max(jnp.abs(out[k_] - ref[k_])))
        assert err < 1e-3, f"mismatch for {k_}: {err}"

    print("KERNEL_OK")
</pallas_src>

<mosaic_0001>
module attributes {stable_mosaic.version = 11 : i64} {
  func.func @_k(%arg0: memref<8x128xf32, #tpu.memory_space<vmem>>, %arg1: memref<8x128xf32, #tpu.memory_space<vmem>>) attributes {dimension_semantics = [], scalar_prefetch = 0 : i64, scratch_operands = 0 : i64, tpu.core_type = #tpu.core_type<tc>} {
    %c0 = arith.constant 0 : index
    %c0_0 = arith.constant 0 : index
    %0 = vector.load %arg0[%c0, %c0_0] : memref<8x128xf32, #tpu.memory_space<vmem>>, vector<8x128xf32>
    %c1_i32 = arith.constant 1 : i32
    %1 = tpu.dynamic_rotate %0 by %c1_i32 dim 1 : vector<8x128xf32>, i32 -> vector<8x128xf32>
    %c0_1 = arith.constant 0 : index
    %c0_2 = arith.constant 0 : index
    %2 = vector.load %arg1[%c0_1, %c0_2] : memref<8x128xf32, #tpu.memory_space<vmem>>, vector<8x128xf32>
    tpu.vector_store %arg1[%c0_1, %c0_2], %1 {strides = array<i32>} : memref<8x128xf32, #tpu.memory_space<vmem>>, vector<8x128xf32>,
    return
  }
}

module attributes {stable_mosaic.version = 11 : i64} {
  func.func @kernel(%arg0: i32, %arg1: memref<16x256xf32, #tpu.memory_space<vmem>>, %arg2: memref<32x72xf32, #tpu.memory_space<vmem>>, %arg3: memref<32x1xf32, #tpu.memory_space<vmem>>, %arg4: memref<9x256xf32, #tpu.memory_space<vmem>>, %arg5: memref<16x288xf32, #tpu.memory_space<vmem>>, %arg6: memref<16x1xf32, #tpu.memory_space<vmem>>, %arg7: memref<9x256xf32, #tpu.memory_space<vmem>>, %arg8: memref<8x256xf32, #tpu.memory_space<vmem>>, %arg9: memref<8x1xf32, #tpu.memory_space<vmem>>, %arg10: memref<16x256xf32, #tpu.memory_space<vmem>>, %arg11: memref<256x64xf32, #tpu.memory_space<vmem>>, %arg12: memref<64x256xf32, #tpu.memory_space<vmem>>, %arg13: memref<32x256xf32, #tpu.memory_space<vmem>>, %arg14: memref<16x64xf32, #tpu.memory_space<vmem>>) attributes {dimension_semantics = [#tpu.dimension_semantics<arbitrary>], iteration_bounds = array<i64: 1>, scalar_prefetch = 0 : i64, scratch_operands = 0 : i64, tpu.core_type = #tpu.core_type<tc>, window_params = [{transform_indices = @transform_0, window_bounds = array<i64: 16, 256>}, {pipeline_mode = #tpu.pipeline_mode<synchronous>, transform_indices = @transform_1, window_bounds = array<i64: 32, 72>}, {pipeline_mode = #tpu.pipeline_mode<synchronous>, transform_indices = @transform_2, window_bounds = array<i64: 32, 1>}, {pipeline_mode = #tpu.pipeline_mode<synchronous>, transform_indices = @transform_3, window_bounds = array<i64: 9, 256>}, {pipeline_mode = #tpu.pipeline_mode<synchronous>, transform_indices = @transform_4, window_bounds = array<i64: 16, 288>}, {pipeline_mode = #tpu.pipeline_mode<synchronous>, transform_indices = @transform_5, window_bounds = array<i64: 16, 1>}, {pipeline_mode = #tpu.pipeline_mode<synchronous>, transform_indices = @transform_6, window_bounds = array<i64: 9, 256>}, {pipeline_mode = #tpu.pipeline_mode<synchronous>, transform_indices = @transform_7, window_bounds = array<i64: 8, 256>}, {pipeline_mode = #tpu.pipeline_mode<synchronous>, transform_indices = @transform_8, window_bounds = array<i64: 8, 1>}, {pipeline_mode = #tpu.pipeline_mode<synchronous>, transform_indices = @transform_9, window_bounds = array<i64: 16, 256>}, {pipeline_mode = #tpu.pipeline_mode<synchronous>, transform_indices = @transform_10, window_bounds = array<i64: 256, 64>}, {transform_indices = @transform_11, window_bounds = array<i64: 64, 256>}, {transform_indices = @transform_12, window_bounds = array<i64: 32, 256>}, {transform_indices = @transform_13, window_bounds = array<i64: 16, 64>}]} {
    %c0 = arith.constant 0 : index
    %c0_0 = arith.constant 0 : index
    %0 = vector.load %arg1[%c0, %c0_0] : memref<16x256xf32, #tpu.memory_space<vmem>>, vector<16x256xf32>
    %c0_1 = arith.constant 0 : index
    %c0_2 = arith.constant 0 : index
    %1 = vector.load %arg2[%c0_1, %c0_2] : memref<32x72xf32, #tpu.memory_space<vmem>>, vector<32x72xf32>
    %c0_3 = arith.constant 0 : index
    %c0_4 = arith.constant 0 : index
    %2 = vector.load %arg3[%c0_3, %c0_4] : memref<32x1xf32, #tpu.memory_space<vmem>>, vector<32x1xf32>
    %c0_5 = arith.constant 0 : index
    %c0_6 = arith.constant 0 : index
    %3 = vector.load %arg4[%c0_5, %c0_6] : memref<9x256xf32, #tpu.memory_space<vmem>>, vector<9x256xf32>
    %4 = vector.extract_strided_slice %0 {offsets = [0, 239], sizes = [16, 17], strides = [1, 1]} : vector<16x256xf32> to vector<16x17xf32>
    %5 = vector.extract_strided_slice %0 {offsets = [0, 0], sizes = [16, 239], strides = [1, 1]} : vector<16x256xf32> to vector<16x239xf32>
    %6 = tpu.concatenate %4, %5 in 1 : vector<16x17xf32>, vector<16x239xf32> -> vector<16x256xf32>
    %7 = vector.extract_strided_slice %3 {offsets = [0, 0], sizes = [1, 256], strides = [1, 1]} : vector<9x256xf32> to vector<1x256xf32>
    %8 = vector.broadcast %7 : vector<1x256xf32> to vector<16x256xf32>
    %9 = arith.mulf %6, %8 : vector<16x256xf32>
    %10 = vector.extract_strided_slice %0 {offsets = [0, 240], sizes = [16, 16], strides = [1, 1]} : vector<16x256xf32> to vector<16x16xf32>
    %11 = vector.extract_strided_slice %0 {offsets = [0, 0], sizes = [16, 240], strides = [1, 1]} : vector<16x256xf32> to vector<16x240xf32>
    %12 = tpu.concatenate %10, %11 in 1 : vector<16x16xf32>, vector<16x240xf32> -> vector<16x256xf32>
    %13 = vector.extract_strided_slice %3 {offsets = [1, 0], sizes = [1, 256], strides = [1, 1]} : vector<9x256xf32> to vector<1x256xf32>
    %14 = vector.broadcast %13 : vector<1x256xf32> to vector<16x256xf32>
    %15 = arith.mulf %12, %14 : vector<16x256xf32>
    %16 = vector.extract_strided_slice %0 {offsets = [0, 241], sizes = [16, 15], strides = [1, 1]} : vector<16x256xf32> to vector<16x15xf32>
    %17 = vector.extract_strided_slice %0 {offsets = [0, 0], sizes = [16, 241], strides = [1, 1]} : vector<16x256xf32> to vector<16x241xf32>
    %18 = tpu.concatenate %16, %17 in 1 : vector<16x15xf32>, vector<16x241xf32> -> vector<16x256xf32>
    %19 = vector.extract_strided_slice %3 {offsets = [2, 0], sizes = [1, 256], strides = [1, 1]} : vector<9x256xf32> to vector<1x256xf32>
    %20 = vector.broadcast %19 : vector<1x256xf32> to vector<16x256xf32>
    %21 = arith.mulf %18, %20 : vector<16x256xf32>
    %22 = vector.extract_strided_slice %0 {offsets = [0, 255], sizes = [16, 1], strides = [1, 1]} : vector<16x256xf32> to vector<16x1xf32>
    %23 = vector.extract_strided_slice %0 {offsets = [0, 0], sizes = [16, 255], strides = [1, 1]} : vector<16x256xf32> to vector<16x255xf32>
    %24 = tpu.concatenate %22, %23 in 1 : vector<16x1xf32>, vector<16x255xf32> -> vector<16x256xf32>
    %25 = vector.extract_strided_slice %3 {offsets = [3, 0], sizes = [1, 256], strides = [1, 1]} : vector<9x256xf32> to vector<1x256xf32>
    %26 = vector.broadcast %25 : vector<1x256xf32> to vector<16x256xf32>
    %27 = arith.mulf %24, %26 : vector<16x256xf32>
    %28 = vector.extract_strided_slice %0 {offsets = [0, 1], sizes = [16, 255], strides = [1, 1]} : vector<16x256xf32> to vector<16x255xf32>
    %29 = vector.extract_strided_slice %0 {offsets = [0, 0], sizes = [16, 1], strides = [1, 1]} : vector<16x256xf32> to vector<16x1xf32>
    %30 = tpu.concatenate %28, %29 in 1 : vector<16x255xf32>, vector<16x1xf32> -> vector<16x256xf32>
    %31 = vector.extract_strided_slice %3 {offsets = [5, 0], sizes = [1, 256], strides = [1, 1]} : vector<9x256xf32> to vector<1x256xf32>
    %32 = vector.broadcast %31 : vector<1x256xf32> to vector<16x256xf32>
    %33 = arith.mulf %30, %32 : vector<16x256xf32>
    %34 = vector.extract_strided_slice %0 {offsets = [0, 15], sizes = [16, 241], strides = [1, 1]} : vector<16x256xf32> to vector<16x241xf32>
    %35 = vector.extract_strided_slice %0 {offsets = [0, 0], sizes = [16, 15], strides = [1, 1]} : vector<16x256xf32> to vector<16x15xf32>
    %36 = tpu.concatenate %34, %35 in 1 : vector<16x241xf32>, vector<16x15xf32> -> vector<16x256xf32>
    %37 = vector.extract_strided_slice %3 {offsets = [6, 0], sizes = [1, 256], strides = [1, 1]} : vector<9x256xf32> to vector<1x256xf32>
    %38 = vector.broadcast %37 : vector<1x256xf32> to vector<16x256xf32>
    %39 = arith.mulf %36, %38 : vector<16x256xf32>
    %40 = vector.extract_strided_slice %0 {offsets = [0, 16], sizes = [16, 240], strides = [1, 1]} : vector<16x256xf32> to vector<16x240xf32>
    %41 = vector.extract_strided_slice %0 {offsets = [0, 0], sizes = [16, 16], strides = [1, 1]} : vector<16x256xf32> to vector<16x16xf32>
    %42 = tpu.concatenate %40, %41 in 1 : vector<16x240xf32>, vector<16x16xf32> -> vector<16x256xf32>
    %43 = vector.extract_strided_slice %3 {offsets = [7, 0], sizes = [1, 256], strides = [1, 1]} : vector<9x256xf32> to vector<1x256xf32>
    %44 = vector.broadcast %43 : vector<1x256xf32> to vector<16x256xf32>
    %45 = arith.mulf %42, %44 : vector<16x256xf32>
    %46 = vector.extract_strided_slice %0 {offsets = [0, 17], sizes = [16, 239], strides = [1, 1]} : vector<16x256xf32> to vector<16x239xf32>
    %47 = vector.extract_strided_slice %0 {offsets = [0, 0], sizes = [16, 17], strides = [1, 1]} : vector<16x256xf32> to vector<16x17xf32>
    %48 = tpu.concatenate %46, %47 in 1 : vector<16x239xf32>, vector<16x17xf32> -> vector<16x256xf32>
    %49 = vector.extract_strided_slice %3 {offsets = [8, 0], sizes = [1, 256], strides = [1, 1]} : vector<9x256xf32> to vector<1x256xf32>
    %50 = vector.broadcast %49 : vector<1x256xf32> to vector<16x256xf32>
    %51 = arith.mulf %48, %50 : vector<16x256xf32>
    %52 = vector.extract_strided_slice %9 {offsets = [0, 0], sizes = [8, 256], strides = [1, 1]} : vector<16x256xf32> to vector<8x256xf32>
    %53 = vector.extract_strided_slice %15 {offsets = [0, 0], sizes = [8, 256], strides = [1, 1]} : vector<16x256xf32> to vector<8x256xf32>
    %54 = vector.extract_strided_slice %21 {offsets = [0, 0], sizes = [8, 256], strides = [1, 1]} : vector<16x256xf32> to vector<8x256xf32>
    %55 = vector.extract_strided_slice %27 {offsets = [0, 0], sizes = [8, 256], strides = [1, 1]} : vector<16x256xf32> to vector<8x256xf32>
    %56 = vector.extract_strided_slice %0 {offsets = [0, 0], sizes = [8, 256], strides = [1, 1]} : vector<16x256xf32> to vector<8x256xf32>
    %57 = vector.extract_strided_slice %33 {offsets = [0, 0], sizes = [8, 256], strides = [1, 1]} : vector<16x256xf32> to vector<8x256xf32>
    %58 = vector.extract_strided_slice %39 {offsets = [0, 0], sizes = [8, 256], strides = [1, 1]} : vector<16x256xf32> to vector<8x256xf32>
    %59 = vector.extract_strided_slice %45 {offsets = [0, 0], sizes = [8, 256], strides = [1, 1]} : vector<16x256xf32> to vector<8x256xf32>
    %60 = vector.extract_strided_slice %51 {offsets = [0, 0], sizes = [8, 256], strides = [1, 1]} : vector<16x256xf32> to vector<8x256xf32>
    %61 = tpu.concatenate %52, %53, %54, %55, %56, %57, %58, %59, %60 in 0 : vector<8x256xf32>, vector<8x256xf32>, vector<8x256xf32>, vector<8x256xf32>, vector<8x256xf32>, vector<8x256xf32>, vector<8x256xf32>, vector<8x256xf32>, vector<8x256xf32> -> vector<72x256xf32>
    %cst = arith.constant dense<0.000000e+00> : vector<32x256xf32>
    %62 = tpu.matmul %1, %61, %cst {dimension_numbers = #tpu.dot_dimension_numbers<[1], [0], [0], [1], [0, 0, 1, 1], [], []>} : vector<32x72xf32>, vector<72x256xf32>, vector<32x256xf32> -> vector<32x256xf32>
    %63 = vector.broadcast %2 : vector<32x1xf32> to vector<32x256xf32>
    %64 = arith.addf %62, %63 : vector<32x256xf32>
    %c0_7 = arith.constant 0 : index
    %c0_8 = arith.constant 0 : index
    %65 = vector.load %arg12[%c0_7, %c0_8] : memref<64x256xf32, #tpu.memory_space<vmem>>, vector<32x256xf32>
    tpu.vector_store %arg12[%c0_7, %c0_8], %64 {strides = array<i32>} : memref<64x256xf32, #tpu.memory_space<vmem>>, vector<32x256xf32>,
    %cst_9 = arith.constant 0.000000e+00 : f32
    %66 = vector.broadcast %cst_9 : f32 to vector<32x256xf32>
    %67 = arith.maximumf %64, %66 : vector<32x256xf32>
    %68 = vector.extract_strided_slice %9 {offsets = [8, 0], sizes = [8, 256], strides = [1, 1]} : vector<16x256xf32> to vector<8x256xf32>
    %69 = vector.extract_strided_slice %15 {offsets = [8, 0], sizes = [8, 256], strides = [1, 1]} : vector<16x256xf32> to vector<8x256xf32>
    %70 = vector.extract_strided_slice %21 {offsets = [8, 0], sizes = [8, 256], strides = [1, 1]} : vector<16x256xf32> to vector<8x256xf32>
    %71 = vector.extract_strided_slice %27 {offsets = [8, 0], sizes = [8, 256], strides = [1, 1]} : vector<16x256xf32> to vector<8x256xf32>
    %72 = vector.extract_strided_slice %0 {offsets = [8, 0], sizes = [8, 256], strides = [1, 1]} : vector<16x256xf32> to vector<8x256xf32>
    %73 = vector.extract_strided_slice %33 {offsets = [8, 0], sizes = [8, 256], strides = [1, 1]} : vector<16x256xf32> to vector<8x256xf32>
    %74 = vector.extract_strided_slice %39 {offsets = [8, 0], sizes = [8, 256], strides = [1, 1]} : vector<16x256xf32> to vector<8x256xf32>
    %75 = vector.extract_strided_slice %45 {offsets = [8, 0], sizes = [8, 256], strides = [1, 1]} : vector<16x256xf32> to vector<8x256xf32>
    %76 = vector.extract_strided_slice %51 {offsets = [8, 0], sizes = [8, 256], strides = [1, 1]} : vector<16x256xf32> to vector<8x256xf32>
    %77 = tpu.concatenate %68, %69, %70, %71, %72, %73, %74, %75, %76 in 0 : vector<8x256xf32>, vector<8x256xf32>, vector<8x256xf32>, vector<8x256xf32>, vector<8x256xf32>, vector<8x256xf32>, vector<8x256xf32>, vector<8x256xf32>, vector<8x256xf32> -> vector<72x256xf32>
    %cst_10 = arith.constant dense<0.000000e+00> : vector<32x256xf32>
    %78 = tpu.matmul %1, %77, %cst_10 {dimension_numbers = #tpu.dot_dimension_numbers<[1], [0], [0], [1], [0, 0, 1, 1], [], []>} : vector<32x72xf32>, vector<72x256xf32>, vector<32x256xf32> -> vector<32x256xf32>
    %79 = vector.broadcast %2 : vector<32x1xf32> to vector<32x256xf32>
    %80 = arith.addf %78, %79 : vector<32x256xf32>
    %c32 = arith.constant 32 : index
    %c0_11 = arith.constant 0 : index
    %81 = vector.load %arg12[%c32, %c0_11] : memref<64x256xf32, #tpu.memory_space<vmem>>, vector<32x256xf32>
    tpu.vector_store %arg12[%c32, %c0_11], %80 {strides = array<i32>} : memref<64x256xf32, #tpu.memory_space<vmem>>, vector<32x256xf32>,
    %cst_12 = arith.constant 0.000000e+00 : f32
    %82 = vector.broadcast %cst_12 : f32 to vector<32x256xf32>
    %83 = arith.maximumf %80, %82 : vector<32x256xf32>
    %84 = tpu.concatenate %67, %83 in 0 : vector<32x256xf32>, vector<32x256xf32> -> vector<64x256xf32>
    %c0_13 = arith.constant 0 : index
    %c0_14 = arith.constant 0 : index
    %85 = vector.load %arg5[%c0_13, %c0_14] : memref<16x288xf32, #tpu.memory_space<vmem>>, vector<16x288xf32>
    %c0_15 = arith.constant 0 : index
    %c0_16 = arith.constant 0 : index
    %86 = vector.load %arg6[%c0_15, %c0_16] : memref<16x1xf32, #tpu.memory_space<vmem>>, vector<16x1xf32>
    %c0_17 = arith.constant 0 : index
    %c0_18 = arith.constant 0 : index
    %87 = vector.load %arg7[%c0_17, %c0_18] : memref<9x256xf32, #tpu.memory_space<vmem>>, vector<9x256xf32>
    %88 = vector.extract_strided_slice %84 {offsets = [0, 239], sizes = [64, 17], strides = [1, 1]} : vector<64x256xf32> to vector<64x17xf32>
    %89 = vector.extract_strided_slice %84 {offsets = [0, 0], sizes = [64, 239], strides = [1, 1]} : vector<64x256xf32> to vector<64x239xf32>
    %90 = tpu.concatenate %88, %89 in 1 : vector<64x17xf32>, vector<64x239xf32> -> vector<64x256xf32>
    %91 = vector.extract_strided_slice %87 {offsets = [0, 0], sizes = [1, 256], strides = [1, 1]} : vector<9x256xf32> to vector<1x256xf32>
    %92 = vector.broadcast %91 : vector<1x256xf32> to vector<64x256xf32>
    %93 = arith.mulf %90, %92 : vector<64x256xf32>
    %94 = vector.extract_strided_slice %84 {offsets = [0, 240], sizes = [64, 16], strides = [1, 1]} : vector<64x256xf32> to vector<64x16xf32>
    %95 = vector.extract_strided_slice %84 {offsets = [0, 0], sizes = [64, 240], strides = [1, 1]} : vector<64x256xf32> to vector<64x240xf32>
    %96 = tpu.concatenate %94, %95 in 1 : vector<64x16xf32>, vector<64x240xf32> -> vector<64x256xf32>
    %97 = vector.extract_strided_slice %87 {offsets = [1, 0], sizes = [1, 256], strides = [1, 1]} : vector<9x256xf32> to vector<1x256xf32>
    %98 = vector.broadcast %97 : vector<1x256xf32> to vector<64x256xf32>
    %99 = arith.mulf %96, %98 : vector<64x256xf32>
    %100 = vector.extract_strided_slice %84 {offsets = [0, 241], sizes = [64, 15], strides = [1, 1]} : vector<64x256xf32> to vector<64x15xf32>
    %101 = vector.extract_strided_slice %84 {offsets = [0, 0], sizes = [64, 241], strides = [1, 1]} : vector<64x256xf32> to vector<64x241xf32>
    %102 = tpu.concatenate %100, %101 in 1 : vector<64x15xf32>, vector<64x241xf32> -> vector<64x256xf32>
    %103 = vector.extract_strided_slice %87 {offsets = [2, 0], sizes = [1, 256], strides = [1, 1]} : vector<9x256xf32> to vector<1x256xf32>
    %104 = vector.broadcast %103 : vector<1x256xf32> to vector<64x256xf32>
    %105 = arith.mulf %102, %104 : vector<64x256xf32>
    %106 = vector.extract_strided_slice %84 {offsets = [0, 255], sizes = [64, 1], strides = [1, 1]} : vector<64x256xf32> to vector<64x1xf32>
    %107 = vector.extract_strided_slice %84 {offsets = [0, 0], sizes = [64, 255], strides = [1, 1]} : vector<64x256xf32> to vector<64x255xf32>
    %108 = tpu.concatenate %106, %107 in 1 : vector<64x1xf32>, vector<64x255xf32> -> vector<64x256xf32>
    %109 = vector.extract_strided_slice %87 {offsets = [3, 0], sizes = [1, 256], strides = [1, 1]} : vector<9x256xf32> to vector<1x256xf32>
    %110 = vector.broadcast %109 : vector<1x256xf32> to vector<64x256xf32>
    %111 = arith.mulf %108, %110 : vector<64x256xf32>
    %112 = vector.extract_strided_slice %84 {offsets = [0, 1], sizes = [64, 255], strides = [1, 1]} : vector<64x256xf32> to vector<64x255xf32>
    %113 = vector.extract_strided_slice %84 {offsets = [0, 0], sizes = [64, 1], strides = [1, 1]} : vector<64x256xf32> to vector<64x1xf32>
    %114 = tpu.concatenate %112, %113 in 1 : vector<64x255xf32>, vector<64x1xf32> -> vector<64x256xf32>
    %115 = vector.extract_strided_slice %87 {offsets = [5, 0], sizes = [1, 256], strides = [1, 1]} : vector<9x256xf32> to vector<1x256xf32>
    %116 = vector.broadcast %115 : vector<1x256xf32> to vector<64x256xf32>
    %117 = arith.mulf %114, %116 : vector<64x256xf32>
    %118 = vector.extract_strided_slice %84 {offsets = [0, 15], sizes = [64, 241], strides = [1, 1]} : vector<64x256xf32> to vector<64x241xf32>
    %119 = vector.extract_strided_slice %84 {offsets = [0, 0], sizes = [64, 15], strides = [1, 1]} : vector<64x256xf32> to vector<64x15xf32>
    %120 = tpu.concatenate %118, %119 in 1 : vector<64x241xf32>, vector<64x15xf32> -> vector<64x256xf32>
    %121 = vector.extract_strided_slice %87 {offsets = [6, 0], sizes = [1, 256], strides = [1, 1]} : vector<9x256xf32> to vector<1x256xf32>
    %122 = vector.broadcast %121 : vector<1x256xf32> to vector<64x256xf32>
    %123 = arith.mulf %120, %122 : vector<64x256xf32>
    %124 = vector.extract_strided_slice %84 {offsets = [0, 16], sizes = [64, 240], strides = [1, 1]} : vector<64x256xf32> to vector<64x240xf32>
    %125 = vector.extract_strided_slice %84 {offsets = [0, 0], sizes = [64, 16], strides = [1, 1]} : vector<64x256xf32> to vector<64x16xf32>
    %126 = tpu.concatenate %124, %125 in 1 : vector<64x240xf32>, vector<64x16xf32> -> vector<64x256xf32>
    %127 = vector.extract_strided_slice %87 {offsets = [7, 0], sizes = [1, 256], strides = [1, 1]} : vector<9x256xf32> to vector<1x256xf32>
    %128 = vector.broadcast %127 : vector<1x256xf32> to vector<64x256xf32>
    %129 = arith.mulf %126, %128 : vector<64x256xf32>
    %130 = vector.extract_strided_slice %84 {offsets = [0, 17], sizes = [64, 239], strides = [1, 1]} : vector<64x256xf32> to vector<64x239xf32>
    %131 = vector.extract_strided_slice %84 {offsets = [0, 0], sizes = [64, 17], strides = [1, 1]} : vector<64x256xf32> to vector<64x17xf32>
    %132 = tpu.concatenate %130, %131 in 1 : vector<64x239xf32>, vector<64x17xf32> -> vector<64x256xf32>
    %133 = vector.extract_strided_slice %87 {offsets = [8, 0], sizes = [1, 256], strides = [1, 1]} : vector<9x256xf32> to vector<1x256xf32>
    %134 = vector.broadcast %133 : vector<1x256xf32> to vector<64x256xf32>
    %135 = arith.mulf %132, %134 : vector<64x256xf32>
    %136 = vector.extract_strided_slice %93 {offsets = [0, 0], sizes = [32, 256], strides = [1, 1]} : vector<64x256xf32> to vector<32x256xf32>
    %137 = vector.extract_strided_slice %99 {offsets = [0, 0], sizes = [32, 256], strides = [1, 1]} : vector<64x256xf32> to vector<32x256xf32>
    %138 = vector.extract_strided_slice %105 {offsets = [0, 0], sizes = [32, 256], strides = [1, 1]} : vector<64x256xf32> to vector<32x256xf32>
    %139 = vector.extract_strided_slice %111 {offsets = [0, 0], sizes = [32, 256], strides = [1, 1]} : vector<64x256xf32> to vector<32x256xf32>
    %140 = vector.extract_strided_slice %84 {offsets = [0, 0], sizes = [32, 256], strides = [1, 1]} : vector<64x256xf32> to vector<32x256xf32>
    %141 = vector.extract_strided_slice %117 {offsets = [0, 0], sizes = [32, 256], strides = [1, 1]} : vector<64x256xf32> to vector<32x256xf32>
    %142 = vector.extract_strided_slice %123 {offsets = [0, 0], sizes = [32, 256], strides = [1, 1]} : vector<64x256xf32> to vector<32x256xf32>
    %143 = vector.extract_strided_slice %129 {offsets = [0, 0], sizes = [32, 256], strides = [1, 1]} : vector<64x256xf32> to vector<32x256xf32>
    %144 = vector.extract_strided_slice %135 {offsets = [0, 0], sizes = [32, 256], strides = [1, 1]} : vector<64x256xf32> to vector<32x256xf32>
    %145 = tpu.concatenate %136, %137, %138, %139, %140, %141, %142, %143, %144 in 0 : vector<32x256xf32>, vector<32x256xf32>, vector<32x256xf32>, vector<32x256xf32>, vector<32x256xf32>, vector<32x256xf32>, vector<32x256xf32>, vector<32x256xf32>, vector<32x256xf32> -> vector<288x256xf32>
    %cst_19 = arith.constant dense<0.000000e+00> : vector<16x256xf32>
    %146 = tpu.matmul %85, %145, %cst_19 {dimension_numbers = #tpu.dot_dimension_numbers<[1], [0], [0], [1], [0, 0, 1, 1], [], []>} : vector<16x288xf32>, vector<288x256xf32>, vector<16x256xf32> -> vector<16x256xf32>
    %147 = vector.broadcast %86 : vector<16x1xf32> to vector<16x256xf32>
    %148 = arith.addf %146, %147 : vector<16x256xf32>
    %c0_20 = arith.constant 0 : index
    %c0_21 = arith.constant 0 : index
    %149 = vector.load %arg13[%c0_20, %c0_21] : memref<32x256xf32, #tpu.memory_space<vmem>>, vector<16x256xf32>
    tpu.vector_store %arg13[%c0_20, %c0_21], %148 {strides = array<i32>} : memref<32x256xf32, #tpu.memory_space<vmem>>, vector<16x256xf32>,
    %cst_22 = arith.constant 0.000000e+00 : f32
    %150 = vector.broadcast %cst_22 : f32 to vector<16x256xf32>
    %151 = arith.maximumf %148, %150 : vector<16x256xf32>
    %152 = vector.extract_strided_slice %93 {offsets = [32, 0], sizes = [32, 256], strides = [1, 1]} : vector<64x256xf32> to vector<32x256xf32>
    %153 = vector.extract_strided_slice %99 {offsets = [32, 0], sizes = [32, 256], strides = [1, 1]} : vector<64x256xf32> to vector<32x256xf32>
    %154 = vector.extract_strided_slice %105 {offsets = [32, 0], sizes = [32, 256], strides = [1, 1]} : vector<64x256xf32> to vector<32x256xf32>
    %155 = vector.extract_strided_slice %111 {offsets = [32, 0], sizes = [32, 256], strides = [1, 1]} : vector<64x256xf32> to vector<32x256xf32>
    %156 = vector.extract_strided_slice %84 {offsets = [32, 0], sizes = [32, 256], strides = [1, 1]} : vector<64x256xf32> to vector<32x256xf32>
    %157 = vector.extract_strided_slice %117 {offsets = [32, 0], sizes = [32, 256], strides = [1, 1]} : vector<64x256xf32> to vector<32x256xf32>
    %158 = vector.extract_strided_slice %123 {offsets = [32, 0], sizes = [32, 256], strides = [1, 1]} : vector<64x256xf32> to vector<32x256xf32>
    %159 = vector.extract_strided_slice %129 {offsets = [32, 0], sizes = [32, 256], strides = [1, 1]} : vector<64x256xf32> to vector<32x256xf32>
    %160 = vector.extract_strided_slice %135 {offsets = [32, 0], sizes = [32, 256], strides = [1, 1]} : vector<64x256xf32> to vector<32x256xf32>
    %161 = tpu.concatenate %152, %153, %154, %155, %156, %157, %158, %159, %160 in 0 : vector<32x256xf32>, vector<32x256xf32>, vector<32x256xf32>, vector<32x256xf32>, vector<32x256xf32>, vector<32x256xf32>, vector<32x256xf32>, vector<32x256xf32>, vector<32x256xf32> -> vector<288x256xf32>
    %cst_23 = arith.constant dense<0.000000e+00> : vector<16x256xf32>
    %162 = tpu.matmul %85, %161, %cst_23 {dimension_numbers = #tpu.dot_dimension_numbers<[1], [0], [0], [1], [0, 0, 1, 1], [], []>} : vector<16x288xf32>, vector<288x256xf32>, vector<16x256xf32> -> vector<16x256xf32>
    %163 = vector.broadcast %86 : vector<16x1xf32> to vector<16x256xf32>
    %164 = arith.addf %162, %163 : vector<16x256xf32>
    %c16 = arith.constant 16 : index
    %c0_24 = arith.constant 0 : index
    %165 = vector.load %arg13[%c16, %c0_24] : memref<32x256xf32, #tpu.memory_space<vmem>>, vector<16x256xf32>
    tpu.vector_store %arg13[%c16, %c0_24], %164 {strides = array<i32>} : memref<32x256xf32, #tpu.memory_space<vmem>>, vector<16x256xf32>,
    %cst_25 = arith.constant 0.000000e+00 : f32
    %166 = vector.broadcast %cst_25 : f32 to vector<16x256xf32>
    %167 = arith.maximumf %164, %166 : vector<16x256xf32>
    %168 = tpu.concatenate %151, %167 in 0 : vector<16x256xf32>, vector<16x256xf32> -> vector<32x256xf32>
    %c0_26 = arith.constant 0 : index
    %c0_27 = arith.constant 0 : index
    %169 = vector.load %arg8[%c0_26, %c0_27] : memref<8x256xf32, #tpu.memory_space<vmem>>, vector<8x256xf32>
    %c0_28 = arith.constant 0 : index
    %c0_29 = arith.constant 0 : index
    %170 = vector.load %arg9[%c0_28, %c0_29] : memref<8x1xf32, #tpu.memory_space<vmem>>, vector<8x1xf32>
    %c0_30 = arith.constant 0 : index
    %c0_31 = arith.constant 0 : index
    %171 = vector.load %arg10[%c0_30, %c0_31] : memref<16x256xf32, #tpu.memory_space<vmem>>, vector<16x256xf32>
    %c0_32 = arith.constant 0 : index
    %c0_33 = arith.constant 0 : index
    %172 = vector.load %arg11[%c0_32, %c0_33] : memref<256x64xf32, #tpu.memory_space<vmem>>, vector<256x64xf32>
    %173 = vector.extract_strided_slice %168 {offsets = [0, 239], sizes = [32, 17], strides = [1, 1]} : vector<32x256xf32> to vector<32x17xf32>
    %174 = vector.extract_strided_slice %168 {offsets = [0, 0], sizes = [32, 239], strides = [1, 1]} : vector<32x256xf32> to vector<32x239xf32>
    %175 = tpu.concatenate %173, %174 in 1 : vector<32x17xf32>, vector<32x239xf32> -> vector<32x256xf32>
    %176 = vector.extract_strided_slice %171 {offsets = [0, 0], sizes = [1, 256], strides = [1, 1]} : vector<16x256xf32> to vector<1x256xf32>
    %177 = vector.broadcast %176 : vector<1x256xf32> to vector<32x256xf32>
    %178 = arith.mulf %175, %177 : vector<32x256xf32>
    %179 = vector.extract_strided_slice %168 {offsets = [0, 240], sizes = [32, 16], strides = [1, 1]} : vector<32x256xf32> to vector<32x16xf32>
    %180 = vector.extract_strided_slice %168 {offsets = [0, 0], sizes = [32, 240], strides = [1, 1]} : vector<32x256xf32> to vector<32x240xf32>
    %181 = tpu.concatenate %179, %180 in 1 : vector<32x16xf32>, vector<32x240xf32> -> vector<32x256xf32>
    %182 = vector.extract_strided_slice %171 {offsets = [1, 0], sizes = [1, 256], strides = [1, 1]} : vector<16x256xf32> to vector<1x256xf32>
    %183 = vector.broadcast %182 : vector<1x256xf32> to vector<32x256xf32>
    %184 = arith.mulf %181, %183 : vector<32x256xf32>
    %185 = vector.extract_strided_slice %168 {offsets = [0, 241], sizes = [32, 15], strides = [1, 1]} : vector<32x256xf32> to vector<32x15xf32>
    %186 = vector.extract_strided_slice %168 {offsets = [0, 0], sizes = [32, 241], strides = [1, 1]} : vector<32x256xf32> to vector<32x241xf32>
    %187 = tpu.concatenate %185, %186 in 1 : vector<32x15xf32>, vector<32x241xf32> -> vector<32x256xf32>
    %188 = vector.extract_strided_slice %171 {offsets = [2, 0], sizes = [1, 256], strides = [1, 1]} : vector<16x256xf32> to vector<1x256xf32>
    %189 = vector.broadcast %188 : vector<1x256xf32> to vector<32x256xf32>
    %190 = arith.mulf %187, %189 : vector<32x256xf32>
    %191 = vector.extract_strided_slice %168 {offsets = [0, 242], sizes = [32, 14], strides = [1, 1]} : vector<32x256xf32> to vector<32x14xf32>
    %192 = vector.extract_strided_slice %168 {offsets = [0, 0], sizes = [32, 242], strides = [1, 1]} : vector<32x256xf32> to vector<32x242xf32>
    %193 = tpu.concatenate %191, %192 in 1 : vector<32x14xf32>, vector<32x242xf32> -> vector<32x256xf32>
    %194 = vector.extract_strided_slice %171 {offsets = [3, 0], sizes = [1, 256], strides = [1, 1]} : vector<16x256xf32> to vector<1x256xf32>
    %195 = vector.broadcast %194 : vector<1x256xf32> to vector<32x256xf32>
    %196 = arith.mulf %193, %195 : vector<32x256xf32>
    %197 = vector.extract_strided_slice %168 {offsets = [0, 255], sizes = [32, 1], strides = [1, 1]} : vector<32x256xf32> to vector<32x1xf32>
    %198 = vector.extract_strided_slice %168 {offsets = [0, 0], sizes = [32, 255], strides = [1, 1]} : vector<32x256xf32> to vector<32x255xf32>
    %199 = tpu.concatenate %197, %198 in 1 : vector<32x1xf32>, vector<32x255xf32> -> vector<32x256xf32>
    %200 = vector.extract_strided_slice %171 {offsets = [4, 0], sizes = [1, 256], strides = [1, 1]} : vector<16x256xf32> to vector<1x256xf32>
    %201 = vector.broadcast %200 : vector<1x256xf32> to vector<32x256xf32>
    %202 = arith.mulf %199, %201 : vector<32x256xf32>
    %203 = vector.extract_strided_slice %168 {offsets = [0, 1], sizes = [32, 255], strides = [1, 1]} : vector<32x256xf32> to vector<32x255xf32>
    %204 = vector.extract_strided_slice %168 {offsets = [0, 0], sizes = [32, 1], strides = [1, 1]} : vector<32x256xf32> to vector<32x1xf32>
    %205 = tpu.concatenate %203, %204 in 1 : vector<32x255xf32>, vector<32x1xf32> -> vector<32x256xf32>
    %206 = vector.extract_strided_slice %171 {offsets = [6, 0], sizes = [1, 256], strides = [1, 1]} : vector<16x256xf32> to vector<1x256xf32>
    %207 = vector.broadcast %206 : vector<1x256xf32> to vector<32x256xf32>
    %208 = arith.mulf %205, %207 : vector<32x256xf32>
    %209 = vector.extract_strided_slice %168 {offsets = [0, 2], sizes = [32, 254], strides = [1, 1]} : vector<32x256xf32> to vector<32x254xf32>
    %210 = vector.extract_strided_slice %168 {offsets = [0, 0], sizes = [32, 2], strides = [1, 1]} : vector<32x256xf32> to vector<32x2xf32>
    %211 = tpu.concatenate %209, %210 in 1 : vector<32x254xf32>, vector<32x2xf32> -> vector<32x256xf32>
    %212 = vector.extract_strided_slice %171 {offsets = [7, 0], sizes = [1, 256], strides = [1, 1]} : vector<16x256xf32> to vector<1x256xf32>
    %213 = vector.broadcast %212 : vector<1x256xf32> to vector<32x256xf32>
    %214 = arith.mulf %211, %213 : vector<32x256xf32>
    %215 = vector.extract_strided_slice %168 {offsets = [0, 15], sizes = [32, 241], strides = [1, 1]} : vector<32x256xf32> to vector<32x241xf32>
    %216 = vector.extract_strided_slice %168 {offsets = [0, 0], sizes = [32, 15], strides = [1, 1]} : vector<32x256xf32> to vector<32x15xf32>
    %217 = tpu.concatenate %215, %216 in 1 : vector<32x241xf32>, vector<32x15xf32> -> vector<32x256xf32>
    %218 = vector.extract_strided_slice %171 {offsets = [8, 0], sizes = [1, 256], strides = [1, 1]} : vector<16x256xf32> to vector<1x256xf32>
    %219 = vector.broadcast %218 : vector<1x256xf32> to vector<32x256xf32>
    %220 = arith.mulf %217, %219 : vector<32x256xf32>
    %221 = vector.extract_strided_slice %168 {offsets = [0, 16], sizes = [32, 240], strides = [1, 1]} : vector<32x256xf32> to vector<32x240xf32>
    %222 = vector.extract_strided_slice %168 {offsets = [0, 0], sizes = [32, 16], strides = [1, 1]} : vector<32x256xf32> to vector<32x16xf32>
    %223 = tpu.concatenate %221, %222 in 1 : vector<32x240xf32>, vector<32x16xf32> -> vector<32x256xf32>
    %224 = vector.extract_strided_slice %171 {offsets = [9, 0], sizes = [1, 256], strides = [1, 1]} : vector<16x256xf32> to vector<1x256xf32>
    %225 = vector.broadcast %224 : vector<1x256xf32> to vector<32x256xf32>
    %226 = arith.mulf %223, %225 : vector<32x256xf32>
    %227 = vector.extract_strided_slice %168 {offsets = [0, 17], sizes = [32, 239], strides = [1, 1]} : vector<32x256xf32> to vector<32x239xf32>
    %228 = vector.extract_strided_slice %168 {offsets = [0, 0], sizes = [32, 17], strides = [1, 1]} : vector<32x256xf32> to vector<32x17xf32>
    %229 = tpu.concatenate %227, %228 in 1 : vector<32x239xf32>, vector<32x17xf32> -> vector<32x256xf32>
    %230 = vector.extract_strided_slice %171 {offsets = [10, 0], sizes = [1, 256], strides = [1, 1]} : vector<16x256xf32> to vector<1x256xf32>
    %231 = vector.broadcast %230 : vector<1x256xf32> to vector<32x256xf32>
    %232 = arith.mulf %229, %231 : vector<32x256xf32>
    %233 = vector.extract_strided_slice %168 {offsets = [0, 18], sizes = [32, 238], strides = [1, 1]} : vector<32x256xf32> to vector<32x238xf32>
    %234 = vector.extract_strided_slice %168 {offsets = [0, 0], sizes = [32, 18], strides = [1, 1]} : vector<32x256xf32> to vector<32x18xf32>
    %235 = tpu.concatenate %233, %234 in 1 : vector<32x238xf32>, vector<32x18xf32> -> vector<32x256xf32>
    %236 = vector.extract_strided_slice %171 {offsets = [11, 0], sizes = [1, 256], strides = [1, 1]} : vector<16x256xf32> to vector<1x256xf32>
    %237 = vector.broadcast %236 : vector<1x256xf32> to vector<32x256xf32>
    %238 = arith.mulf %235, %237 : vector<32x256xf32>
    %239 = vector.extract_strided_slice %168 {offsets = [0, 31], sizes = [32, 225], strides = [1, 1]} : vector<32x256xf32> to vector<32x225xf32>
    %240 = vector.extract_strided_slice %168 {offsets = [0, 0], sizes = [32, 31], strides = [1, 1]} : vector<32x256xf32> to vector<32x31xf32>
    %241 = tpu.concatenate %239, %240 in 1 : vector<32x225xf32>, vector<32x31xf32> -> vector<32x256xf32>
    %242 = vector.extract_strided_slice %171 {offsets = [12, 0], sizes = [1, 256], strides = [1, 1]} : vector<16x256xf32> to vector<1x256xf32>
    %243 = vector.broadcast %242 : vector<1x256xf32> to vector<32x256xf32>
    %244 = arith.mulf %241, %243 : vector<32x256xf32>
    %245 = vector.extract_strided_slice %168 {offsets = [0, 32], sizes = [32, 224], strides = [1, 1]} : vector<32x256xf32> to vector<32x224xf32>
    %246 = vector.extract_strided_slice %168 {offsets = [0, 0], sizes = [32, 32], strides = [1, 1]} : vector<32x256xf32> to vector<32x32xf32>
    %247 = tpu.concatenate %245, %246 in 1 : vector<32x224xf32>, vector<32x32xf32> -> vector<32x256xf32>
    %248 = vector.extract_strided_slice %171 {offsets = [13, 0], sizes = [1, 256], strides = [1, 1]} : vector<16x256xf32> to vector<1x256xf32>
    %249 = vector.broadcast %248 : vector<1x256xf32> to vector<32x256xf32>
    %250 = arith.mulf %247, %249 : vector<32x256xf32>
    %251 = vector.extract_strided_slice %168 {offsets = [0, 33], sizes = [32, 223], strides = [1, 1]} : vector<32x256xf32> to vector<32x223xf32>
    %252 = vector.extract_strided_slice %168 {offsets = [0, 0], sizes = [32, 33], strides = [1, 1]} : vector<32x256xf32> to vector<32x33xf32>
    %253 = tpu.concatenate %251, %252 in 1 : vector<32x223xf32>, vector<32x33xf32> -> vector<32x256xf32>
    %254 = vector.extract_strided_slice %171 {offsets = [14, 0], sizes = [1, 256], strides = [1, 1]} : vector<16x256xf32> to vector<1x256xf32>
    %255 = vector.broadcast %254 : vector<1x256xf32> to vector<32x256xf32>
    %256 = arith.mulf %253, %255 : vector<32x256xf32>
    %257 = vector.extract_strided_slice %168 {offsets = [0, 34], sizes = [32, 222], strides = [1, 1]} : vector<32x256xf32> to vector<32x222xf32>
    %258 = vector.extract_strided_slice %168 {offsets = [0, 0], sizes = [32, 34], strides = [1, 1]} : vector<32x256xf32> to vector<32x34xf32>
    %259 = tpu.concatenate %257, %258 in 1 : vector<32x222xf32>, vector<32x34xf32> -> vector<32x256xf32>
    %260 = vector.extract_strided_slice %171 {offsets = [15, 0], sizes = [1, 256], strides = [1, 1]} : vector<16x256xf32> to vector<1x256xf32>
    %261 = vector.broadcast %260 : vector<1x256xf32> to vector<32x256xf32>
    %262 = arith.mulf %259, %261 : vector<32x256xf32>
    %263 = vector.extract_strided_slice %178 {offsets = [0, 0], sizes = [16, 256], strides = [1, 1]} : vector<32x256xf32> to vector<16x256xf32>
    %264 = vector.extract_strided_slice %184 {offsets = [0, 0], sizes = [16, 256], strides = [1, 1]} : vector<32x256xf32> to vector<16x256xf32>
    %265 = vector.extract_strided_slice %190 {offsets = [0, 0], sizes = [16, 256], strides = [1, 1]} : vector<32x256xf32> to vector<16x256xf32>
    %266 = vector.extract_strided_slice %196 {offsets = [0, 0], sizes = [16, 256], strides = [1, 1]} : vector<32x256xf32> to vector<16x256xf32>
    %267 = vector.extract_strided_slice %202 {offsets = [0, 0], sizes = [16, 256], strides = [1, 1]} : vector<32x256xf32> to vector<16x256xf32>
    %268 = vector.extract_strided_slice %168 {offsets = [0, 0], sizes = [16, 256], strides = [1, 1]} : vector<32x256xf32> to vector<16x256xf32>
    %269 = vector.extract_strided_slice %208 {offsets = [0, 0], sizes = [16, 256], strides = [1, 1]} : vector<32x256xf32> to vector<16x256xf32>
    %270 = vector.extract_strided_slice %214 {offsets = [0, 0], sizes = [16, 256], strides = [1, 1]} : vector<32x256xf32> to vector<16x256xf32>
    %271 = vector.extract_strided_slice %220 {offsets = [0, 0], sizes = [16, 256], strides = [1, 1]} : vector<32x256xf32> to vector<16x256xf32>
    %272 = vector.extract_strided_slice %226 {offsets = [0, 0], sizes = [16, 256], strides = [1, 1]} : vector<32x256xf32> to vector<16x256xf32>
    %273 = vector.extract_strided_slice %232 {offsets = [0, 0], sizes = [16, 256], strides = [1, 1]} : vector<32x256xf32> to vector<16x256xf32>
    %274 = vector.extract_strided_slice %238 {offsets = [0, 0], sizes = [16, 256], strides = [1, 1]} : vector<32x256xf32> to vector<16x256xf32>
    %275 = vector.extract_strided_slice %244 {offsets = [0, 0], sizes = [16, 256], strides = [1, 1]} : vector<32x256xf32> to vector<16x256xf32>
    %276 = vector.extract_strided_slice %250 {offsets = [0, 0], sizes = [16, 256], strides = [1, 1]} : vector<32x256xf32> to vector<16x256xf32>
    %277 = vector.extract_strided_slice %256 {offsets = [0, 0], sizes = [16, 256], strides = [1, 1]} : vector<32x256xf32> to vector<16x256xf32>
    %278 = vector.extract_strided_slice %262 {offsets = [0, 0], sizes = [16, 256], strides = [1, 1]} : vector<32x256xf32> to vector<16x256xf32>
    %279 = tpu.concatenate %263, %264, %265, %266, %267, %268, %269, %270, %271, %272, %273, %274, %275, %276, %277, %278 in 0 : vector<16x256xf32>, vector<16x256xf32>, vector<16x256xf32>, vector<16x256xf32>, vector<16x256xf32>, vector<16x256xf32>, vector<16x256xf32>, vector<16x256xf32>, vector<16x256xf32>, vector<16x256xf32>, vector<16x256xf32>, vector<16x256xf32>, vector<16x256xf32>, vector<16x256xf32>, vector<16x256xf32>, vector<16x256xf32> -> vector<256x256xf32>
    %cst_34 = arith.constant dense<0.000000e+00> : vector<8x256xf32>
    %280 = tpu.matmul %169, %279, %cst_34 {dimension_numbers = #tpu.dot_dimension_numbers<[1], [0], [0], [1], [0, 0, 1, 1], [], []>} : vector<8x256xf32>, vector<256x256xf32>, vector<8x256xf32> -> vector<8x256xf32>
    %cst_35 = arith.constant dense<0.000000e+00> : vector<8x64xf32>
    %281 = tpu.matmul %280, %172, %cst_35 {dimension_numbers = #tpu.dot_dimension_numbers<[1], [0], [0], [1], [0, 0, 1, 1], [], []>} : vector<8x256xf32>, vector<256x64xf32>, vector<8x64xf32> -> vector<8x64xf32>
    %282 = vector.broadcast %170 : vector<8x1xf32> to vector<8x64xf32>
    %283 = arith.addf %281, %282 : vector<8x64xf32>
    %c0_36 = arith.constant 0 : index
    %c0_37 = arith.constant 0 : index
    %284 = vector.load %arg14[%c0_36, %c0_37] : memref<16x64xf32, #tpu.memory_space<vmem>>, vector<8x64xf32>
    tpu.vector_store %arg14[%c0_36, %c0_37], %283 {strides = array<i32>} : memref<16x64xf32, #tpu.memory_space<vmem>>, vector<8x64xf32>,
    %285 = vector.extract_strided_slice %178 {offsets = [16, 0], sizes = [16, 256], strides = [1, 1]} : vector<32x256xf32> to vector<16x256xf32>
    %286 = vector.extract_strided_slice %184 {offsets = [16, 0], sizes = [16, 256], strides = [1, 1]} : vector<32x256xf32> to vector<16x256xf32>
    %287 = vector.extract_strided_slice %190 {offsets = [16, 0], sizes = [16, 256], strides = [1, 1]} : vector<32x256xf32> to vector<16x256xf32>
    %288 = vector.extract_strided_slice %196 {offsets = [16, 0], sizes = [16, 256], strides = [1, 1]} : vector<32x256xf32> to vector<16x256xf32>
    %289 = vector.extract_strided_slice %202 {offsets = [16, 0], sizes = [16, 256], strides = [1, 1]} : vector<32x256xf32> to vector<16x256xf32>
    %290 = vector.extract_strided_slice %168 {offsets = [16, 0], sizes = [16, 256], strides = [1, 1]} : vector<32x256xf32> to vector<16x256xf32>
    %291 = vector.extract_strided_slice %208 {offsets = [16, 0], sizes = [16, 256], strides = [1, 1]} : vector<32x256xf32> to vector<16x256xf32>
    %292 = vector.extract_strided_slice %214 {offsets = [16, 0], sizes = [16, 256], strides = [1, 1]} : vector<32x256xf32> to vector<16x256xf32>
    %293 = vector.extract_strided_slice %220 {offsets = [16, 0], sizes = [16, 256], strides = [1, 1]} : vector<32x256xf32> to vector<16x256xf32>
    %294 = vector.extract_strided_slice %226 {offsets = [16, 0], sizes = [16, 256], strides = [1, 1]} : vector<32x256xf32> to vector<16x256xf32>
    %295 = vector.extract_strided_slice %232 {offsets = [16, 0], sizes = [16, 256], strides = [1, 1]} : vector<32x256xf32> to vector<16x256xf32>
    %296 = vector.extract_strided_slice %238 {offsets = [16, 0], sizes = [16, 256], strides = [1, 1]} : vector<32x256xf32> to vector<16x256xf32>
    %297 = vector.extract_strided_slice %244 {offsets = [16, 0], sizes = [16, 256], strides = [1, 1]} : vector<32x256xf32> to vector<16x256xf32>
    %298 = vector.extract_strided_slice %250 {offsets = [16, 0], sizes = [16, 256], strides = [1, 1]} : vector<32x256xf32> to vector<16x256xf32>
    %299 = vector.extract_strided_slice %256 {offsets = [16, 0], sizes = [16, 256], strides = [1, 1]} : vector<32x256xf32> to vector<16x256xf32>
    %300 = vector.extract_strided_slice %262 {offsets = [16, 0], sizes = [16, 256], strides = [1, 1]} : vector<32x256xf32> to vector<16x256xf32>
    %301 = tpu.concatenate %285, %286, %287, %288, %289, %290, %291, %292, %293, %294, %295, %296, %297, %298, %299, %300 in 0 : vector<16x256xf32>, vector<16x256xf32>, vector<16x256xf32>, vector<16x256xf32>, vector<16x256xf32>, vector<16x256xf32>, vector<16x256xf32>, vector<16x256xf32>, vector<16x256xf32>, vector<16x256xf32>, vector<16x256xf32>, vector<16x256xf32>, vector<16x256xf32>, vector<16x256xf32>, vector<16x256xf32>, vector<16x256xf32> -> vector<256x256xf32>
    %cst_38 = arith.constant dense<0.000000e+00> : vector<8x256xf32>
    %302 = tpu.matmul %169, %301, %cst_38 {dimension_numbers = #tpu.dot_dimension_numbers<[1], [0], [0], [1], [0, 0, 1, 1], [], []>} : vector<8x256xf32>, vector<256x256xf32>, vector<8x256xf32> -> vector<8x256xf32>
    %cst_39 = arith.constant dense<0.000000e+00> : vector<8x64xf32>
    %303 = tpu.matmul %302, %172, %cst_39 {dimension_numbers = #tpu.dot_dimension_numbers<[1], [0], [0], [1], [0, 0, 1, 1], [], []>} : vector<8x256xf32>, vector<256x64xf32>, vector<8x64xf32> -> vector<8x64xf32>
    %304 = vector.broadcast %170 : vector<8x1xf32> to vector<8x64xf32>
    %305 = arith.addf %303, %304 : vector<8x64xf32>
    %c8 = arith.constant 8 : index
    %c0_40 = arith.constant 0 : index
    %306 = vector.load %arg14[%c8, %c0_40] : memref<16x64xf32, #tpu.memory_space<vmem>>, vector<8x64xf32>
    tpu.vector_store %arg14[%c8, %c0_40], %305 {strides = array<i32>} : memref<16x64xf32, #tpu.memory_space<vmem>>, vector<8x64xf32>,
    return
  }
  func.func @transform_0(%arg0: i32) -> (i32, i32) {
    %c0_i32 = arith.constant 0 : i32
    %c0_i32_0 = arith.constant 0 : i32
    return %arg0, %c0_i32 : i32, i32
  }
  func.func @transform_1(%arg0: i32) -> (i32, i32) {
    %c0_i32 = arith.constant 0 : i32
    %c0_i32_0 = arith.constant 0 : i32
    %c0_i32_1 = arith.constant 0 : i32
    return %c0_i32, %c0_i32_0 : i32, i32
  }
  func.func @transform_2(%arg0: i32) -> (i32, i32) {
    %c0_i32 = arith.constant 0 : i32
    %c0_i32_0 = arith.constant 0 : i32
    %c0_i32_1 = arith.constant 0 : i32
    return %c0_i32, %c0_i32_0 : i32, i32
  }
  func.func @transform_3(%arg0: i32) -> (i32, i32) {
    %c0_i32 = arith.constant 0 : i32
    %c0_i32_0 = arith.constant 0 : i32
    %c0_i32_1 = arith.constant 0 : i32
    return %c0_i32, %c0_i32_0 : i32, i32
  }
  func.func @transform_4(%arg0: i32) -> (i32, i32) {
    %c0_i32 = arith.constant 0 : i32
    %c0_i32_0 = arith.constant 0 : i32
    %c0_i32_1 = arith.constant 0 : i32
    return %c0_i32, %c0_i32_0 : i32, i32
  }
  func.func @transform_5(%arg0: i32) -> (i32, i32) {
    %c0_i32 = arith.constant 0 : i32
    %c0_i32_0 = arith.constant 0 : i32
    %c0_i32_1 = arith.constant 0 : i32
    return %c0_i32, %c0_i32_0 : i32, i32
  }
  func.func @transform_6(%arg0: i32) -> (i32, i32) {
    %c0_i32 = arith.constant 0 : i32
    %c0_i32_0 = arith.constant 0 : i32
    %c0_i32_1 = arith.constant 0 : i32
    return %c0_i32, %c0_i32_0 : i32, i32
  }
  func.func @transform_7(%arg0: i32) -> (i32, i32) {
    %c0_i32 = arith.constant 0 : i32
    %c0_i32_0 = arith.constant 0 : i32
    %c0_i32_1 = arith.constant 0 : i32
    return %c0_i32, %c0_i32_0 : i32, i32
  }
  func.func @transform_8(%arg0: i32) -> (i32, i32) {
    %c0_i32 = arith.constant 0 : i32
    %c0_i32_0 = arith.constant 0 : i32
    %c0_i32_1 = arith.constant 0 : i32
    return %c0_i32, %c0_i32_0 : i32, i32
  }
  func.func @transform_9(%arg0: i32) -> (i32, i32) {
    %c0_i32 = arith.constant 0 : i32
    %c0_i32_0 = arith.constant 0 : i32
    %c0_i32_1 = arith.constant 0 : i32
    return %c0_i32, %c0_i32_0 : i32, i32
  }
  func.func @transform_10(%arg0: i32) -> (i32, i32) {
    %c0_i32 = arith.constant 0 : i32
    %c0_i32_0 = arith.constant 0 : i32
    %c0_i32_1 = arith.constant 0 : i32
    return %c0_i32, %c0_i32_0 : i32, i32
  }
  func.func @transform_11(%arg0: i32) -> (i32, i32) {
    %c0_i32 = arith.constant 0 : i32
    %c0_i32_0 = arith.constant 0 : i32
    return %arg0, %c0_i32 : i32, i32
  }
  func.func @transform_12(%arg0: i32) -> (i32, i32) {
    %c0_i32 = arith.constant 0 : i32
    %c0_i32_0 = arith.constant 0 : i32
    return %arg0, %c0_i32 : i32, i32
  }
  func.func @transform_13(%arg0: i32) -> (i32, i32) {
    %c0_i32 = arith.constant 0 : i32
    %c0_i32_0 = arith.constant 0 : i32
    return %arg0, %c0_i32 : i32, i32
  }
}

</mosaic_0001>

<llo_original>
// kernel: tpu_custom_call.1
$region0: #{tpu_custom_call.1}
  #allocation0 [shape = 'u32[]', space=smem, size = 0x4, offset = 0x4, fixed_abs, tag = 'smem constant byte address 0x4 - core index']
  #allocation1 [shape = 'u32[144,128]{1,0:T(1,128)}', space=vmem, size = 0x12000, scoped, tag = 'internal scratch']
  %s0 = inlined_call_operand.hbm [shape: f32[8,128], index: 0, kind: input, shape index: {}]
  %s1 = inlined_call_operand.hbm [shape: f32[8,128], index: 1, kind: output, shape index: {}]
  %s2 = sld [smem:[#allocation0]]
  $region18: #{tpu_custom_call.1} parent=0
    _
  %s4 = ssub.s32 1, %s2
  %s5 = scalar_select 0, %s4, %s2
  $region1: #{tpu_custom_call.1} parent=0
    #allocation2 [shape = 'u8[4096]{0}', space=vmem, size = 0x1000, scoped, tag = 'input window, operand 0, single buffered']
    #allocation3 [shape = 's32[1]{0}', space=sflag, size = 0x4, scoped, tag = 'scoped memory for tpu_custom_call.1']
    #allocation4 [shape = 's32[1]{0}', space=sflag, size = 0x4, scoped, tag = 'scoped memory for tpu_custom_call.1']
    #allocation5 [shape = 'u8[4096]{0}', space=vmem, size = 0x1000, scoped, tag = 'output window, operand 0, single buffered']
    %6 = vsyncpa [#allocation3], 0
    %7 = vsyncpa [#allocation4], 0
    // Predicated region
    $region2: #{tpu_custom_call.1} parent=1 // pred_check
      _
    $region3: #{tpu_custom_call.1} parent=1 // pred_check_branch
      %9 = sbr.rel (0) target = $region5
    $region4: #{tpu_custom_call.1} parent=1 // pred_region
      %s11 = ssub.s32 128, 128
      %12 = vsyncadd [#allocation3], %s11
      %s14 = sshll.u32 [#allocation2], 4
      %s15 = int_to_ptr.vmem [resolvable:$true] %s14
      %17 = dma.hbm_to_vmem [thread:$0]  %s0, 128, %s15, [#allocation3]
    $region5: #{tpu_custom_call.1} parent=1 // pred_fallthru
      _
    // Predicated region
    $region6: #{tpu_custom_call.1} parent=1 // pred_check
      _
    $region7: #{tpu_custom_call.1} parent=1 // pred_check_branch
      %19 = sbr.rel (0) target = $region9
    $region8: #{tpu_custom_call.1} parent=1 // pred_region
      %20 = dma.done [#allocation3], 128
    $region9: #{tpu_custom_call.1} parent=1 // pred_fallthru
      _
    %v21 = vld [vmem:[#allocation2] sm:$0xff]
    %22 = vrot.lane.b32.xlu0 %v21, 1
    %v23 = vpop.permute.xlu0 %22
    %24 = vst [vmem:[#allocation5] sm:$0xff] %v23
    // Predicated region
    $region10: #{tpu_custom_call.1} parent=1 // pred_check
      _
    $region11: #{tpu_custom_call.1} parent=1 // pred_check_branch
      %26 = sbr.rel (0) target = $region13
    $region12: #{tpu_custom_call.1} parent=1 // pred_region
      %s28 = ssub.s32 128, 128
      %29 = vsyncadd [#allocation4], %s28
      %s31 = sshll.u32 [#allocation5], 4
      %s32 = int_to_ptr.vmem [resolvable:$true] %s31
      %34 = dma.vmem_to_hbm [thread:$0]  %s32, 128, %s1, [#allocation4]
    $region13: #{tpu_custom_call.1} parent=1 // pred_fallthru
      _
    // Predicated region
    $region14: #{tpu_custom_call.1} parent=1 // pred_check
      _
    $region15: #{tpu_custom_call.1} parent=1 // pred_check_branch
      %36 = sbr.rel (0) target = $region17
    $region16: #{tpu_custom_call.1} parent=1 // pred_region
      %37 = dma.done [#allocation4], 128
    $region17: #{tpu_custom_call.1} parent=1 // pred_fallthru
      _
    %38 = vsyncpa [#allocation3], 1
    %39 = vsyncpa [#allocation4], 1

// kernel: _forward_impl.1
$region0: #{_forward_impl.1}
  #allocation0 [shape = 'u32[]', space=smem, size = 0x4, offset = 0x4, fixed_abs, tag = 'smem constant byte address 0x4 - core index']
  #allocation1 [shape = 'u32[144,128]{1,0:T(1,128)}', space=vmem, size = 0x12000, scoped, tag = 'internal scratch']
  %s0 = inlined_call_operand.vmem [shape: f32[16,256], index: 0, kind: input, shape index: {}]
  %s1 = inlined_call_operand.vmem [shape: f32[32,72], index: 1, kind: input, shape index: {}]
  %s2 = inlined_call_operand.vmem [shape: f32[32,1], index: 2, kind: input, shape index: {}]
  %s3 = inlined_call_operand.vmem [shape: f32[9,256], index: 3, kind: input, shape index: {}, may-alias: {3,6}]
  %s4 = inlined_call_operand.vmem [shape: f32[16,288], index: 4, kind: input, shape index: {}]
  %s5 = inlined_call_operand.vmem [shape: f32[16,1], index: 5, kind: input, shape index: {}]
  %s6 = inlined_call_operand.vmem [shape: f32[9,256], index: 6, kind: input, shape index: {}, may-alias: {3,6}]
  %s7 = inlined_call_operand.vmem [shape: f32[8,256], index: 7, kind: input, shape index: {}]
  %s8 = inlined_call_operand.vmem [shape: f32[8,1], index: 8, kind: input, shape index: {}]
  %s9 = inlined_call_operand.vmem [shape: f32[16,256], index: 9, kind: input, shape index: {}]
  %s10 = inlined_call_operand.vmem [shape: f32[256,64], index: 10, kind: input, shape index: {}]
  %s11 = inlined_call_operand.vmem [shape: f32[64,256], index: 11, kind: output, shape index: {0}]
  %s12 = inlined_call_operand.vmem [shape: f32[32,256], index: 12, kind: output, shape index: {1}]
  %s13 = inlined_call_operand.vmem [shape: f32[16,64], index: 13, kind: output, shape index: {2}]
  %14 = xla_tuple %s11, %s12, %s13
  %s15 = sld [smem:[#allocation0]]
  $region70: #{_forward_impl.1} parent=0
    _
  %s17 = ssub.s32 1, %s15
  %s18 = scalar_select 0, %s17, %s15
  // Predicated region
  $region2: #{_forward_impl.1} parent=0 // pred_check
    _
  $region3: #{_forward_impl.1} parent=0 // pred_check_branch
    %20 = sbr.rel (0) target = $region5
  $region4: #{_forward_impl.1} parent=0 // pred_region
    _
  $region5: #{_forward_impl.1} parent=0 // pred_fallthru
    _
  // Predicated region
  $region6: #{_forward_impl.1} parent=0 // pred_check
    _
  $region7: #{_forward_impl.1} parent=0 // pred_check_branch
    %22 = sbr.rel (0) target = $region9
  $region8: #{_forward_impl.1} parent=0 // pred_region
    _
  $region9: #{_forward_impl.1} parent=0 // pred_fallthru
    _
  // Predicated region
  $region10: #{_forward_impl.1} parent=0 // pred_check
    _
  $region11: #{_forward_impl.1} parent=0 // pred_check_branch
    %24 = sbr.rel (0) target = $region13
  $region12: #{_forward_impl.1} parent=0 // pred_region
    _
  $region13: #{_forward_impl.1} parent=0 // pred_fallthru
    _
  // Predicated region
  $region14: #{_forward_impl.1} parent=0 // pred_check
    _
  $region15: #{_forward_impl.1} parent=0 // pred_check_branch
    %26 = sbr.rel (0) target = $region17
  $region16: #{_forward_impl.1} parent=0 // pred_region
    _
  $region17: #{_forward_impl.1} parent=0 // pred_fallthru
    _
  // Predicated region
  $region18: #{_forward_impl.1} parent=0 // pred_check
    _
  $region19: #{_forward_impl.1} parent=0 // pred_check_branch
    %28 = sbr.rel (0) target = $region21
  $region20: #{_forward_impl.1} parent=0 // pred_region
    _
  $region21: #{_forward_impl.1} parent=0 // pred_fallthru
    _
  // Predicated region
  $region22: #{_forward_impl.1} parent=0 // pred_check
    _
  $region23: #{_forward_impl.1} parent=0 // pred_check_branch
    %30 = sbr.rel (0) target = $region25
  $region24: #{_forward_impl.1} parent=0 // pred_region
    _
  $region25: #{_forward_impl.1} parent=0 // pred_fallthru
    _
  // Predicated region
  $region26: #{_forward_impl.1} parent=0 // pred_check
    _
  $region27: #{_forward_impl.1} parent=0 // pred_check_branch
    %32 = sbr.rel (0) target = $region29
  $region28: #{_forward_impl.1} parent=0 // pred_region
    _
  $region29: #{_forward_impl.1} parent=0 // pred_fallthru
    _
  // Predicated region
  $region30: #{_forward_impl.1} parent=0 // pred_check
    _
  $region31: #{_forward_impl.1} parent=0 // pred_check_branch
    %34 = sbr.rel (0) target = $region33
  $region32: #{_forward_impl.1} parent=0 // pred_region
    _
  $region33: #{_forward_impl.1} parent=0 // pred_fallthru
    _
  // Predicated region
  $region34: #{_forward_impl.1} parent=0 // pred_check
    _
  $region35: #{_forward_impl.1} parent=0 // pred_check_branch
    %36 = sbr.rel (0) target = $region37
  $region36: #{_forward_impl.1} parent=0 // pred_region
    _
  $region37: #{_forward_impl.1} parent=0 // pred_fallthru
    _
  // Predicated region
  $region38: #{_forward_impl.1} parent=0 // pred_check
    _
  $region39: #{_forward_impl.1} parent=0 // pred_check_branch
    %38 = sbr.rel (0) target = $region41
  $region40: #{_forward_impl.1} parent=0 // pred_region
    _
  $region41: #{_forward_impl.1} parent=0 // pred_fallthru
    _
  // Predicated region
  $region42: #{_forward_impl.1} parent=0 // pred_check
    _
  $region43: #{_forward_impl.1} parent=0 // pred_check_branch
    %40 = sbr.rel (0) target = $region45
  $region44: #{_forward_impl.1} parent=0 // pred_region
    _
  $region45: #{_forward_impl.1} parent=0 // pred_fallthru
    _
  %v41 = vld [vmem:[%s0] sm:$0xff]
  %v42 = vld [vmem:[%s0 + $0x8] sm:$0xff]
  %v43 = vld [vmem:[%s0 + $0x10] sm:$0xff]
  %v44 = vld [vmem:[%s0 + $0x18] sm:$0xff]
  %v45 = vld [vmem:[%s1] sm:$0xff]
  %v46 = vld [vmem:[%s1 + $0x8] sm:$0xff]
  %v47 = vld [vmem:[%s1 + $0x10] sm:$0xff]
  %v48 = vld [vmem:[%s1 + $0x18] sm:$0xff]
  %v49 = vld [vmem:[%s2] sm:$0xff]
  %v50 = vld [vmem:[%s2 + $0x8] sm:$0xff]
  %v51 = vld [vmem:[%s2 + $0x10] sm:$0xff]
  %v52 = vld [vmem:[%s2 + $0x18] sm:$0xff]
  %v53 = vld [vmem:[%s3] sm:$0xff]
  %v54 = vld [vmem:[%s3 + $0x8] sm:$0xff]
  %v55 = vld [vmem:[%s3 + $0x10] sm:$0x1]
  %v56 = vld [vmem:[%s3 + $0x18] sm:$0x1]
  %59 = vrot.lane.b32.xlu0 %v42, 17
  %v60 = vpop.permute.xlu0 %59
  %61 = vrot.lane.b32.xlu0 %v44, 17
  %v62 = vpop.permute.xlu0 %61
  %67 = vrot.lane.b32.xlu0 %v41, 17
  %v68 = vpop.permute.xlu0 %67
  %69 = vrot.lane.b32.xlu0 %v43, 17
  %v70 = vpop.permute.xlu0 %69
  %vm71 = vcmask 138240
  %v72 = vsel %vm71, %v68, %v60
  %v73 = vsel %vm71, %v70, %v62
  %v78 = vsel %vm71, %v60, %v68
  %v79 = vsel %vm71, %v62, %v70
  %v80 = vlaneseq
  %v81 = vshrl.u32 %v80, 7
  %v82 = vsub.s32 0, %v81
  %v83 = vrot.slane %v53, %v82
  %v84 = vlaneseq
  %v85 = vshrl.u32 %v84, 7
  %v86 = vsub.s32 0, %v85
  %v87 = vrot.slane %v54, %v86
  %v88 = vmul.f32 %v78, %v83
  %v89 = vmul.f32 %v72, %v87
  %v90 = vmul.f32 %v79, %v83
  %v91 = vmul.f32 %v73, %v87
  %92 = vrot.lane.b32.xlu0 %v42, 16
  %v93 = vpop.permute.xlu0 %92
  %94 = vrot.lane.b32.xlu0 %v44, 16
  %v95 = vpop.permute.xlu0 %94
  %98 = vrot.lane.b32.xlu0 %v41, 16
  %v99 = vpop.permute.xlu0 %98
  %100 = vrot.lane.b32.xlu0 %v43, 16
  %v101 = vpop.permute.xlu0 %100
  %vm102 = vcmask 130048
  %v103 = vsel %vm102, %v99, %v93
  %v104 = vsel %vm102, %v101, %v95
  %v109 = vsel %vm102, %v93, %v99
  %v110 = vsel %vm102, %v95, %v101
  %v111 = vlaneseq
  %v112 = vshrl.u32 %v111, 7
  %v113 = vsub.s32 1, %v112
  %v114 = vrot.slane %v53, %v113
  %v115 = vlaneseq
  %v116 = vshrl.u32 %v115, 7
  %v117 = vsub.s32 1, %v116
  %v118 = vrot.slane %v54, %v117
  %v119 = vmul.f32 %v109, %v114
  %v120 = vmul.f32 %v103, %v118
  %v121 = vmul.f32 %v110, %v114
  %v122 = vmul.f32 %v104, %v118
  %123 = vrot.lane.b32.xlu0 %v42, 15
  %v124 = vpop.permute.xlu0 %123
  %125 = vrot.lane.b32.xlu0 %v44, 15
  %v126 = vpop.permute.xlu0 %125
  %129 = vrot.lane.b32.xlu0 %v41, 15
  %v130 = vpop.permute.xlu0 %129
  %131 = vrot.lane.b32.xlu0 %v43, 15
  %v132 = vpop.permute.xlu0 %131
  %vm133 = vcmask 121856
  %v134 = vsel %vm133, %v130, %v124
  %v135 = vsel %vm133, %v132, %v126
  %v140 = vsel %vm133, %v124, %v130
  %v141 = vsel %vm133, %v126, %v132
  %v142 = vlaneseq
  %v143 = vshrl.u32 %v142, 7
  %v144 = vsub.s32 2, %v143
  %v145 = vrot.slane %v53, %v144
  %v146 = vlaneseq
  %v147 = vshrl.u32 %v146, 7
  %v148 = vsub.s32 2, %v147
  %v149 = vrot.slane %v54, %v148
  %v150 = vmul.f32 %v140, %v145
  %v151 = vmul.f32 %v134, %v149
  %v152 = vmul.f32 %v141, %v145
  %v153 = vmul.f32 %v135, %v149
  %154 = vrot.lane.b32.xlu0 %v42, 1
  %v155 = vpop.permute.xlu0 %154
  %156 = vrot.lane.b32.xlu0 %v44, 1
  %v157 = vpop.permute.xlu0 %156
  %160 = vrot.lane.b32.xlu0 %v41, 1
  %v161 = vpop.permute.xlu0 %160
  %162 = vrot.lane.b32.xlu0 %v43, 1
  %v163 = vpop.permute.xlu0 %162
  %vm164 = vcmask 7168
  %v165 = vsel %vm164, %v161, %v155
  %v166 = vsel %vm164, %v163, %v157
  %v171 = vsel %vm164, %v155, %v161
  %v172 = vsel %vm164, %v157, %v163
  %v173 = vlaneseq
  %v174 = vshrl.u32 %v173, 7
  %v175 = vsub.s32 3, %v174
  %v176 = vrot.slane %v53, %v175
  %v177 = vlaneseq
  %v178 = vshrl.u32 %v177, 7
  %v179 = vsub.s32 3, %v178
  %v180 = vrot.slane %v54, %v179
  %v181 = vmul.f32 %v171, %v176
  %v182 = vmul.f32 %v165, %v180
  %v183 = vmul.f32 %v172, %v176
  %v184 = vmul.f32 %v166, %v180
  %185 = vrot.lane.b32.xlu0 %v41, 127
  %v186 = vpop.permute.xlu0 %185
  %187 = vrot.lane.b32.xlu0 %v42, 127
  %v188 = vpop.permute.xlu0 %187
  %189 = vrot.lane.b32.xlu0 %v43, 127
  %v190 = vpop.permute.xlu0 %189
  %191 = vrot.lane.b32.xlu0 %v44, 127
  %v192 = vpop.permute.xlu0 %191
  %vm193 = vcmask 1039360
  %v194 = vsel %vm193, %v186, %v188
  %v195 = vsel %vm193, %v190, %v192
  %v202 = vsel %vm193, %v188, %v186
  %v203 = vsel %vm193, %v192, %v190
  %v204 = vlaneseq
  %v205 = vshrl.u32 %v204, 7
  %v206 = vsub.s32 5, %v205
  %v207 = vrot.slane %v53, %v206
  %v208 = vlaneseq
  %v209 = vshrl.u32 %v208, 7
  %v210 = vsub.s32 5, %v209
  %v211 = vrot.slane %v54, %v210
  %v212 = vmul.f32 %v194, %v207
  %v213 = vmul.f32 %v202, %v211
  %v214 = vmul.f32 %v195, %v207
  %v215 = vmul.f32 %v203, %v211
  %216 = vrot.lane.b32.xlu0 %v41, 113
  %v217 = vpop.permute.xlu0 %216
  %218 = vrot.lane.b32.xlu0 %v42, 113
  %v219 = vpop.permute.xlu0 %218
  %220 = vrot.lane.b32.xlu0 %v43, 113
  %v221 = vpop.permute.xlu0 %220
  %222 = vrot.lane.b32.xlu0 %v44, 113
  %v223 = vpop.permute.xlu0 %222
  %vm224 = vcmask 924672
  %v225 = vsel %vm224, %v217, %v219
  %v226 = vsel %vm224, %v221, %v223
  %v233 = vsel %vm224, %v219, %v217
  %v234 = vsel %vm224, %v223, %v221
  %v235 = vlaneseq
  %v236 = vshrl.u32 %v235, 7
  %v237 = vsub.s32 6, %v236
  %v238 = vrot.slane %v53, %v237
  %v239 = vlaneseq
  %v240 = vshrl.u32 %v239, 7
  %v241 = vsub.s32 6, %v240
  %v242 = vrot.slane %v54, %v241
  %v243 = vmul.f32 %v225, %v238
  %v244 = vmul.f32 %v233, %v242
  %v245 = vmul.f32 %v226, %v238
  %v246 = vmul.f32 %v234, %v242
  %247 = vrot.lane.b32.xlu0 %v41, 112
  %v248 = vpop.permute.xlu0 %247
  %249 = vrot.lane.b32.xlu0 %v42, 112
  %v250 = vpop.permute.xlu0 %249
  %251 = vrot.lane.b32.xlu0 %v43, 112
  %v252 = vpop.permute.xlu0 %251
  %253 = vrot.lane.b32.xlu0 %v44, 112
  %v254 = vpop.permute.xlu0 %253
  %vm255 = vcmask 916480
  %v256 = vsel %vm255, %v248, %v250
  %v257 = vsel %vm255, %v252, %v254
  %v264 = vsel %vm255, %v250, %v248
  %v265 = vsel %vm255, %v254, %v252
  %v266 = vlaneseq
  %v267 = vshrl.u32 %v266, 7
  %v268 = vsub.s32 7, %v267
  %v269 = vrot.slane %v53, %v268
  %v270 = vlaneseq
  %v271 = vshrl.u32 %v270, 7
  %v272 = vsub.s32 7, %v271
  %v273 = vrot.slane %v54, %v272
  %v274 = vmul.f32 %v256, %v269
  %v275 = vmul.f32 %v264, %v273
  %v276 = vmul.f32 %v257, %v269
  %v277 = vmul.f32 %v265, %v273
  %278 = vrot.lane.b32.xlu0 %v41, 111
  %v279 = vpop.permute.xlu0 %278
  %280 = vrot.lane.b32.xlu0 %v42, 111
  %v281 = vpop.permute.xlu0 %280
  %282 = vrot.lane.b32.xlu0 %v43, 111
  %v283 = vpop.permute.xlu0 %282
  %284 = vrot.lane.b32.xlu0 %v44, 111
  %v285 = vpop.permute.xlu0 %284
  %vm286 = vcmask 908288
  %v287 = vsel %vm286, %v279, %v281
  %v288 = vsel %vm286, %v283, %v285
  %v295 = vsel %vm286, %v281, %v279
  %v296 = vsel %vm286, %v285, %v283
  %v297 = vlaneseq
  %v298 = vshrl.u32 %v297, 7
  %v299 = vsub.s32 0, %v298
  %v300 = vrot.slane %v55, %v299
  %v301 = vlaneseq
  %v302 = vshrl.u32 %v301, 7
  %v303 = vsub.s32 0, %v302
  %v304 = vrot.slane %v56, %v303
  %v305 = vmul.f32 %v287, %v300
  %v306 = vmul.f32 %v295, %v304
  %v307 = vmul.f32 %v288, %v300
  %v308 = vmul.f32 %v296, %v304
  %310 = vset.pattern.permute.xlu0 0
  %311 = vperm.xlu0 %310, %v49
  %v312 = vpop.permute.xlu0 %311
  %315 = vset.pattern.permute.xlu0 0
  %316 = vperm.xlu0 %315, %v50
  %v317 = vpop.permute.xlu0 %316
  %320 = vset.pattern.permute.xlu0 0
  %321 = vperm.xlu0 %320, %v51
  %v322 = vpop.permute.xlu0 %321
  %325 = vset.pattern.permute.xlu0 0
  %326 = vperm.xlu0 %325, %v52
  %v327 = vpop.permute.xlu0 %326
  %vm329 = vcmask 588800
  %v331 = vsel %vm329, %v45, 0
  %v334 = vsel %vm329, %v46, 0
  %v337 = vsel %vm329, %v47, 0
  %v340 = vsel %vm329, %v48, 0
  %342 = vmatprep.subr.mxu0 0.0
  %343 = vmatpush1.msra.mxu0 0.0
  %344 = vmatprep.subr.mxu0 0.0
  %345 = vmatpush1.msra.mxu0 0.0
  %346 = vmatprep.subr.mxu0 0.0
  %347 = vmatpush1.msra.mxu0 0.0
  %348 = vmatprep.subr.mxu0 0.0
  %349 = vmatpush1.msra.mxu0 0.0
  %350 = vmatprep.subr.mxu0 0.0
  %351 = vmatpush1.msra.mxu0 0.0
  %352 = vmatprep.subr.mxu0 0.0
  %353 = vmatpush1.msra.mxu0 0.0
  %354 = vmatprep.subr.mxu0 0.0
  %355 = vmatpush1.msra.mxu0 0.0
  %356 = vmatprep.subr.mxu0 %v306
  %357 = vmatpush1.msra.mxu0 %v305
  %358 = vmatprep.subr.mxu0 %v275
  %359 = vmatpush1.msra.mxu0 %v274
  %360 = vmatprep.subr.mxu0 %v244
  %361 = vmatpush1.msra.mxu0 %v243
  %362 = vmatprep.subr.mxu0 %v213
  %363 = vmatpush1.msra.mxu0 %v212
  %364 = vmatprep.subr.mxu0 %v42
  %365 = vmatpush1.msra.mxu0 %v41
  %366 = vmatprep.subr.mxu0 %v182
  %367 = vmatpush1.msra.mxu0 %v181
  %368 = vmatprep.subr.mxu0 %v151
  %369 = vmatpush1.msra.mxu0 %v150
  %370 = vmatprep.subr.mxu0 %v120
  %371 = vmatpush1.msra.mxu0 %v119
  %372 = vmatprep.subr.mxu0 %v89
  %373 = vmatpush1.msra.mxu0 %v88
  %374 = vmatprep.subr.mxu0 0.0
  %375 = vmatpush2.msra.mxu0 0.0
  %376 = vmatprep.subr.mxu0 0.0
  %377 = vmatpush2.msra.mxu0 0.0
  %378 = vmatprep.subr.mxu0 0.0
  %379 = vmatpush2.msra.mxu0 0.0
  %380 = vmatprep.subr.mxu0 0.0
  %381 = vmatpush2.msra.mxu0 0.0
  %382 = vmatprep.subr.mxu0 0.0
  %383 = vmatpush2.msra.mxu0 0.0
  %384 = vmatprep.subr.mxu0 0.0
  %385 = vmatpush2.msra.mxu0 0.0
  %386 = vmatprep.subr.mxu0 0.0
  %387 = vmatpush2.msra.mxu0 0.0
  %388 = vmatprep.subr.mxu0 0.0
  %389 = vmatpush2.msra.mxu0 0.0
  %390 = vmatprep.subr.mxu0 0.0
  %391 = vmatpush2.msra.mxu0 0.0
  %392 = vmatprep.subr.mxu0 0.0
  %393 = vmatpush2.msra.mxu0 0.0
  %394 = vmatprep.subr.mxu0 0.0
  %395 = vmatpush2.msra.mxu0 0.0
  %396 = vmatprep.subr.mxu0 0.0
  %397 = vmatpush2.msra.mxu0 0.0
  %398 = vmatprep.subr.mxu0 0.0
  %399 = vmatpush2.msra.mxu0 0.0
  %400 = vmatprep.subr.mxu0 0.0
  %401 = vmatpush2.msra.mxu0 0.0
  %402 = vmatprep.subr.mxu0 0.0
  %403 = vmatpush2.msra.mxu0 0.0
  %404 = vmatprep.subr.mxu0 0.0
  %405 = vmatpush2.msra.mxu0 0.0
  %406 = vmatprep.mubr.f32.mxu0 0.0
  %407 = vmatmul.mubr.f32.gmra.mxu0 %v331
  %v408 = vpop.f32.mrf.mxu0
  %v409 = vadd.f32 %v312, %v408
  %v410 = vpop.f32.mrf.mxu0
  %v411 = vadd.f32 %v312, %v410
  %412 = vmatprep.mubr.f32.mxu0 0.0
  %413 = vmatmul.mubr.f32.gmra.mxu0 %v334
  %v414 = vpop.f32.mrf.mxu0
  %v415 = vadd.f32 %v317, %v414
  %v416 = vpop.f32.mrf.mxu0
  %v417 = vadd.f32 %v317, %v416
  %418 = vmatprep.mubr.f32.mxu0 0.0
  %419 = vmatmul.mubr.f32.gmra.mxu0 %v337
  %v420 = vpop.f32.mrf.mxu0
  %v421 = vadd.f32 %v322, %v420
  %v422 = vpop.f32.mrf.mxu0
  %v423 = vadd.f32 %v322, %v422
  %424 = vmatprep.mubr.f32.mxu0 0.0
  %425 = vmatmul.mubr.f32.gmra.mxu0 %v340
  %v426 = vpop.f32.mrf.mxu0
  %v427 = vadd.f32 %v327, %v426
  %v428 = vpop.f32.mrf.mxu0
  %v429 = vadd.f32 %v327, %v428
  %430 = vdwg.mxu0
  %431 = vst [vmem:[%s11] sm:$0xff] %v409
  %432 = vst [vmem:[%s11 + $0x8] sm:$0xff] %v411
  %433 = vst [vmem:[%s11 + $0x10] sm:$0xff] %v415
  %434 = vst [vmem:[%s11 + $0x18] sm:$0xff] %v417
  %435 = vst [vmem:[%s11 + $0x20] sm:$0xff] %v421
  %436 = vst [vmem:[%s11 + $0x28] sm:$0xff] %v423
  %437 = vst [vmem:[%s11 + $0x30] sm:$0xff] %v427
  %438 = vst [vmem:[%s11 + $0x38] sm:$0xff] %v429
  %v439 = vmax.f32 %v409, 0.0
  %v440 = vmax.f32 %v411, 0.0
  %v441 = vmax.f32 %v415, 0.0
  %v442 = vmax.f32 %v417, 0.0
  %v443 = vmax.f32 %v421, 0.0
  %v444 = vmax.f32 %v423, 0.0
  %v445 = vmax.f32 %v427, 0.0
  %v446 = vmax.f32 %v429, 0.0
  %447 = vmatprep.subr.mxu0 0.0
  %448 = vmatpush1.msra.mxu0 0.0
  %449 = vmatprep.subr.mxu0 0.0
  %450 = vmatpush1.msra.mxu0 0.0
  %451 = vmatprep.subr.mxu0 0.0
  %452 = vmatpush1.msra.mxu0 0.0
  %453 = vmatprep.subr.mxu0 0.0
  %454 = vmatpush1.msra.mxu0 0.0
  %455 = vmatprep.subr.mxu0 0.0
  %456 = vmatpush1.msra.mxu0 0.0
  %457 = vmatprep.subr.mxu0 0.0
  %458 = vmatpush1.msra.mxu0 0.0
  %459 = vmatprep.subr.mxu0 0.0
  %460 = vmatpush1.msra.mxu0 0.0
  %461 = vmatprep.subr.mxu0 %v308
  %462 = vmatpush1.msra.mxu0 %v307
  %463 = vmatprep.subr.mxu0 %v277
  %464 = vmatpush1.msra.mxu0 %v276
  %465 = vmatprep.subr.mxu0 %v246
  %466 = vmatpush1.msra.mxu0 %v245
  %467 = vmatprep.subr.mxu0 %v215
  %468 = vmatpush1.msra.mxu0 %v214
  %469 = vmatprep.subr.mxu0 %v44
  %470 = vmatpush1.msra.mxu0 %v43
  %471 = vmatprep.subr.mxu0 %v184
  %472 = vmatpush1.msra.mxu0 %v183
  %473 = vmatprep.subr.mxu0 %v153
  %474 = vmatpush1.msra.mxu0 %v152
  %475 = vmatprep.subr.mxu0 %v122
  %476 = vmatpush1.msra.mxu0 %v121
  %477 = vmatprep.subr.mxu0 %v91
  %478 = vmatpush1.msra.mxu0 %v90
  %479 = vmatprep.subr.mxu0 0.0
  %480 = vmatpush2.msra.mxu0 0.0
  %481 = vmatprep.subr.mxu0 0.0
  %482 = vmatpush2.msra.mxu0 0.0
  %483 = vmatprep.subr.mxu0 0.0
  %484 = vmatpush2.msra.mxu0 0.0
  %485 = vmatprep.subr.mxu0 0.0
  %486 = vmatpush2.msra.mxu0 0.0
  %487 = vmatprep.subr.mxu0 0.0
  %488 = vmatpush2.msra.mxu0 0.0
  %489 = vmatprep.subr.mxu0 0.0
  %490 = vmatpush2.msra.mxu0 0.0
  %491 = vmatprep.subr.mxu0 0.0
  %492 = vmatpush2.msra.mxu0 0.0
  %493 = vmatprep.subr.mxu0 0.0
  %494 = vmatpush2.msra.mxu0 0.0
  %495 = vmatprep.subr.mxu0 0.0
  %496 = vmatpush2.msra.mxu0 0.0
  %497 = vmatprep.subr.mxu0 0.0
  %498 = vmatpush2.msra.mxu0 0.0
  %499 = vmatprep.subr.mxu0 0.0
  %500 = vmatpush2.msra.mxu0 0.0
  %501 = vmatprep.subr.mxu0 0.0
  %502 = vmatpush2.msra.mxu0 0.0
  %503 = vmatprep.subr.mxu0 0.0
  %504 = vmatpush2.msra.mxu0 0.0
  %505 = vmatprep.subr.mxu0 0.0
  %506 = vmatpush2.msra.mxu0 0.0
  %507 = vmatprep.subr.mxu0 0.0
  %508 = vmatpush2.msra.mxu0 0.0
  %509 = vmatprep.subr.mxu0 0.0
  %510 = vmatpush2.msra.mxu0 0.0
  %511 = vmatprep.mubr.f32.mxu0 0.0
  %512 = vmatmul.mubr.f32.gmra.mxu0 %v331
  %v513 = vpop.f32.mrf.mxu0
  %v514 = vadd.f32 %v312, %v513
  %v515 = vpop.f32.mrf.mxu0
  %v516 = vadd.f32 %v312, %v515
  %517 = vmatprep.mubr.f32.mxu0 0.0
  %518 = vmatmul.mubr.f32.gmra.mxu0 %v334
  %v519 = vpop.f32.mrf.mxu0
  %v520 = vadd.f32 %v317, %v519
  %v521 = vpop.f32.mrf.mxu0
  %v522 = vadd.f32 %v317, %v521
  %523 = vmatprep.mubr.f32.mxu0 0.0
  %524 = vmatmul.mubr.f32.gmra.mxu0 %v337
  %v525 = vpop.f32.mrf.mxu0
  %v526 = vadd.f32 %v322, %v525
  %v527 = vpop.f32.mrf.mxu0
  %v528 = vadd.f32 %v322, %v527
  %529 = vmatprep.mubr.f32.mxu0 0.0
  %530 = vmatmul.mubr.f32.gmra.mxu0 %v340
  %v531 = vpop.f32.mrf.mxu0
  %v532 = vadd.f32 %v327, %v531
  %v533 = vpop.f32.mrf.mxu0
  %v534 = vadd.f32 %v327, %v533
  %535 = vdwg.mxu0
  %536 = vst [vmem:[%s11 + $0x40] sm:$0xff] %v514
  %537 = vst [vmem:[%s11 + $0x48] sm:$0xff] %v516
  %538 = vst [vmem:[%s11 + $0x50] sm:$0xff] %v520
  %539 = vst [vmem:[%s11 + $0x58] sm:$0xff] %v522
  %540 = vst [vmem:[%s11 + $0x60] sm:$0xff] %v526
  %541 = vst [vmem:[%s11 + $0x68] sm:$0xff] %v528
  %542 = vst [vmem:[%s11 + $0x70] sm:$0xff] %v532
  %543 = vst [vmem:[%s11 + $0x78] sm:$0xff] %v534
  %v544 = vmax.f32 %v514, 0.0
  %v545 = vmax.f32 %v516, 0.0
  %v546 = vmax.f32 %v520, 0.0
  %v547 = vmax.f32 %v522, 0.0
  %v548 = vmax.f32 %v526, 0.0
  %v549 = vmax.f32 %v528, 0.0
  %v550 = vmax.f32 %v532, 0.0
  %v551 = vmax.f32 %v534, 0.0
  %v552 = vld [vmem:[%s4] sm:$0xff]
  %v553 = vld [vmem:[%s4 + $0x8] sm:$0xff]
  %v554 = vld [vmem:[%s4 + $0x10] sm:$0xff]
  %v555 = vld [vmem:[%s4 + $0x18] sm:$0xff]
  %v556 = vld [vmem:[%s4 + $0x20] sm:$0xff]
  %v557 = vld [vmem:[%s4 + $0x28] sm:$0xff]
  %v558 = vld [vmem:[%s5] sm:$0xff]
  %v559 = vld [vmem:[%s5 + $0x8] sm:$0xff]
  %v560 = vld [vmem:[%s6] sm:$0xff]
  %v561 = vld [vmem:[%s6 + $0x8] sm:$0xff]
  %v562 = vld [vmem:[%s6 + $0x10] sm:$0x1]
  %v563 = vld [vmem:[%s6 + $0x18] sm:$0x1]
  %572 = vrot.lane.b32.xlu0 %v440, 17
  %v573 = vpop.permute.xlu0 %572
  %574 = vrot.lane.b32.xlu0 %v442, 17
  %v575 = vpop.permute.xlu0 %574
  %576 = vrot.lane.b32.xlu0 %v444, 17
  %v577 = vpop.permute.xlu0 %576
  %578 = vrot.lane.b32.xlu0 %v446, 17
  %v579 = vpop.permute.xlu0 %578
  %580 = vrot.lane.b32.xlu0 %v545, 17
  %v581 = vpop.permute.xlu0 %580
  %582 = vrot.lane.b32.xlu0 %v547, 17
  %v583 = vpop.permute.xlu0 %582
  %584 = vrot.lane.b32.xlu0 %v549, 17
  %v585 = vpop.permute.xlu0 %584
  %586 = vrot.lane.b32.xlu0 %v551, 17
  %v587 = vpop.permute.xlu0 %586
  %604 = vrot.lane.b32.xlu0 %v439, 17
  %v605 = vpop.permute.xlu0 %604
  %606 = vrot.lane.b32.xlu0 %v441, 17
  %v607 = vpop.permute.xlu0 %606
  %608 = vrot.lane.b32.xlu0 %v443, 17
  %v609 = vpop.permute.xlu0 %608
  %610 = vrot.lane.b32.xlu0 %v445, 17
  %v611 = vpop.permute.xlu0 %610
  %612 = vrot.lane.b32.xlu0 %v544, 17
  %v613 = vpop.permute.xlu0 %612
  %614 = vrot.lane.b32.xlu0 %v546, 17
  %v615 = vpop.permute.xlu0 %614
  %616 = vrot.lane.b32.xlu0 %v548, 17
  %v617 = vpop.permute.xlu0 %616
  %618 = vrot.lane.b32.xlu0 %v550, 17
  %v619 = vpop.permute.xlu0 %618
  %v620 = vsel %vm71, %v605, %v573
  %v621 = vsel %vm71, %v607, %v575
  %v622 = vsel %vm71, %v609, %v577
  %v623 = vsel %vm71, %v611, %v579
  %v624 = vsel %vm71, %v613, %v581
  %v625 = vsel %vm71, %v615, %v583
  %v626 = vsel %vm71, %v617, %v585
  %v627 = vsel %vm71, %v619, %v587
  %v644 = vsel %vm71, %v573, %v605
  %v645 = vsel %vm71, %v575, %v607
  %v646 = vsel %vm71, %v577, %v609
  %v647 = vsel %vm71, %v579, %v611
  %v648 = vsel %vm71, %v581, %v613
  %v649 = vsel %vm71, %v583, %v615
  %v650 = vsel %vm71, %v585, %v617
  %v651 = vsel %vm71, %v587, %v619
  %v652 = vlaneseq
  %v653 = vshrl.u32 %v652, 7
  %v654 = vsub.s32 0, %v653
  %v655 = vrot.slane %v560, %v654
  %v656 = vlaneseq
  %v657 = vshrl.u32 %v656, 7
  %v658 = vsub.s32 0, %v657
  %v659 = vrot.slane %v561, %v658
  %v660 = vmul.f32 %v644, %v655
  %v661 = vmul.f32 %v620, %v659
  %v662 = vmul.f32 %v645, %v655
  %v663 = vmul.f32 %v621, %v659
  %v664 = vmul.f32 %v646, %v655
  %v665 = vmul.f32 %v622, %v659
  %v666 = vmul.f32 %v647, %v655
  %v667 = vmul.f32 %v623, %v659
  %v668 = vmul.f32 %v648, %v655
  %v669 = vmul.f32 %v624, %v659
  %v670 = vmul.f32 %v649, %v655
  %v671 = vmul.f32 %v625, %v659
  %v672 = vmul.f32 %v650, %v655
  %v673 = vmul.f32 %v626, %v659
  %v674 = vmul.f32 %v651, %v655
  %v675 = vmul.f32 %v627, %v659
  %676 = vrot.lane.b32.xlu0 %v440, 16
  %v677 = vpop.permute.xlu0 %676
  %678 = vrot.lane.b32.xlu0 %v442, 16
  %v679 = vpop.permute.xlu0 %678
  %680 = vrot.lane.b32.xlu0 %v444, 16
  %v681 = vpop.permute.xlu0 %680
  %682 = vrot.lane.b32.xlu0 %v446, 16
  %v683 = vpop.permute.xlu0 %682
  %684 = vrot.lane.b32.xlu0 %v545, 16
  %v685 = vpop.permute.xlu0 %684
  %686 = vrot.lane.b32.xlu0 %v547, 16
  %v687 = vpop.permute.xlu0 %686
  %688 = vrot.lane.b32.xlu0 %v549, 16
  %v689 = vpop.permute.xlu0 %688
  %690 = vrot.lane.b32.xlu0 %v551, 16
  %v691 = vpop.permute.xlu0 %690
  %700 = vrot.lane.b32.xlu0 %v439, 16
  %v701 = vpop.permute.xlu0 %700
  %702 = vrot.lane.b32.xlu0 %v441, 16
  %v703 = vpop.permute.xlu0 %702
  %704 = vrot.lane.b32.xlu0 %v443, 16
  %v705 = vpop.permute.xlu0 %704
  %706 = vrot.lane.b32.xlu0 %v445, 16
  %v707 = vpop.permute.xlu0 %706
  %708 = vrot.lane.b32.xlu0 %v544, 16
  %v709 = vpop.permute.xlu0 %708
  %710 = vrot.lane.b32.xlu0 %v546, 16
  %v711 = vpop.permute.xlu0 %710
  %712 = vrot.lane.b32.xlu0 %v548, 16
  %v713 = vpop.permute.xlu0 %712
  %714 = vrot.lane.b32.xlu0 %v550, 16
  %v715 = vpop.permute.xlu0 %714
  %v716 = vsel %vm102, %v701, %v677
  %v717 = vsel %vm102, %v703, %v679
  %v718 = vsel %vm102, %v705, %v681
  %v719 = vsel %vm102, %v707, %v683
  %v720 = vsel %vm102, %v709, %v685
  %v721 = vsel %vm102, %v711, %v687
  %v722 = vsel %vm102, %v713, %v689
  %v723 = vsel %vm102, %v715, %v691
  %v740 = vsel %vm102, %v677, %v701
  %v741 = vsel %vm102, %v679, %v703
  %v742 = vsel %vm102, %v681, %v705
  %v743 = vsel %vm102, %v683, %v707
  %v744 = vsel %vm102, %v685, %v709
  %v745 = vsel %vm102, %v687, %v711
  %v746 = vsel %vm102, %v689, %v713
  %v747 = vsel %vm102, %v691, %v715
  %v748 = vlaneseq
  %v749 = vshrl.u32 %v748, 7
  %v750 = vsub.s32 1, %v749
  %v751 = vrot.slane %v560, %v750
  %v752 = vlaneseq
  %v753 = vshrl.u32 %v752, 7
  %v754 = vsub.s32 1, %v753
  %v755 = vrot.slane %v561, %v754
  %v756 = vmul.f32 %v740, %v751
  %v757 = vmul.f32 %v716, %v755
  %v758 = vmul.f32 %v741, %v751
  %v759 = vmul.f32 %v717, %v755
  %v760 = vmul.f32 %v742, %v751
  %v761 = vmul.f32 %v718, %v755
  %v762 = vmul.f32 %v743, %v751
  %v763 = vmul.f32 %v719, %v755
  %v764 = vmul.f32 %v744, %v751
  %v765 = vmul.f32 %v720, %v755
  %v766 = vmul.f32 %v745, %v751
  %v767 = vmul.f32 %v721, %v755
  %v768 = vmul.f32 %v746, %v751
  %v769 = vmul.f32 %v722, %v755
  %v770 = vmul.f32 %v747, %v751
  %v771 = vmul.f32 %v723, %v755
  %772 = vrot.lane.b32.xlu0 %v440, 15
  %v773 = vpop.permute.xlu0 %772
  %774 = vrot.lane.b32.xlu0 %v442, 15
  %v775 = vpop.permute.xlu0 %774
  %776 = vrot.lane.b32.xlu0 %v444, 15
  %v777 = vpop.permute.xlu0 %776
  %778 = vrot.lane.b32.xlu0 %v446, 15
  %v779 = vpop.permute.xlu0 %778
  %780 = vrot.lane.b32.xlu0 %v545, 15
  %v781 = vpop.permute.xlu0 %780
  %782 = vrot.lane.b32.xlu0 %v547, 15
  %v783 = vpop.permute.xlu0 %782
  %784 = vrot.lane.b32.xlu0 %v549, 15
  %v785 = vpop.permute.xlu0 %784
  %786 = vrot.lane.b32.xlu0 %v551, 15
  %v787 = vpop.permute.xlu0 %786
  %796 = vrot.lane.b32.xlu0 %v439, 15
  %v797 = vpop.permute.xlu0 %796
  %798 = vrot.lane.b32.xlu0 %v441, 15
  %v799 = vpop.permute.xlu0 %798
  %800 = vrot.lane.b32.xlu0 %v443, 15
  %v801 = vpop.permute.xlu0 %800
  %802 = vrot.lane.b32.xlu0 %v445, 15
  %v803 = vpop.permute.xlu0 %802
  %804 = vrot.lane.b32.xlu0 %v544, 15
  %v805 = vpop.permute.xlu0 %804
  %806 = vrot.lane.b32.xlu0 %v546, 15
  %v807 = vpop.permute.xlu0 %806
  %808 = vrot.lane.b32.xlu0 %v548, 15
  %v809 = vpop.permute.xlu0 %808
  %810 = vrot.lane.b32.xlu0 %v550, 15
  %v811 = vpop.permute.xlu0 %810
  %v812 = vsel %vm133, %v797, %v773
  %v813 = vsel %vm133, %v799, %v775
  %v814 = vsel %vm133, %v801, %v777
  %v815 = vsel %vm133, %v803, %v779
  %v816 = vsel %vm133, %v805, %v781
  %v817 = vsel %vm133, %v807, %v783
  %v818 = vsel %vm133, %v809, %v785
  %v819 = vsel %vm133, %v811, %v787
  %v836 = vsel %vm133, %v773, %v797
  %v837 = vsel %vm133, %v775, %v799
  %v838 = vsel %vm133, %v777, %v801
  %v839 = vsel %vm133, %v779, %v803
  %v840 = vsel %vm133, %v781, %v805
  %v841 = vsel %vm133, %v783, %v807
  %v842 = vsel %vm133, %v785, %v809
  %v843 = vsel %vm133, %v787, %v811
  %v844 = vlaneseq
  %v845 = vshrl.u32 %v844, 7
  %v846 = vsub.s32 2, %v845
  %v847 = vrot.slane %v560, %v846
  %v848 = vlaneseq
  %v849 = vshrl.u32 %v848, 7
  %v850 = vsub.s32 2, %v849
  %v851 = vrot.slane %v561, %v850
  %v852 = vmul.f32 %v836, %v847
  %v853 = vmul.f32 %v812, %v851
  %v854 = vmul.f32 %v837, %v847
  %v855 = vmul.f32 %v813, %v851
  %v856 = vmul.f32 %v838, %v847
  %v857 = vmul.f32 %v814, %v851
  %v858 = vmul.f32 %v839, %v847
  %v859 = vmul.f32 %v815, %v851
  %v860 = vmul.f32 %v840, %v847
  %v861 = vmul.f32 %v816, %v851
  %v862 = vmul.f32 %v841, %v847
  %v863 = vmul.f32 %v817, %v851
  %v864 = vmul.f32 %v842, %v847
  %v865 = vmul.f32 %v818, %v851
  %v866 = vmul.f32 %v843, %v847
  %v867 = vmul.f32 %v819, %v851
  %868 = vrot.lane.b32.xlu0 %v440, 1
  %v869 = vpop.permute.xlu0 %868
  %870 = vrot.lane.b32.xlu0 %v442, 1
  %v871 = vpop.permute.xlu0 %870
  %872 = vrot.lane.b32.xlu0 %v444, 1
  %v873 = vpop.permute.xlu0 %872
  %874 = vrot.lane.b32.xlu0 %v446, 1
  %v875 = vpop.permute.xlu0 %874
  %876 = vrot.lane.b32.xlu0 %v545, 1
  %v877 = vpop.permute.xlu0 %876
  %878 = vrot.lane.b32.xlu0 %v547, 1
  %v879 = vpop.permute.xlu0 %878
  %880 = vrot.lane.b32.xlu0 %v549, 1
  %v881 = vpop.permute.xlu0 %880
  %882 = vrot.lane.b32.xlu0 %v551, 1
  %v883 = vpop.permute.xlu0 %882
  %892 = vrot.lane.b32.xlu0 %v439, 1
  %v893 = vpop.permute.xlu0 %892
  %894 = vrot.lane.b32.xlu0 %v441, 1
  %v895 = vpop.permute.xlu0 %894
  %896 = vrot.lane.b32.xlu0 %v443, 1
  %v897 = vpop.permute.xlu0 %896
  %898 = vrot.lane.b32.xlu0 %v445, 1
  %v899 = vpop.permute.xlu0 %898
  %900 = vrot.lane.b32.xlu0 %v544, 1
  %v901 = vpop.permute.xlu0 %900
  %902 = vrot.lane.b32.xlu0 %v546, 1
  %v903 = vpop.permute.xlu0 %902
  %904 = vrot.lane.b32.xlu0 %v548, 1
  %v905 = vpop.permute.xlu0 %904
  %906 = vrot.lane.b32.xlu0 %v550, 1
  %v907 = vpop.permute.xlu0 %906
  %v908 = vsel %vm164, %v893, %v869
  %v909 = vsel %vm164, %v895, %v871
  %v910 = vsel %vm164, %v897, %v873
  %v911 = vsel %vm164, %v899, %v875
  %v912 = vsel %vm164, %v901, %v877
  %v913 = vsel %vm164, %v903, %v879
  %v914 = vsel %vm164, %v905, %v881
  %v915 = vsel %vm164, %v907, %v883
  %v932 = vsel %vm164, %v869, %v893
  %v933 = vsel %vm164, %v871, %v895
  %v934 = vsel %vm164, %v873, %v897
  %v935 = vsel %vm164, %v875, %v899
  %v936 = vsel %vm164, %v877, %v901
  %v937 = vsel %vm164, %v879, %v903
  %v938 = vsel %vm164, %v881, %v905
  %v939 = vsel %vm164, %v883, %v907
  %v940 = vlaneseq
  %v941 = vshrl.u32 %v940, 7
  %v942 = vsub.s32 3, %v941
  %v943 = vrot.slane %v560, %v942
  %v944 = vlaneseq
  %v945 = vshrl.u32 %v944, 7
  %v946 = vsub.s32 3, %v945
  %v947 = vrot.slane %v561, %v946
  %v948 = vmul.f32 %v932, %v943
  %v949 = vmul.f32 %v908, %v947
  %v950 = vmul.f32 %v933, %v943
  %v951 = vmul.f32 %v909, %v947
  %v952 = vmul.f32 %v934, %v943
  %v953 = vmul.f32 %v910, %v947
  %v954 = vmul.f32 %v935, %v943
  %v955 = vmul.f32 %v911, %v947
  %v956 = vmul.f32 %v936, %v943
  %v957 = vmul.f32 %v912, %v947
  %v958 = vmul.f32 %v937, %v943
  %v959 = vmul.f32 %v913, %v947
  %v960 = vmul.f32 %v938, %v943
  %v961 = vmul.f32 %v914, %v947
  %v962 = vmul.f32 %v939, %v943
  %v963 = vmul.f32 %v915, %v947
  %964 = vrot.lane.b32.xlu0 %v439, 127
  %v965 = vpop.permute.xlu0 %964
  %966 = vrot.lane.b32.xlu0 %v440, 127
  %v967 = vpop.permute.xlu0 %966
  %968 = vrot.lane.b32.xlu0 %v441, 127
  %v969 = vpop.permute.xlu0 %968
  %970 = vrot.lane.b32.xlu0 %v442, 127
  %v971 = vpop.permute.xlu0 %970
  %972 = vrot.lane.b32.xlu0 %v443, 127
  %v973 = vpop.permute.xlu0 %972
  %974 = vrot.lane.b32.xlu0 %v444, 127
  %v975 = vpop.permute.xlu0 %974
  %976 = vrot.lane.b32.xlu0 %v445, 127
  %v977 = vpop.permute.xlu0 %976
  %978 = vrot.lane.b32.xlu0 %v446, 127
  %v979 = vpop.permute.xlu0 %978
  %980 = vrot.lane.b32.xlu0 %v544, 127
  %v981 = vpop.permute.xlu0 %980
  %982 = vrot.lane.b32.xlu0 %v545, 127
  %v983 = vpop.permute.xlu0 %982
  %984 = vrot.lane.b32.xlu0 %v546, 127
  %v985 = vpop.permute.xlu0 %984
  %986 = vrot.lane.b32.xlu0 %v547, 127
  %v987 = vpop.permute.xlu0 %986
  %988 = vrot.lane.b32.xlu0 %v548, 127
  %v989 = vpop.permute.xlu0 %988
  %990 = vrot.lane.b32.xlu0 %v549, 127
  %v991 = vpop.permute.xlu0 %990
  %992 = vrot.lane.b32.xlu0 %v550, 127
  %v993 = vpop.permute.xlu0 %992
  %994 = vrot.lane.b32.xlu0 %v551, 127
  %v995 = vpop.permute.xlu0 %994
  %v996 = vsel %vm193, %v965, %v967
  %v997 = vsel %vm193, %v969, %v971
  %v998 = vsel %vm193, %v973, %v975
  %v999 = vsel %vm193, %v977, %v979
  %v1000 = vsel %vm193, %v981, %v983
  %v1001 = vsel %vm193, %v985, %v987
  %v1002 = vsel %vm193, %v989, %v991
  %v1003 = vsel %vm193, %v993, %v995
  %v1028 = vsel %vm193, %v967, %v965
  %v1029 = vsel %vm193, %v971, %v969
  %v1030 = vsel %vm193, %v975, %v973
  %v1031 = vsel %vm193, %v979, %v977
  %v1032 = vsel %vm193, %v983, %v981
  %v1033 = vsel %vm193, %v987, %v985
  %v1034 = vsel %vm193, %v991, %v989
  %v1035 = vsel %vm193, %v995, %v993
  %v1036 = vlaneseq
  %v1037 = vshrl.u32 %v1036, 7
  %v1038 = vsub.s32 5, %v1037
  %v1039 = vrot.slane %v560, %v1038
  %v1040 = vlaneseq
  %v1041 = vshrl.u32 %v1040, 7
  %v1042 = vsub.s32 5, %v1041
  %v1043 = vrot.slane %v561, %v1042
  %v1044 = vmul.f32 %v996, %v1039
  %v1045 = vmul.f32 %v1028, %v1043
  %v1046 = vmul.f32 %v997, %v1039
  %v1047 = vmul.f32 %v1029, %v1043
  %v1048 = vmul.f32 %v998, %v1039
  %v1049 = vmul.f32 %v1030, %v1043
  %v1050 = vmul.f32 %v999, %v1039
  %v1051 = vmul.f32 %v1031, %v1043
  %v1052 = vmul.f32 %v1000, %v1039
  %v1053 = vmul.f32 %v1032, %v1043
  %v1054 = vmul.f32 %v1001, %v1039
  %v1055 = vmul.f32 %v1033, %v1043
  %v1056 = vmul.f32 %v1002, %v1039
  %v1057 = vmul.f32 %v1034, %v1043
  %v1058 = vmul.f32 %v1003, %v1039
  %v1059 = vmul.f32 %v1035, %v1043
  %1060 = vrot.lane.b32.xlu0 %v439, 113
  %v1061 = vpop.permute.xlu0 %1060
  %1062 = vrot.lane.b32.xlu0 %v440, 113
  %v1063 = vpop.permute.xlu0 %1062
  %1064 = vrot.lane.b32.xlu0 %v441, 113
  %v1065 = vpop.permute.xlu0 %1064
  %1066 = vrot.lane.b32.xlu0 %v442, 113
  %v1067 = vpop.permute.xlu0 %1066
  %1068 = vrot.lane.b32.xlu0 %v443, 113
  %v1069 = vpop.permute.xlu0 %1068
  %1070 = vrot.lane.b32.xlu0 %v444, 113
  %v1071 = vpop.permute.xlu0 %1070
  %1072 = vrot.lane.b32.xlu0 %v445, 113
  %v1073 = vpop.permute.xlu0 %1072
  %1074 = vrot.lane.b32.xlu0 %v446, 113
  %v1075 = vpop.permute.xlu0 %1074
  %1076 = vrot.lane.b32.xlu0 %v544, 113
  %v1077 = vpop.permute.xlu0 %1076
  %1078 = vrot.lane.b32.xlu0 %v545, 113
  %v1079 = vpop.permute.xlu0 %1078
  %1080 = vrot.lane.b32.xlu0 %v546, 113
  %v1081 = vpop.permute.xlu0 %1080
  %1082 = vrot.lane.b32.xlu0 %v547, 113
  %v1083 = vpop.permute.xlu0 %1082
  %1084 = vrot.lane.b32.xlu0 %v548, 113
  %v1085 = vpop.permute.xlu0 %1084
  %1086 = vrot.lane.b32.xlu0 %v549, 113
  %v1087 = vpop.permute.xlu0 %1086
  %1088 = vrot.lane.b32.xlu0 %v550, 113
  %v1089 = vpop.permute.xlu0 %1088
  %1090 = vrot.lane.b32.xlu0 %v551, 113
  %v1091 = vpop.permute.xlu0 %1090
  %v1092 = vsel %vm224, %v1061, %v1063
  %v1093 = vsel %vm224, %v1065, %v1067
  %v1094 = vsel %vm224, %v1069, %v1071
  %v1095 = vsel %vm224, %v1073, %v1075
  %v1096 = vsel %vm224, %v1077, %v1079
  %v1097 = vsel %vm224, %v1081, %v1083
  %v1098 = vsel %vm224, %v1085, %v1087
  %v1099 = vsel %vm224, %v1089, %v1091
  %v1124 = vsel %vm224, %v1063, %v1061
  %v1125 = vsel %vm224, %v1067, %v1065
  %v1126 = vsel %vm224, %v1071, %v1069
  %v1127 = vsel %vm224, %v1075, %v1073
  %v1128 = vsel %vm224, %v1079, %v1077
  %v1129 = vsel %vm224, %v1083, %v1081
  %v1130 = vsel %vm224, %v1087, %v1085
  %v1131 = vsel %vm224, %v1091, %v1089
  %v1132 = vlaneseq
  %v1133 = vshrl.u32 %v1132, 7
  %v1134 = vsub.s32 6, %v1133
  %v1135 = vrot.slane %v560, %v1134
  %v1136 = vlaneseq
  %v1137 = vshrl.u32 %v1136, 7
  %v1138 = vsub.s32 6, %v1137
  %v1139 = vrot.slane %v561, %v1138
  %v1140 = vmul.f32 %v1092, %v1135
  %v1141 = vmul.f32 %v1124, %v1139
  %v1142 = vmul.f32 %v1093, %v1135
  %v1143 = vmul.f32 %v1125, %v1139
  %v1144 = vmul.f32 %v1094, %v1135
  %v1145 = vmul.f32 %v1126, %v1139
  %v1146 = vmul.f32 %v1095, %v1135
  %v1147 = vmul.f32 %v1127, %v1139
  %v1148 = vmul.f32 %v1096, %v1135
  %v1149 = vmul.f32 %v1128, %v1139
  %v1150 = vmul.f32 %v1097, %v1135
  %v1151 = vmul.f32 %v1129, %v1139
  %v1152 = vmul.f32 %v1098, %v1135
  %v1153 = vmul.f32 %v1130, %v1139
  %v1154 = vmul.f32 %v1099, %v1135
  %v1155 = vmul.f32 %v1131, %v1139
  %1156 = vrot.lane.b32.xlu0 %v439, 112
  %v1157 = vpop.permute.xlu0 %1156
  %1158 = vrot.lane.b32.xlu0 %v440, 112
  %v1159 = vpop.permute.xlu0 %1158
  %1160 = vrot.lane.b32.xlu0 %v441, 112
  %v1161 = vpop.permute.xlu0 %1160
  %1162 = vrot.lane.b32.xlu0 %v442, 112
  %v1163 = vpop.permute.xlu0 %1162
  %1164 = vrot.lane.b32.xlu0 %v443, 112
  %v1165 = vpop.permute.xlu0 %1164
  %1166 = vrot.lane.b32.xlu0 %v444, 112
  %v1167 = vpop.permute.xlu0 %1166
  %1168 = vrot.lane.b32.xlu0 %v445, 112
  %v1169 = vpop.permute.xlu0 %1168
  %1170 = vrot.lane.b32.xlu0 %v446, 112
  %v1171 = vpop.permute.xlu0 %1170
  %1172 = vrot.lane.b32.xlu0 %v544, 112
  %v1173 = vpop.permute.xlu0 %1172
  %1174 = vrot.lane.b32.xlu0 %v545, 112
  %v1175 = vpop.permute.xlu0 %1174
  %1176 = vrot.lane.b32.xlu0 %v546, 112
  %v1177 = vpop.permute.xlu0 %1176
  %1178 = vrot.lane.b32.xlu0 %v547, 112
  %v1179 = vpop.permute.xlu0 %1178
  %1180 = vrot.lane.b32.xlu0 %v548, 112
  %v1181 = vpop.permute.xlu0 %1180
  %1182 = vrot.lane.b32.xlu0 %v549, 112
  %v1183 = vpop.permute.xlu0 %1182
  %1184 = vrot.lane.b32.xlu0 %v550, 112
  %v1185 = vpop.permute.xlu0 %1184
  %1186 = vrot.lane.b32.xlu0 %v551, 112
  %v1187 = vpop.permute.xlu0 %1186
  %v1188 = vsel %vm255, %v1157, %v1159
  %v1189 = vsel %vm255, %v1161, %v1163
  %v1190 = vsel %vm255, %v1165, %v1167
  %v1191 = vsel %vm255, %v1169, %v1171
  %v1192 = vsel %vm255, %v1173, %v1175
  %v1193 = vsel %vm255, %v1177, %v1179
  %v1194 = vsel %vm255, %v1181, %v1183
  %v1195 = vsel %vm255, %v1185, %v1187
  %v1220 = vsel %vm255, %v1159, %v1157
  %v1221 = vsel %vm255, %v1163, %v1161
  %v1222 = vsel %vm255, %v1167, %v1165
  %v1223 = vsel %vm255, %v1171, %v1169
  %v1224 = vsel %vm255, %v1175, %v1173
  %v1225 = vsel %vm255, %v1179, %v1177
  %v1226 = vsel %vm255, %v1183, %v1181
  %v1227 = vsel %vm255, %v1187, %v1185
  %v1228 = vlaneseq
  %v1229 = vshrl.u32 %v1228, 7
  %v1230 = vsub.s32 7, %v1229
  %v1231 = vrot.slane %v560, %v1230
  %v1232 = vlaneseq
  %v1233 = vshrl.u32 %v1232, 7
  %v1234 = vsub.s32 7, %v1233
  %v1235 = vrot.slane %v561, %v1234
  %v1236 = vmul.f32 %v1188, %v1231
  %v1237 = vmul.f32 %v1220, %v1235
  %v1238 = vmul.f32 %v1189, %v1231
  %v1239 = vmul.f32 %v1221, %v1235
  %v1240 = vmul.f32 %v1190, %v1231
  %v1241 = vmul.f32 %v1222, %v1235
  %v1242 = vmul.f32 %v1191, %v1231
  %v1243 = vmul.f32 %v1223, %v1235
  %v1244 = vmul.f32 %v1192, %v1231
  %v1245 = vmul.f32 %v1224, %v1235
  %v1246 = vmul.f32 %v1193, %v1231
  %v1247 = vmul.f32 %v1225, %v1235
  %v1248 = vmul.f32 %v1194, %v1231
  %v1249 = vmul.f32 %v1226, %v1235
  %v1250 = vmul.f32 %v1195, %v1231
  %v1251 = vmul.f32 %v1227, %v1235
  %1252 = vrot.lane.b32.xlu0 %v439, 111
  %v1253 = vpop.permute.xlu0 %1252
  %1254 = vrot.lane.b32.xlu0 %v440, 111
  %v1255 = vpop.permute.xlu0 %1254
  %1256 = vrot.lane.b32.xlu0 %v441, 111
  %v1257 = vpop.permute.xlu0 %1256
  %1258 = vrot.lane.b32.xlu0 %v442, 111
  %v1259 = vpop.permute.xlu0 %1258
  %1260 = vrot.lane.b32.xlu0 %v443, 111
  %v1261 = vpop.permute.xlu0 %1260
  %1262 = vrot.lane.b32.xlu0 %v444, 111
  %v1263 = vpop.permute.xlu0 %1262
  %1264 = vrot.lane.b32.xlu0 %v445, 111
  %v1265 = vpop.permute.xlu0 %1264
  %1266 = vrot.lane.b32.xlu0 %v446, 111
  %v1267 = vpop.permute.xlu0 %1266
  %1268 = vrot.lane.b32.xlu0 %v544, 111
  %v1269 = vpop.permute.xlu0 %1268
  %1270 = vrot.lane.b32.xlu0 %v545, 111
  %v1271 = vpop.permute.xlu0 %1270
  %1272 = vrot.lane.b32.xlu0 %v546, 111
  %v1273 = vpop.permute.xlu0 %1272
  %1274 = vrot.lane.b32.xlu0 %v547, 111
  %v1275 = vpop.permute.xlu0 %1274
  %1276 = vrot.lane.b32.xlu0 %v548, 111
  %v1277 = vpop.permute.xlu0 %1276
  %1278 = vrot.lane.b32.xlu0 %v549, 111
  %v1279 = vpop.permute.xlu0 %1278
  %1280 = vrot.lane.b32.xlu0 %v550, 111
  %v1281 = vpop.permute.xlu0 %1280
  %1282 = vrot.lane.b32.xlu0 %v551, 111
  %v1283 = vpop.permute.xlu0 %1282
  %v1284 = vsel %vm286, %v1253, %v1255
  %v1285 = vsel %vm286, %v1257, %v1259
  %v1286 = vsel %vm286, %v1261, %v1263
  %v1287 = vsel %vm286, %v1265, %v1267
  %v1288 = vsel %vm286, %v1269, %v1271
  %v1289 = vsel %vm286, %v1273, %v1275
  %v1290 = vsel %vm286, %v1277, %v1279
  %v1291 = vsel %vm286, %v1281, %v1283
  %v1316 = vsel %vm286, %v1255, %v1253
  %v1317 = vsel %vm286, %v1259, %v1257
  %v1318 = vsel %vm286, %v1263, %v1261
  %v1319 = vsel %vm286, %v1267, %v1265
  %v1320 = vsel %vm286, %v1271, %v1269
  %v1321 = vsel %vm286, %v1275, %v1273
  %v1322 = vsel %vm286, %v1279, %v1277
  %v1323 = vsel %vm286, %v1283, %v1281
  %v1324 = vlaneseq
  %v1325 = vshrl.u32 %v1324, 7
  %v1326 = vsub.s32 0, %v1325
  %v1327 = vrot.slane %v562, %v1326
  %v1328 = vlaneseq
  %v1329 = vshrl.u32 %v1328, 7
  %v1330 = vsub.s32 0, %v1329
  %v1331 = vrot.slane %v563, %v1330
  %v1332 = vmul.f32 %v1284, %v1327
  %v1333 = vmul.f32 %v1316, %v1331
  %v1334 = vmul.f32 %v1285, %v1327
  %v1335 = vmul.f32 %v1317, %v1331
  %v1336 = vmul.f32 %v1286, %v1327
  %v1337 = vmul.f32 %v1318, %v1331
  %v1338 = vmul.f32 %v1287, %v1327
  %v1339 = vmul.f32 %v1319, %v1331
  %v1340 = vmul.f32 %v1288, %v1327
  %v1341 = vmul.f32 %v1320, %v1331
  %v1342 = vmul.f32 %v1289, %v1327
  %v1343 = vmul.f32 %v1321, %v1331
  %v1344 = vmul.f32 %v1290, %v1327
  %v1345 = vmul.f32 %v1322, %v1331
  %v1346 = vmul.f32 %v1291, %v1327
  %v1347 = vmul.f32 %v1323, %v1331
  %1349 = vset.pattern.permute.xlu0 0
  %1350 = vperm.xlu0 %1349, %v558
  %v1351 = vpop.permute.xlu0 %1350
  %1354 = vset.pattern.permute.xlu0 0
  %1355 = vperm.xlu0 %1354, %v559
  %v1356 = vpop.permute.xlu0 %1355
  %vm1358 = vcmask 261120
  %v1360 = vsel %vm1358, %v554, 0
  %v1363 = vsel %vm1358, %v557, 0
  %1365 = vmatprep.subr.mxu0 %v955
  %1366 = vmatpush1.msra.mxu0 %v954
  %1367 = vmatprep.subr.mxu0 %v953
  %1368 = vmatpush1.msra.mxu0 %v952
  %1369 = vmatprep.subr.mxu0 %v951
  %1370 = vmatpush1.msra.mxu0 %v950
  %1371 = vmatprep.subr.mxu0 %v949
  %1372 = vmatpush1.msra.mxu0 %v948
  %1373 = vmatprep.subr.mxu0 %v859
  %1374 = vmatpush1.msra.mxu0 %v858
  %1375 = vmatprep.subr.mxu0 %v857
  %1376 = vmatpush1.msra.mxu0 %v856
  %1377 = vmatprep.subr.mxu0 %v855
  %1378 = vmatpush1.msra.mxu0 %v854
  %1379 = vmatprep.subr.mxu0 %v853
  %1380 = vmatpush1.msra.mxu0 %v852
  %1381 = vmatprep.subr.mxu0 %v763
  %1382 = vmatpush1.msra.mxu0 %v762
  %1383 = vmatprep.subr.mxu0 %v761
  %1384 = vmatpush1.msra.mxu0 %v760
  %1385 = vmatprep.subr.mxu0 %v759
  %1386 = vmatpush1.msra.mxu0 %v758
  %1387 = vmatprep.subr.mxu0 %v757
  %1388 = vmatpush1.msra.mxu0 %v756
  %1389 = vmatprep.subr.mxu0 %v667
  %1390 = vmatpush1.msra.mxu0 %v666
  %1391 = vmatprep.subr.mxu0 %v665
  %1392 = vmatpush1.msra.mxu0 %v664
  %1393 = vmatprep.subr.mxu0 %v663
  %1394 = vmatpush1.msra.mxu0 %v662
  %1395 = vmatprep.subr.mxu0 %v661
  %1396 = vmatpush1.msra.mxu0 %v660
  %1397 = vmatprep.subr.mxu0 %v1243
  %1398 = vmatpush2.msra.mxu0 %v1242
  %1399 = vmatprep.subr.mxu0 %v1241
  %1400 = vmatpush2.msra.mxu0 %v1240
  %1401 = vmatprep.subr.mxu0 %v1239
  %1402 = vmatpush2.msra.mxu0 %v1238
  %1403 = vmatprep.subr.mxu0 %v1237
  %1404 = vmatpush2.msra.mxu0 %v1236
  %1405 = vmatprep.subr.mxu0 %v1147
  %1406 = vmatpush2.msra.mxu0 %v1146
  %1407 = vmatprep.subr.mxu0 %v1145
  %1408 = vmatpush2.msra.mxu0 %v1144
  %1409 = vmatprep.subr.mxu0 %v1143
  %1410 = vmatpush2.msra.mxu0 %v1142
  %1411 = vmatprep.subr.mxu0 %v1141
  %1412 = vmatpush2.msra.mxu0 %v1140
  %1413 = vmatprep.subr.mxu0 %v1051
  %1414 = vmatpush2.msra.mxu0 %v1050
  %1415 = vmatprep.subr.mxu0 %v1049
  %1416 = vmatpush2.msra.mxu0 %v1048
  %1417 = vmatprep.subr.mxu0 %v1047
  %1418 = vmatpush2.msra.mxu0 %v1046
  %1419 = vmatprep.subr.mxu0 %v1045
  %1420 = vmatpush2.msra.mxu0 %v1044
  %1421 = vmatprep.subr.mxu0 %v446
  %1422 = vmatpush2.msra.mxu0 %v445
  %1423 = vmatprep.subr.mxu0 %v444
  %1424 = vmatpush2.msra.mxu0 %v443
  %1425 = vmatprep.subr.mxu0 %v442
  %1426 = vmatpush2.msra.mxu0 %v441
  %1427 = vmatprep.subr.mxu0 %v440
  %1428 = vmatpush2.msra.mxu0 %v439
  %1429 = vmatprep.mubr.f32.mxu0 %v553
  %1430 = vmatmul.mubr.f32.gmra.mxu0 %v552
  %v1431 = vpop.f32.mrf.mxu0
  %v1432 = vadd.f32 %v1351, %v1431
  %v1433 = vpop.f32.mrf.mxu0
  %v1434 = vadd.f32 %v1351, %v1433
  %1435 = vmatprep.mubr.f32.mxu0 %v556
  %1436 = vmatmul.mubr.f32.gmra.mxu0 %v555
  %v1437 = vpop.f32.mrf.mxu0
  %v1438 = vadd.f32 %v1356, %v1437
  %v1439 = vpop.f32.mrf.mxu0
  %v1440 = vadd.f32 %v1356, %v1439
  %1441 = vdwg.mxu0
  %1442 = vmatprep.subr.mxu0 0.0
  %1443 = vmatpush1.msra.mxu0 0.0
  %1444 = vmatprep.subr.mxu0 0.0
  %1445 = vmatpush1.msra.mxu0 0.0
  %1446 = vmatprep.subr.mxu0 0.0
  %1447 = vmatpush1.msra.mxu0 0.0
  %1448 = vmatprep.subr.mxu0 0.0
  %1449 = vmatpush1.msra.mxu0 0.0
  %1450 = vmatprep.subr.mxu0 0.0
  %1451 = vmatpush1.msra.mxu0 0.0
  %1452 = vmatprep.subr.mxu0 0.0
  %1453 = vmatpush1.msra.mxu0 0.0
  %1454 = vmatprep.subr.mxu0 0.0
  %1455 = vmatpush1.msra.mxu0 0.0
  %1456 = vmatprep.subr.mxu0 0.0
  %1457 = vmatpush1.msra.mxu0 0.0
  %1458 = vmatprep.subr.mxu0 0.0
  %1459 = vmatpush1.msra.mxu0 0.0
  %1460 = vmatprep.subr.mxu0 0.0
  %1461 = vmatpush1.msra.mxu0 0.0
  %1462 = vmatprep.subr.mxu0 0.0
  %1463 = vmatpush1.msra.mxu0 0.0
  %1464 = vmatprep.subr.mxu0 0.0
  %1465 = vmatpush1.msra.mxu0 0.0
  %1466 = vmatprep.subr.mxu0 %v1339
  %1467 = vmatpush1.msra.mxu0 %v1338
  %1468 = vmatprep.subr.mxu0 %v1337
  %1469 = vmatpush1.msra.mxu0 %v1336
  %1470 = vmatprep.subr.mxu0 %v1335
  %1471 = vmatpush1.msra.mxu0 %v1334
  %1472 = vmatprep.subr.mxu0 %v1333
  %1473 = vmatpush1.msra.mxu0 %v1332
  %1474 = vmatprep.subr.mxu0 0.0
  %1475 = vmatpush2.msra.mxu0 0.0
  %1476 = vmatprep.subr.mxu0 0.0
  %1477 = vmatpush2.msra.mxu0 0.0
  %1478 = vmatprep.subr.mxu0 0.0
  %1479 = vmatpush2.msra.mxu0 0.0
  %1480 = vmatprep.subr.mxu0 0.0
  %1481 = vmatpush2.msra.mxu0 0.0
  %1482 = vmatprep.subr.mxu0 0.0
  %1483 = vmatpush2.msra.mxu0 0.0
  %1484 = vmatprep.subr.mxu0 0.0
  %1485 = vmatpush2.msra.mxu0 0.0
  %1486 = vmatprep.subr.mxu0 0.0
  %1487 = vmatpush2.msra.mxu0 0.0
  %1488 = vmatprep.subr.mxu0 0.0
  %1489 = vmatpush2.msra.mxu0 0.0
  %1490 = vmatprep.subr.mxu0 0.0
  %1491 = vmatpush2.msra.mxu0 0.0
  %1492 = vmatprep.subr.mxu0 0.0
  %1493 = vmatpush2.msra.mxu0 0.0
  %1494 = vmatprep.subr.mxu0 0.0
  %1495 = vmatpush2.msra.mxu0 0.0
  %1496 = vmatprep.subr.mxu0 0.0
  %1497 = vmatpush2.msra.mxu0 0.0
  %1498 = vmatprep.subr.mxu0 0.0
  %1499 = vmatpush2.msra.mxu0 0.0
  %1500 = vmatprep.subr.mxu0 0.0
  %1501 = vmatpush2.msra.mxu0 0.0
  %1502 = vmatprep.subr.mxu0 0.0
  %1503 = vmatpush2.msra.mxu0 0.0
  %1504 = vmatprep.subr.mxu0 0.0
  %1505 = vmatpush2.msra.mxu0 0.0
  %1506 = vmatprep.mubr.f32.mxu0 0.0
  %1507 = vmatmul.mubr.f32.gmra.mxu0 %v1360
  %v1508 = vpop.f32.mrf.mxu0
  %v1509 = vadd.f32 %v1432, %v1508
  %v1510 = vpop.f32.mrf.mxu0
  %v1511 = vadd.f32 %v1434, %v1510
  %1512 = vmatprep.mubr.f32.mxu0 0.0
  %1513 = vmatmul.mubr.f32.gmra.mxu0 %v1363
  %v1514 = vpop.f32.mrf.mxu0
  %v1515 = vadd.f32 %v1438, %v1514
  %v1516 = vpop.f32.mrf.mxu0
  %v1517 = vadd.f32 %v1440, %v1516
  %1518 = vdwg.mxu0
  %1519 = vst [vmem:[%s12] sm:$0xff] %v1509
  %1520 = vst [vmem:[%s12 + $0x8] sm:$0xff] %v1511
  %1521 = vst [vmem:[%s12 + $0x10] sm:$0xff] %v1515
  %1522 = vst [vmem:[%s12 + $0x18] sm:$0xff] %v1517
  %v1523 = vmax.f32 %v1509, 0.0
  %v1524 = vmax.f32 %v1511, 0.0
  %v1525 = vmax.f32 %v1515, 0.0
  %v1526 = vmax.f32 %v1517, 0.0
  %1527 = vmatprep.subr.mxu0 %v963
  %1528 = vmatpush1.msra.mxu0 %v962
  %1529 = vmatprep.subr.mxu0 %v961
  %1530 = vmatpush1.msra.mxu0 %v960
  %1531 = vmatprep.subr.mxu0 %v959
  %1532 = vmatpush1.msra.mxu0 %v958
  %1533 = vmatprep.subr.mxu0 %v957
  %1534 = vmatpush1.msra.mxu0 %v956
  %1535 = vmatprep.subr.mxu0 %v867
  %1536 = vmatpush1.msra.mxu0 %v866
  %1537 = vmatprep.subr.mxu0 %v865
  %1538 = vmatpush1.msra.mxu0 %v864
  %1539 = vmatprep.subr.mxu0 %v863
  %1540 = vmatpush1.msra.mxu0 %v862
  %1541 = vmatprep.subr.mxu0 %v861
  %1542 = vmatpush1.msra.mxu0 %v860
  %1543 = vmatprep.subr.mxu0 %v771
  %1544 = vmatpush1.msra.mxu0 %v770
  %1545 = vmatprep.subr.mxu0 %v769
  %1546 = vmatpush1.msra.mxu0 %v768
  %1547 = vmatprep.subr.mxu0 %v767
  %1548 = vmatpush1.msra.mxu0 %v766
  %1549 = vmatprep.subr.mxu0 %v765
  %1550 = vmatpush1.msra.mxu0 %v764
  %1551 = vmatprep.subr.mxu0 %v675
  %1552 = vmatpush1.msra.mxu0 %v674
  %1553 = vmatprep.subr.mxu0 %v673
  %1554 = vmatpush1.msra.mxu0 %v672
  %1555 = vmatprep.subr.mxu0 %v671
  %1556 = vmatpush1.msra.mxu0 %v670
  %1557 = vmatprep.subr.mxu0 %v669
  %1558 = vmatpush1.msra.mxu0 %v668
  %1559 = vmatprep.subr.mxu0 %v1251
  %1560 = vmatpush2.msra.mxu0 %v1250
  %1561 = vmatprep.subr.mxu0 %v1249
  %1562 = vmatpush2.msra.mxu0 %v1248
  %1563 = vmatprep.subr.mxu0 %v1247
  %1564 = vmatpush2.msra.mxu0 %v1246
  %1565 = vmatprep.subr.mxu0 %v1245
  %1566 = vmatpush2.msra.mxu0 %v1244
  %1567 = vmatprep.subr.mxu0 %v1155
  %1568 = vmatpush2.msra.mxu0 %v1154
  %1569 = vmatprep.subr.mxu0 %v1153
  %1570 = vmatpush2.msra.mxu0 %v1152
  %1571 = vmatprep.subr.mxu0 %v1151
  %1572 = vmatpush2.msra.mxu0 %v1150
  %1573 = vmatprep.subr.mxu0 %v1149
  %1574 = vmatpush2.msra.mxu0 %v1148
  %1575 = vmatprep.subr.mxu0 %v1059
  %1576 = vmatpush2.msra.mxu0 %v1058
  %1577 = vmatprep.subr.mxu0 %v1057
  %1578 = vmatpush2.msra.mxu0 %v1056
  %1579 = vmatprep.subr.mxu0 %v1055
  %1580 = vmatpush2.msra.mxu0 %v1054
  %1581 = vmatprep.subr.mxu0 %v1053
  %1582 = vmatpush2.msra.mxu0 %v1052
  %1583 = vmatprep.subr.mxu0 %v551
  %1584 = vmatpush2.msra.mxu0 %v550
  %1585 = vmatprep.subr.mxu0 %v549
  %1586 = vmatpush2.msra.mxu0 %v548
  %1587 = vmatprep.subr.mxu0 %v547
  %1588 = vmatpush2.msra.mxu0 %v546
  %1589 = vmatprep.subr.mxu0 %v545
  %1590 = vmatpush2.msra.mxu0 %v544
  %1591 = vmatprep.mubr.f32.mxu0 %v553
  %1592 = vmatmul.mubr.f32.gmra.mxu0 %v552
  %v1593 = vpop.f32.mrf.mxu0
  %v1594 = vadd.f32 %v1351, %v1593
  %v1595 = vpop.f32.mrf.mxu0
  %v1596 = vadd.f32 %v1351, %v1595
  %1597 = vmatprep.mubr.f32.mxu0 %v556
  %1598 = vmatmul.mubr.f32.gmra.mxu0 %v555
  %v1599 = vpop.f32.mrf.mxu0
  %v1600 = vadd.f32 %v1356, %v1599
  %v1601 = vpop.f32.mrf.mxu0
  %v1602 = vadd.f32 %v1356, %v1601
  %1603 = vdwg.mxu0
  %1604 = vmatprep.subr.mxu0 0.0
  %1605 = vmatpush1.msra.mxu0 0.0
  %1606 = vmatprep.subr.mxu0 0.0
  %1607 = vmatpush1.msra.mxu0 0.0
  %1608 = vmatprep.subr.mxu0 0.0
  %1609 = vmatpush1.msra.mxu0 0.0
  %1610 = vmatprep.subr.mxu0 0.0
  %1611 = vmatpush1.msra.mxu0 0.0
  %1612 = vmatprep.subr.mxu0 0.0
  %1613 = vmatpush1.msra.mxu0 0.0
  %1614 = vmatprep.subr.mxu0 0.0
  %1615 = vmatpush1.msra.mxu0 0.0
  %1616 = vmatprep.subr.mxu0 0.0
  %1617 = vmatpush1.msra.mxu0 0.0
  %1618 = vmatprep.subr.mxu0 0.0
  %1619 = vmatpush1.msra.mxu0 0.0
  %1620 = vmatprep.subr.mxu0 0.0
  %1621 = vmatpush1.msra.mxu0 0.0
  %1622 = vmatprep.subr.mxu0 0.0
  %1623 = vmatpush1.msra.mxu0 0.0
  %1624 = vmatprep.subr.mxu0 0.0
  %1625 = vmatpush1.msra.mxu0 0.0
  %1626 = vmatprep.subr.mxu0 0.0
  %1627 = vmatpush1.msra.mxu0 0.0
  %1628 = vmatprep.subr.mxu0 %v1347
  %1629 = vmatpush1.msra.mxu0 %v1346
  %1630 = vmatprep.subr.mxu0 %v1345
  %1631 = vmatpush1.msra.mxu0 %v1344
  %1632 = vmatprep.subr.mxu0 %v1343
  %1633 = vmatpush1.msra.mxu0 %v1342
  %1634 = vmatprep.subr.mxu0 %v1341
  %1635 = vmatpush1.msra.mxu0 %v1340
  %1636 = vmatprep.subr.mxu0 0.0
  %1637 = vmatpush2.msra.mxu0 0.0
  %1638 = vmatprep.subr.mxu0 0.0
  %1639 = vmatpush2.msra.mxu0 0.0
  %1640 = vmatprep.subr.mxu0 0.0
  %1641 = vmatpush2.msra.mxu0 0.0
  %1642 = vmatprep.subr.mxu0 0.0
  %1643 = vmatpush2.msra.mxu0 0.0
  %1644 = vmatprep.subr.mxu0 0.0
  %1645 = vmatpush2.msra.mxu0 0.0
  %1646 = vmatprep.subr.mxu0 0.0
  %1647 = vmatpush2.msra.mxu0 0.0
  %1648 = vmatprep.subr.mxu0 0.0
  %1649 = vmatpush2.msra.mxu0 0.0
  %1650 = vmatprep.subr.mxu0 0.0
  %1651 = vmatpush2.msra.mxu0 0.0
  %1652 = vmatprep.subr.mxu0 0.0
  %1653 = vmatpush2.msra.mxu0 0.0
  %1654 = vmatprep.subr.mxu0 0.0
  %1655 = vmatpush2.msra.mxu0 0.0
  %1656 = vmatprep.subr.mxu0 0.0
  %1657 = vmatpush2.msra.mxu0 0.0
  %1658 = vmatprep.subr.mxu0 0.0
  %1659 = vmatpush2.msra.mxu0 0.0
  %1660 = vmatprep.subr.mxu0 0.0
  %1661 = vmatpush2.msra.mxu0 0.0
  %1662 = vmatprep.subr.mxu0 0.0
  %1663 = vmatpush2.msra.mxu0 0.0
  %1664 = vmatprep.subr.mxu0 0.0
  %1665 = vmatpush2.msra.mxu0 0.0
  %1666 = vmatprep.subr.mxu0 0.0
  %1667 = vmatpush2.msra.mxu0 0.0
  %1668 = vmatprep.mubr.f32.mxu0 0.0
  %1669 = vmatmul.mubr.f32.gmra.mxu0 %v1360
  %v1670 = vpop.f32.mrf.mxu0
  %v1671 = vadd.f32 %v1594, %v1670
  %v1672 = vpop.f32.mrf.mxu0
  %v1673 = vadd.f32 %v1596, %v1672
  %1674 = vmatprep.mubr.f32.mxu0 0.0
  %1675 = vmatmul.mubr.f32.gmra.mxu0 %v1363
  %v1676 = vpop.f32.mrf.mxu0
  %v1677 = vadd.f32 %v1600, %v1676
  %v1678 = vpop.f32.mrf.mxu0
  %v1679 = vadd.f32 %v1602, %v1678
  %1680 = vdwg.mxu0
  %1681 = vst [vmem:[%s12 + $0x20] sm:$0xff] %v1671
  %1682 = vst [vmem:[%s12 + $0x28] sm:$0xff] %v1673
  %1683 = vst [vmem:[%s12 + $0x30] sm:$0xff] %v1677
  %1684 = vst [vmem:[%s12 + $0x38] sm:$0xff] %v1679
  %v1685 = vmax.f32 %v1671, 0.0
  %v1686 = vmax.f32 %v1673, 0.0
  %v1687 = vmax.f32 %v1677, 0.0
  %v1688 = vmax.f32 %v1679, 0.0
  %v1689 = vld [vmem:[%s7] sm:$0xff]
  %v1690 = vld [vmem:[%s7 + $0x8] sm:$0xff]
  %v1691 = vld [vmem:[%s8] sm:$0xff]
  %v1692 = vld [vmem:[%s9] sm:$0xff]
  %v1693 = vld [vmem:[%s9 + $0x8] sm:$0xff]
  %v1694 = vld [vmem:[%s9 + $0x10] sm:$0xff]
  %v1695 = vld [vmem:[%s9 + $0x18] sm:$0xff]
  %v1696 = vld [vmem:[%s10] sm:$0xff]
  %v1697 = vld [vmem:[%s10 + $0x8] sm:$0xff]
  %v1698 = vld [vmem:[%s10 + $0x10] sm:$0xff]
  %v1699 = vld [vmem:[%s10 + $0x18] sm:$0xff]
  %v1700 = vld [vmem:[%s10 + $0x20] sm:$0xff]
  %v1701 = vld [vmem:[%s10 + $0x28] sm:$0xff]
  %v1702 = vld [vmem:[%s10 + $0x30] sm:$0xff]
  %v1703 = vld [vmem:[%s10 + $0x38] sm:$0xff]
  %v1704 = vld [vmem:[%s10 + $0x40] sm:$0xff]
  %v1705 = vld [vmem:[%s10 + $0x48] sm:$0xff]
  %v1706 = vld [vmem:[%s10 + $0x50] sm:$0xff]
  %v1707 = vld [vmem:[%s10 + $0x58] sm:$0xff]
  %v1708 = vld [vmem:[%s10 + $0x60] sm:$0xff]
  %v1709 = vld [vmem:[%s10 + $0x68] sm:$0xff]
  %v1710 = vld [vmem:[%s10 + $0x70] sm:$0xff]
  %v1711 = vld [vmem:[%s10 + $0x78] sm:$0xff]
  %v1712 = vld [vmem:[%s10 + $0x80] sm:$0xff]
  %v1713 = vld [vmem:[%s10 + $0x88] sm:$0xff]
  %v1714 = vld [vmem:[%s10 + $0x90] sm:$0xff]
  %v1715 = vld [vmem:[%s10 + $0x98] sm:$0xff]
  %v1716 = vld [vmem:[%s10 + $0xa0] sm:$0xff]
  %v1717 = vld [vmem:[%s10 + $0xa8] sm:$0xff]
  %v1718 = vld [vmem:[%s10 + $0xb0] sm:$0xff]
  %v1719 = vld [vmem:[%s10 + $0xb8] sm:$0xff]
  %v1720 = vld [vmem:[%s10 + $0xc0] sm:$0xff]
  %v1721 = vld [vmem:[%s10 + $0xc8] sm:$0xff]
  %v1722 = vld [vmem:[%s10 + $0xd0] sm:$0xff]
  %v1723 = vld [vmem:[%s10 + $0xd8] sm:$0xff]
  %v1724 = vld [vmem:[%s10 + $0xe0] sm:$0xff]
  %v1725 = vld [vmem:[%s10 + $0xe8] sm:$0xff]
  %v1726 = vld [vmem:[%s10 + $0xf0] sm:$0xff]
  %v1727 = vld [vmem:[%s10 + $0xf8] sm:$0xff]
  %1732 = vrot.lane.b32.xlu0 %v1524, 17
  %v1733 = vpop.permute.xlu0 %1732
  %1734 = vrot.lane.b32.xlu0 %v1526, 17
  %v1735 = vpop.permute.xlu0 %1734
  %1736 = vrot.lane.b32.xlu0 %v1686, 17
  %v1737 = vpop.permute.xlu0 %1736
  %1738 = vrot.lane.b32.xlu0 %v1688, 17
  %v1739 = vpop.permute.xlu0 %1738
  %1748 = vrot.lane.b32.xlu0 %v1523, 17
  %v1749 = vpop.permute.xlu0 %1748
  %1750 = vrot.lane.b32.xlu0 %v1525, 17
  %v1751 = vpop.permute.xlu0 %1750
  %1752 = vrot.lane.b32.xlu0 %v1685, 17
  %v1753 = vpop.permute.xlu0 %1752
  %1754 = vrot.lane.b32.xlu0 %v1687, 17
  %v1755 = vpop.permute.xlu0 %1754
  %v1756 = vsel %vm71, %v1749, %v1733
  %v1757 = vsel %vm71, %v1751, %v1735
  %v1758 = vsel %vm71, %v1753, %v1737
  %v1759 = vsel %vm71, %v1755, %v1739
  %v1768 = vsel %vm71, %v1733, %v1749
  %v1769 = vsel %vm71, %v1735, %v1751
  %v1770 = vsel %vm71, %v1737, %v1753
  %v1771 = vsel %vm71, %v1739, %v1755
  %v1772 = vlaneseq
  %v1773 = vshrl.u32 %v1772, 7
  %v1774 = vsub.s32 0, %v1773
  %v1775 = vrot.slane %v1692, %v1774
  %v1776 = vlaneseq
  %v1777 = vshrl.u32 %v1776, 7
  %v1778 = vsub.s32 0, %v1777
  %v1779 = vrot.slane %v1693, %v1778
  %v1780 = vmul.f32 %v1768, %v1775
  %v1781 = vmul.f32 %v1756, %v1779
  %v1782 = vmul.f32 %v1769, %v1775
  %v1783 = vmul.f32 %v1757, %v1779
  %v1784 = vmul.f32 %v1770, %v1775
  %v1785 = vmul.f32 %v1758, %v1779
  %v1786 = vmul.f32 %v1771, %v1775
  %v1787 = vmul.f32 %v1759, %v1779
  %1788 = vrot.lane.b32.xlu0 %v1524, 16
  %v1789 = vpop.permute.xlu0 %1788
  %1790 = vrot.lane.b32.xlu0 %v1526, 16
  %v1791 = vpop.permute.xlu0 %1790
  %1792 = vrot.lane.b32.xlu0 %v1686, 16
  %v1793 = vpop.permute.xlu0 %1792
  %1794 = vrot.lane.b32.xlu0 %v1688, 16
  %v1795 = vpop.permute.xlu0 %1794
  %1800 = vrot.lane.b32.xlu0 %v1523, 16
  %v1801 = vpop.permute.xlu0 %1800
  %1802 = vrot.lane.b32.xlu0 %v1525, 16
  %v1803 = vpop.permute.xlu0 %1802
  %1804 = vrot.lane.b32.xlu0 %v1685, 16
  %v1805 = vpop.permute.xlu0 %1804
  %1806 = vrot.lane.b32.xlu0 %v1687, 16
  %v1807 = vpop.permute.xlu0 %1806
  %v1808 = vsel %vm102, %v1801, %v1789
  %v1809 = vsel %vm102, %v1803, %v1791
  %v1810 = vsel %vm102, %v1805, %v1793
  %v1811 = vsel %vm102, %v1807, %v1795
  %v1820 = vsel %vm102, %v1789, %v1801
  %v1821 = vsel %vm102, %v1791, %v1803
  %v1822 = vsel %vm102, %v1793, %v1805
  %v1823 = vsel %vm102, %v1795, %v1807
  %v1824 = vlaneseq
  %v1825 = vshrl.u32 %v1824, 7
  %v1826 = vsub.s32 1, %v1825
  %v1827 = vrot.slane %v1692, %v1826
  %v1828 = vlaneseq
  %v1829 = vshrl.u32 %v1828, 7
  %v1830 = vsub.s32 1, %v1829
  %v1831 = vrot.slane %v1693, %v1830
  %v1832 = vmul.f32 %v1820, %v1827
  %v1833 = vmul.f32 %v1808, %v1831
  %v1834 = vmul.f32 %v1821, %v1827
  %v1835 = vmul.f32 %v1809, %v1831
  %v1836 = vmul.f32 %v1822, %v1827
  %v1837 = vmul.f32 %v1810, %v1831
  %v1838 = vmul.f32 %v1823, %v1827
  %v1839 = vmul.f32 %v1811, %v1831
  %1840 = vrot.lane.b32.xlu0 %v1524, 15
  %v1841 = vpop.permute.xlu0 %1840
  %1842 = vrot.lane.b32.xlu0 %v1526, 15
  %v1843 = vpop.permute.xlu0 %1842
  %1844 = vrot.lane.b32.xlu0 %v1686, 15
  %v1845 = vpop.permute.xlu0 %1844
  %1846 = vrot.lane.b32.xlu0 %v1688, 15
  %v1847 = vpop.permute.xlu0 %1846
  %1852 = vrot.lane.b32.xlu0 %v1523, 15
  %v1853 = vpop.permute.xlu0 %1852
  %1854 = vrot.lane.b32.xlu0 %v1525, 15
  %v1855 = vpop.permute.xlu0 %1854
  %1856 = vrot.lane.b32.xlu0 %v1685, 15
  %v1857 = vpop.permute.xlu0 %1856
  %1858 = vrot.lane.b32.xlu0 %v1687, 15
  %v1859 = vpop.permute.xlu0 %1858
  %v1860 = vsel %vm133, %v1853, %v1841
  %v1861 = vsel %vm133, %v1855, %v1843
  %v1862 = vsel %vm133, %v1857, %v1845
  %v1863 = vsel %vm133, %v1859, %v1847
  %v1872 = vsel %vm133, %v1841, %v1853
  %v1873 = vsel %vm133, %v1843, %v1855
  %v1874 = vsel %vm133, %v1845, %v1857
  %v1875 = vsel %vm133, %v1847, %v1859
  %v1876 = vlaneseq
  %v1877 = vshrl.u32 %v1876, 7
  %v1878 = vsub.s32 2, %v1877
  %v1879 = vrot.slane %v1692, %v1878
  %v1880 = vlaneseq
  %v1881 = vshrl.u32 %v1880, 7
  %v1882 = vsub.s32 2, %v1881
  %v1883 = vrot.slane %v1693, %v1882
  %v1884 = vmul.f32 %v1872, %v1879
  %v1885 = vmul.f32 %v1860, %v1883
  %v1886 = vmul.f32 %v1873, %v1879
  %v1887 = vmul.f32 %v1861, %v1883
  %v1888 = vmul.f32 %v1874, %v1879
  %v1889 = vmul.f32 %v1862, %v1883
  %v1890 = vmul.f32 %v1875, %v1879
  %v1891 = vmul.f32 %v1863, %v1883
  %1892 = vrot.lane.b32.xlu0 %v1524, 14
  %v1893 = vpop.permute.xlu0 %1892
  %1894 = vrot.lane.b32.xlu0 %v1526, 14
  %v1895 = vpop.permute.xlu0 %1894
  %1896 = vrot.lane.b32.xlu0 %v1686, 14
  %v1897 = vpop.permute.xlu0 %1896
  %1898 = vrot.lane.b32.xlu0 %v1688, 14
  %v1899 = vpop.permute.xlu0 %1898
  %1904 = vrot.lane.b32.xlu0 %v1523, 14
  %v1905 = vpop.permute.xlu0 %1904
  %1906 = vrot.lane.b32.xlu0 %v1525, 14
  %v1907 = vpop.permute.xlu0 %1906
  %1908 = vrot.lane.b32.xlu0 %v1685, 14
  %v1909 = vpop.permute.xlu0 %1908
  %1910 = vrot.lane.b32.xlu0 %v1687, 14
  %v1911 = vpop.permute.xlu0 %1910
  %vm1912 = vcmask 113664
  %v1913 = vsel %vm1912, %v1905, %v1893
  %v1914 = vsel %vm1912, %v1907, %v1895
  %v1915 = vsel %vm1912, %v1909, %v1897
  %v1916 = vsel %vm1912, %v1911, %v1899
  %v1925 = vsel %vm1912, %v1893, %v1905
  %v1926 = vsel %vm1912, %v1895, %v1907
  %v1927 = vsel %vm1912, %v1897, %v1909
  %v1928 = vsel %vm1912, %v1899, %v1911
  %v1929 = vlaneseq
  %v1930 = vshrl.u32 %v1929, 7
  %v1931 = vsub.s32 3, %v1930
  %v1932 = vrot.slane %v1692, %v1931
  %v1933 = vlaneseq
  %v1934 = vshrl.u32 %v1933, 7
  %v1935 = vsub.s32 3, %v1934
  %v1936 = vrot.slane %v1693, %v1935
  %v1937 = vmul.f32 %v1925, %v1932
  %v1938 = vmul.f32 %v1913, %v1936
  %v1939 = vmul.f32 %v1926, %v1932
  %v1940 = vmul.f32 %v1914, %v1936
  %v1941 = vmul.f32 %v1927, %v1932
  %v1942 = vmul.f32 %v1915, %v1936
  %v1943 = vmul.f32 %v1928, %v1932
  %v1944 = vmul.f32 %v1916, %v1936
  %1945 = vrot.lane.b32.xlu0 %v1524, 1
  %v1946 = vpop.permute.xlu0 %1945
  %1947 = vrot.lane.b32.xlu0 %v1526, 1
  %v1948 = vpop.permute.xlu0 %1947
  %1949 = vrot.lane.b32.xlu0 %v1686, 1
  %v1950 = vpop.permute.xlu0 %1949
  %1951 = vrot.lane.b32.xlu0 %v1688, 1
  %v1952 = vpop.permute.xlu0 %1951
  %1957 = vrot.lane.b32.xlu0 %v1523, 1
  %v1958 = vpop.permute.xlu0 %1957
  %1959 = vrot.lane.b32.xlu0 %v1525, 1
  %v1960 = vpop.permute.xlu0 %1959
  %1961 = vrot.lane.b32.xlu0 %v1685, 1
  %v1962 = vpop.permute.xlu0 %1961
  %1963 = vrot.lane.b32.xlu0 %v1687, 1
  %v1964 = vpop.permute.xlu0 %1963
  %v1965 = vsel %vm164, %v1958, %v1946
  %v1966 = vsel %vm164, %v1960, %v1948
  %v1967 = vsel %vm164, %v1962, %v1950
  %v1968 = vsel %vm164, %v1964, %v1952
  %v1977 = vsel %vm164, %v1946, %v1958
  %v1978 = vsel %vm164, %v1948, %v1960
  %v1979 = vsel %vm164, %v1950, %v1962
  %v1980 = vsel %vm164, %v1952, %v1964
  %v1981 = vlaneseq
  %v1982 = vshrl.u32 %v1981, 7
  %v1983 = vsub.s32 4, %v1982
  %v1984 = vrot.slane %v1692, %v1983
  %v1985 = vlaneseq
  %v1986 = vshrl.u32 %v1985, 7
  %v1987 = vsub.s32 4, %v1986
  %v1988 = vrot.slane %v1693, %v1987
  %v1989 = vmul.f32 %v1977, %v1984
  %v1990 = vmul.f32 %v1965, %v1988
  %v1991 = vmul.f32 %v1978, %v1984
  %v1992 = vmul.f32 %v1966, %v1988
  %v1993 = vmul.f32 %v1979, %v1984
  %v1994 = vmul.f32 %v1967, %v1988
  %v1995 = vmul.f32 %v1980, %v1984
  %v1996 = vmul.f32 %v1968, %v1988
  %1997 = vrot.lane.b32.xlu0 %v1523, 127
  %v1998 = vpop.permute.xlu0 %1997
  %1999 = vrot.lane.b32.xlu0 %v1524, 127
  %v2000 = vpop.permute.xlu0 %1999
  %2001 = vrot.lane.b32.xlu0 %v1525, 127
  %v2002 = vpop.permute.xlu0 %2001
  %2003 = vrot.lane.b32.xlu0 %v1526, 127
  %v2004 = vpop.permute.xlu0 %2003
  %2005 = vrot.lane.b32.xlu0 %v1685, 127
  %v2006 = vpop.permute.xlu0 %2005
  %2007 = vrot.lane.b32.xlu0 %v1686, 127
  %v2008 = vpop.permute.xlu0 %2007
  %2009 = vrot.lane.b32.xlu0 %v1687, 127
  %v2010 = vpop.permute.xlu0 %2009
  %2011 = vrot.lane.b32.xlu0 %v1688, 127
  %v2012 = vpop.permute.xlu0 %2011
  %v2013 = vsel %vm193, %v1998, %v2000
  %v2014 = vsel %vm193, %v2002, %v2004
  %v2015 = vsel %vm193, %v2006, %v2008
  %v2016 = vsel %vm193, %v2010, %v2012
  %v2029 = vsel %vm193, %v2000, %v1998
  %v2030 = vsel %vm193, %v2004, %v2002
  %v2031 = vsel %vm193, %v2008, %v2006
  %v2032 = vsel %vm193, %v2012, %v2010
  %v2033 = vlaneseq
  %v2034 = vshrl.u32 %v2033, 7
  %v2035 = vsub.s32 6, %v2034
  %v2036 = vrot.slane %v1692, %v2035
  %v2037 = vlaneseq
  %v2038 = vshrl.u32 %v2037, 7
  %v2039 = vsub.s32 6, %v2038
  %v2040 = vrot.slane %v1693, %v2039
  %v2041 = vmul.f32 %v2013, %v2036
  %v2042 = vmul.f32 %v2029, %v2040
  %v2043 = vmul.f32 %v2014, %v2036
  %v2044 = vmul.f32 %v2030, %v2040
  %v2045 = vmul.f32 %v2015, %v2036
  %v2046 = vmul.f32 %v2031, %v2040
  %v2047 = vmul.f32 %v2016, %v2036
  %v2048 = vmul.f32 %v2032, %v2040
  %2049 = vrot.lane.b32.xlu0 %v1523, 126
  %v2050 = vpop.permute.xlu0 %2049
  %2051 = vrot.lane.b32.xlu0 %v1524, 126
  %v2052 = vpop.permute.xlu0 %2051
  %2053 = vrot.lane.b32.xlu0 %v1525, 126
  %v2054 = vpop.permute.xlu0 %2053
  %2055 = vrot.lane.b32.xlu0 %v1526, 126
  %v2056 = vpop.permute.xlu0 %2055
  %2057 = vrot.lane.b32.xlu0 %v1685, 126
  %v2058 = vpop.permute.xlu0 %2057
  %2059 = vrot.lane.b32.xlu0 %v1686, 126
  %v2060 = vpop.permute.xlu0 %2059
  %2061 = vrot.lane.b32.xlu0 %v1687, 126
  %v2062 = vpop.permute.xlu0 %2061
  %2063 = vrot.lane.b32.xlu0 %v1688, 126
  %v2064 = vpop.permute.xlu0 %2063
  %vm2065 = vcmask 1031168
  %v2066 = vsel %vm2065, %v2050, %v2052
  %v2067 = vsel %vm2065, %v2054, %v2056
  %v2068 = vsel %vm2065, %v2058, %v2060
  %v2069 = vsel %vm2065, %v2062, %v2064
  %v2082 = vsel %vm2065, %v2052, %v2050
  %v2083 = vsel %vm2065, %v2056, %v2054
  %v2084 = vsel %vm2065, %v2060, %v2058
  %v2085 = vsel %vm2065, %v2064, %v2062
  %v2086 = vlaneseq
  %v2087 = vshrl.u32 %v2086, 7
  %v2088 = vsub.s32 7, %v2087
  %v2089 = vrot.slane %v1692, %v2088
  %v2090 = vlaneseq
  %v2091 = vshrl.u32 %v2090, 7
  %v2092 = vsub.s32 7, %v2091
  %v2093 = vrot.slane %v1693, %v2092
  %v2094 = vmul.f32 %v2066, %v2089
  %v2095 = vmul.f32 %v2082, %v2093
  %v2096 = vmul.f32 %v2067, %v2089
  %v2097 = vmul.f32 %v2083, %v2093
  %v2098 = vmul.f32 %v2068, %v2089
  %v2099 = vmul.f32 %v2084, %v2093
  %v2100 = vmul.f32 %v2069, %v2089
  %v2101 = vmul.f32 %v2085, %v2093
  %2102 = vrot.lane.b32.xlu0 %v1523, 113
  %v2103 = vpop.permute.xlu0 %2102
  %2104 = vrot.lane.b32.xlu0 %v1524, 113
  %v2105 = vpop.permute.xlu0 %2104
  %2106 = vrot.lane.b32.xlu0 %v1525, 113
  %v2107 = vpop.permute.xlu0 %2106
  %2108 = vrot.lane.b32.xlu0 %v1526, 113
  %v2109 = vpop.permute.xlu0 %2108
  %2110 = vrot.lane.b32.xlu0 %v1685, 113
  %v2111 = vpop.permute.xlu0 %2110
  %2112 = vrot.lane.b32.xlu0 %v1686, 113
  %v2113 = vpop.permute.xlu0 %2112
  %2114 = vrot.lane.b32.xlu0 %v1687, 113
  %v2115 = vpop.permute.xlu0 %2114
  %2116 = vrot.lane.b32.xlu0 %v1688, 113
  %v2117 = vpop.permute.xlu0 %2116
  %v2118 = vsel %vm224, %v2103, %v2105
  %v2119 = vsel %vm224, %v2107, %v2109
  %v2120 = vsel %vm224, %v2111, %v2113
  %v2121 = vsel %vm224, %v2115, %v2117
  %v2134 = vsel %vm224, %v2105, %v2103
  %v2135 = vsel %vm224, %v2109, %v2107
  %v2136 = vsel %vm224, %v2113, %v2111
  %v2137 = vsel %vm224, %v2117, %v2115
  %v2138 = vlaneseq
  %v2139 = vshrl.u32 %v2138, 7
  %v2140 = vsub.s32 0, %v2139
  %v2141 = vrot.slane %v1694, %v2140
  %v2142 = vlaneseq
  %v2143 = vshrl.u32 %v2142, 7
  %v2144 = vsub.s32 0, %v2143
  %v2145 = vrot.slane %v1695, %v2144
  %v2146 = vmul.f32 %v2118, %v2141
  %v2147 = vmul.f32 %v2134, %v2145
  %v2148 = vmul.f32 %v2119, %v2141
  %v2149 = vmul.f32 %v2135, %v2145
  %v2150 = vmul.f32 %v2120, %v2141
  %v2151 = vmul.f32 %v2136, %v2145
  %v2152 = vmul.f32 %v2121, %v2141
  %v2153 = vmul.f32 %v2137, %v2145
  %2154 = vrot.lane.b32.xlu0 %v1523, 112
  %v2155 = vpop.permute.xlu0 %2154
  %2156 = vrot.lane.b32.xlu0 %v1524, 112
  %v2157 = vpop.permute.xlu0 %2156
  %2158 = vrot.lane.b32.xlu0 %v1525, 112
  %v2159 = vpop.permute.xlu0 %2158
  %2160 = vrot.lane.b32.xlu0 %v1526, 112
  %v2161 = vpop.permute.xlu0 %2160
  %2162 = vrot.lane.b32.xlu0 %v1685, 112
  %v2163 = vpop.permute.xlu0 %2162
  %2164 = vrot.lane.b32.xlu0 %v1686, 112
  %v2165 = vpop.permute.xlu0 %2164
  %2166 = vrot.lane.b32.xlu0 %v1687, 112
  %v2167 = vpop.permute.xlu0 %2166
  %2168 = vrot.lane.b32.xlu0 %v1688, 112
  %v2169 = vpop.permute.xlu0 %2168
  %v2170 = vsel %vm255, %v2155, %v2157
  %v2171 = vsel %vm255, %v2159, %v2161
  %v2172 = vsel %vm255, %v2163, %v2165
  %v2173 = vsel %vm255, %v2167, %v2169
  %v2186 = vsel %vm255, %v2157, %v2155
  %v2187 = vsel %vm255, %v2161, %v2159
  %v2188 = vsel %vm255, %v2165, %v2163
  %v2189 = vsel %vm255, %v2169, %v2167
  %v2190 = vlaneseq
  %v2191 = vshrl.u32 %v2190, 7
  %v2192 = vsub.s32 1, %v2191
  %v2193 = vrot.slane %v1694, %v2192
  %v2194 = vlaneseq
  %v2195 = vshrl.u32 %v2194, 7
  %v2196 = vsub.s32 1, %v2195
  %v2197 = vrot.slane %v1695, %v2196
  %v2198 = vmul.f32 %v2170, %v2193
  %v2199 = vmul.f32 %v2186, %v2197
  %v2200 = vmul.f32 %v2171, %v2193
  %v2201 = vmul.f32 %v2187, %v2197
  %v2202 = vmul.f32 %v2172, %v2193
  %v2203 = vmul.f32 %v2188, %v2197
  %v2204 = vmul.f32 %v2173, %v2193
  %v2205 = vmul.f32 %v2189, %v2197
  %2206 = vrot.lane.b32.xlu0 %v1523, 111
  %v2207 = vpop.permute.xlu0 %2206
  %2208 = vrot.lane.b32.xlu0 %v1524, 111
  %v2209 = vpop.permute.xlu0 %2208
  %2210 = vrot.lane.b32.xlu0 %v1525, 111
  %v2211 = vpop.permute.xlu0 %2210
  %2212 = vrot.lane.b32.xlu0 %v1526, 111
  %v2213 = vpop.permute.xlu0 %2212
  %2214 = vrot.lane.b32.xlu0 %v1685, 111
  %v2215 = vpop.permute.xlu0 %2214
  %2216 = vrot.lane.b32.xlu0 %v1686, 111
  %v2217 = vpop.permute.xlu0 %2216
  %2218 = vrot.lane.b32.xlu0 %v1687, 111
  %v2219 = vpop.permute.xlu0 %2218
  %2220 = vrot.lane.b32.xlu0 %v1688, 111
  %v2221 = vpop.permute.xlu0 %2220
  %v2222 = vsel %vm286, %v2207, %v2209
  %v2223 = vsel %vm286, %v2211, %v2213
  %v2224 = vsel %vm286, %v2215, %v2217
  %v2225 = vsel %vm286, %v2219, %v2221
  %v2238 = vsel %vm286, %v2209, %v2207
  %v2239 = vsel %vm286, %v2213, %v2211
  %v2240 = vsel %vm286, %v2217, %v2215
  %v2241 = vsel %vm286, %v2221, %v2219
  %v2242 = vlaneseq
  %v2243 = vshrl.u32 %v2242, 7
  %v2244 = vsub.s32 2, %v2243
  %v2245 = vrot.slane %v1694, %v2244
  %v2246 = vlaneseq
  %v2247 = vshrl.u32 %v2246, 7
  %v2248 = vsub.s32 2, %v2247
  %v2249 = vrot.slane %v1695, %v2248
  %v2250 = vmul.f32 %v2222, %v2245
  %v2251 = vmul.f32 %v2238, %v2249
  %v2252 = vmul.f32 %v2223, %v2245
  %v2253 = vmul.f32 %v2239, %v2249
  %v2254 = vmul.f32 %v2224, %v2245
  %v2255 = vmul.f32 %v2240, %v2249
  %v2256 = vmul.f32 %v2225, %v2245
  %v2257 = vmul.f32 %v2241, %v2249
  %2258 = vrot.lane.b32.xlu0 %v1523, 110
  %v2259 = vpop.permute.xlu0 %2258
  %2260 = vrot.lane.b32.xlu0 %v1524, 110
  %v2261 = vpop.permute.xlu0 %2260
  %2262 = vrot.lane.b32.xlu0 %v1525, 110
  %v2263 = vpop.permute.xlu0 %2262
  %2264 = vrot.lane.b32.xlu0 %v1526, 110
  %v2265 = vpop.permute.xlu0 %2264
  %2266 = vrot.lane.b32.xlu0 %v1685, 110
  %v2267 = vpop.permute.xlu0 %2266
  %2268 = vrot.lane.b32.xlu0 %v1686, 110
  %v2269 = vpop.permute.xlu0 %2268
  %2270 = vrot.lane.b32.xlu0 %v1687, 110
  %v2271 = vpop.permute.xlu0 %2270
  %2272 = vrot.lane.b32.xlu0 %v1688, 110
  %v2273 = vpop.permute.xlu0 %2272
  %vm2274 = vcmask 900096
  %v2275 = vsel %vm2274, %v2259, %v2261
  %v2276 = vsel %vm2274, %v2263, %v2265
  %v2277 = vsel %vm2274, %v2267, %v2269
  %v2278 = vsel %vm2274, %v2271, %v2273
  %v2291 = vsel %vm2274, %v2261, %v2259
  %v2292 = vsel %vm2274, %v2265, %v2263
  %v2293 = vsel %vm2274, %v2269, %v2267
  %v2294 = vsel %vm2274, %v2273, %v2271
  %v2295 = vlaneseq
  %v2296 = vshrl.u32 %v2295, 7
  %v2297 = vsub.s32 3, %v2296
  %v2298 = vrot.slane %v1694, %v2297
  %v2299 = vlaneseq
  %v2300 = vshrl.u32 %v2299, 7
  %v2301 = vsub.s32 3, %v2300
  %v2302 = vrot.slane %v1695, %v2301
  %v2303 = vmul.f32 %v2275, %v2298
  %v2304 = vmul.f32 %v2291, %v2302
  %v2305 = vmul.f32 %v2276, %v2298
  %v2306 = vmul.f32 %v2292, %v2302
  %v2307 = vmul.f32 %v2277, %v2298
  %v2308 = vmul.f32 %v2293, %v2302
  %v2309 = vmul.f32 %v2278, %v2298
  %v2310 = vmul.f32 %v2294, %v2302
  %2311 = vrot.lane.b32.xlu0 %v1523, 97
  %v2312 = vpop.permute.xlu0 %2311
  %2313 = vrot.lane.b32.xlu0 %v1524, 97
  %v2314 = vpop.permute.xlu0 %2313
  %2315 = vrot.lane.b32.xlu0 %v1525, 97
  %v2316 = vpop.permute.xlu0 %2315
  %2317 = vrot.lane.b32.xlu0 %v1526, 97
  %v2318 = vpop.permute.xlu0 %2317
  %2319 = vrot.lane.b32.xlu0 %v1685, 97
  %v2320 = vpop.permute.xlu0 %2319
  %2321 = vrot.lane.b32.xlu0 %v1686, 97
  %v2322 = vpop.permute.xlu0 %2321
  %2323 = vrot.lane.b32.xlu0 %v1687, 97
  %v2324 = vpop.permute.xlu0 %2323
  %2325 = vrot.lane.b32.xlu0 %v1688, 97
  %v2326 = vpop.permute.xlu0 %2325
  %vm2327 = vcmask 793600
  %v2328 = vsel %vm2327, %v2312, %v2314
  %v2329 = vsel %vm2327, %v2316, %v2318
  %v2330 = vsel %vm2327, %v2320, %v2322
  %v2331 = vsel %vm2327, %v2324, %v2326
  %v2344 = vsel %vm2327, %v2314, %v2312
  %v2345 = vsel %vm2327, %v2318, %v2316
  %v2346 = vsel %vm2327, %v2322, %v2320
  %v2347 = vsel %vm2327, %v2326, %v2324
  %v2348 = vlaneseq
  %v2349 = vshrl.u32 %v2348, 7
  %v2350 = vsub.s32 4, %v2349
  %v2351 = vrot.slane %v1694, %v2350
  %v2352 = vlaneseq
  %v2353 = vshrl.u32 %v2352, 7
  %v2354 = vsub.s32 4, %v2353
  %v2355 = vrot.slane %v1695, %v2354
  %v2356 = vmul.f32 %v2328, %v2351
  %v2357 = vmul.f32 %v2344, %v2355
  %v2358 = vmul.f32 %v2329, %v2351
  %v2359 = vmul.f32 %v2345, %v2355
  %v2360 = vmul.f32 %v2330, %v2351
  %v2361 = vmul.f32 %v2346, %v2355
  %v2362 = vmul.f32 %v2331, %v2351
  %v2363 = vmul.f32 %v2347, %v2355
  %2364 = vrot.lane.b32.xlu0 %v1523, 96
  %v2365 = vpop.permute.xlu0 %2364
  %2366 = vrot.lane.b32.xlu0 %v1524, 96
  %v2367 = vpop.permute.xlu0 %2366
  %2368 = vrot.lane.b32.xlu0 %v1525, 96
  %v2369 = vpop.permute.xlu0 %2368
  %2370 = vrot.lane.b32.xlu0 %v1526, 96
  %v2371 = vpop.permute.xlu0 %2370
  %2372 = vrot.lane.b32.xlu0 %v1685, 96
  %v2373 = vpop.permute.xlu0 %2372
  %2374 = vrot.lane.b32.xlu0 %v1686, 96
  %v2375 = vpop.permute.xlu0 %2374
  %2376 = vrot.lane.b32.xlu0 %v1687, 96
  %v2377 = vpop.permute.xlu0 %2376
  %2378 = vrot.lane.b32.xlu0 %v1688, 96
  %v2379 = vpop.permute.xlu0 %2378
  %vm2380 = vcmask 785408
  %v2381 = vsel %vm2380, %v2365, %v2367
  %v2382 = vsel %vm2380, %v2369, %v2371
  %v2383 = vsel %vm2380, %v2373, %v2375
  %v2384 = vsel %vm2380, %v2377, %v2379
  %v2397 = vsel %vm2380, %v2367, %v2365
  %v2398 = vsel %vm2380, %v2371, %v2369
  %v2399 = vsel %vm2380, %v2375, %v2373
  %v2400 = vsel %vm2380, %v2379, %v2377
  %v2401 = vlaneseq
  %v2402 = vshrl.u32 %v2401, 7
  %v2403 = vsub.s32 5, %v2402
  %v2404 = vrot.slane %v1694, %v2403
  %v2405 = vlaneseq
  %v2406 = vshrl.u32 %v2405, 7
  %v2407 = vsub.s32 5, %v2406
  %v2408 = vrot.slane %v1695, %v2407
  %v2409 = vmul.f32 %v2381, %v2404
  %v2410 = vmul.f32 %v2397, %v2408
  %v2411 = vmul.f32 %v2382, %v2404
  %v2412 = vmul.f32 %v2398, %v2408
  %v2413 = vmul.f32 %v2383, %v2404
  %v2414 = vmul.f32 %v2399, %v2408
  %v2415 = vmul.f32 %v2384, %v2404
  %v2416 = vmul.f32 %v2400, %v2408
  %2417 = vrot.lane.b32.xlu0 %v1523, 95
  %v2418 = vpop.permute.xlu0 %2417
  %2419 = vrot.lane.b32.xlu0 %v1524, 95
  %v2420 = vpop.permute.xlu0 %2419
  %2421 = vrot.lane.b32.xlu0 %v1525, 95
  %v2422 = vpop.permute.xlu0 %2421
  %2423 = vrot.lane.b32.xlu0 %v1526, 95
  %v2424 = vpop.permute.xlu0 %2423
  %2425 = vrot.lane.b32.xlu0 %v1685, 95
  %v2426 = vpop.permute.xlu0 %2425
  %2427 = vrot.lane.b32.xlu0 %v1686, 95
  %v2428 = vpop.permute.xlu0 %2427
  %2429 = vrot.lane.b32.xlu0 %v1687, 95
  %v2430 = vpop.permute.xlu0 %2429
  %2431 = vrot.lane.b32.xlu0 %v1688, 95
  %v2432 = vpop.permute.xlu0 %2431
  %vm2433 = vcmask 777216
  %v2434 = vsel %vm2433, %v2418, %v2420
  %v2435 = vsel %vm2433, %v2422, %v2424
  %v2436 = vsel %vm2433, %v2426, %v2428
  %v2437 = vsel %vm2433, %v2430, %v2432
  %v2450 = vsel %vm2433, %v2420, %v2418
  %v2451 = vsel %vm2433, %v2424, %v2422
  %v2452 = vsel %vm2433, %v2428, %v2426
  %v2453 = vsel %vm2433, %v2432, %v2430
  %v2454 = vlaneseq
  %v2455 = vshrl.u32 %v2454, 7
  %v2456 = vsub.s32 6, %v2455
  %v2457 = vrot.slane %v1694, %v2456
  %v2458 = vlaneseq
  %v2459 = vshrl.u32 %v2458, 7
  %v2460 = vsub.s32 6, %v2459
  %v2461 = vrot.slane %v1695, %v2460
  %v2462 = vmul.f32 %v2434, %v2457
  %v2463 = vmul.f32 %v2450, %v2461
  %v2464 = vmul.f32 %v2435, %v2457
  %v2465 = vmul.f32 %v2451, %v2461
  %v2466 = vmul.f32 %v2436, %v2457
  %v2467 = vmul.f32 %v2452, %v2461
  %v2468 = vmul.f32 %v2437, %v2457
  %v2469 = vmul.f32 %v2453, %v2461
  %2470 = vrot.lane.b32.xlu0 %v1523, 94
  %v2471 = vpop.permute.xlu0 %2470
  %2472 = vrot.lane.b32.xlu0 %v1524, 94
  %v2473 = vpop.permute.xlu0 %2472
  %2474 = vrot.lane.b32.xlu0 %v1525, 94
  %v2475 = vpop.permute.xlu0 %2474
  %2476 = vrot.lane.b32.xlu0 %v1526, 94
  %v2477 = vpop.permute.xlu0 %2476
  %2478 = vrot.lane.b32.xlu0 %v1685, 94
  %v2479 = vpop.permute.xlu0 %2478
  %2480 = vrot.lane.b32.xlu0 %v1686, 94
  %v2481 = vpop.permute.xlu0 %2480
  %2482 = vrot.lane.b32.xlu0 %v1687, 94
  %v2483 = vpop.permute.xlu0 %2482
  %2484 = vrot.lane.b32.xlu0 %v1688, 94
  %v2485 = vpop.permute.xlu0 %2484
  %vm2486 = vcmask 769024
  %v2487 = vsel %vm2486, %v2471, %v2473
  %v2488 = vsel %vm2486, %v2475, %v2477
  %v2489 = vsel %vm2486, %v2479, %v2481
  %v2490 = vsel %vm2486, %v2483, %v2485
  %v2503 = vsel %vm2486, %v2473, %v2471
  %v2504 = vsel %vm2486, %v2477, %v2475
  %v2505 = vsel %vm2486, %v2481, %v2479
  %v2506 = vsel %vm2486, %v2485, %v2483
  %v2507 = vlaneseq
  %v2508 = vshrl.u32 %v2507, 7
  %v2509 = vsub.s32 7, %v2508
  %v2510 = vrot.slane %v1694, %v2509
  %v2511 = vlaneseq
  %v2512 = vshrl.u32 %v2511, 7
  %v2513 = vsub.s32 7, %v2512
  %v2514 = vrot.slane %v1695, %v2513
  %v2515 = vmul.f32 %v2487, %v2510
  %v2516 = vmul.f32 %v2503, %v2514
  %v2517 = vmul.f32 %v2488, %v2510
  %v2518 = vmul.f32 %v2504, %v2514
  %v2519 = vmul.f32 %v2489, %v2510
  %v2520 = vmul.f32 %v2505, %v2514
  %v2521 = vmul.f32 %v2490, %v2510
  %v2522 = vmul.f32 %v2506, %v2514
  %2523 = vmatprep.subr.mxu0 %v2097
  %2524 = vmatpush1.msra.mxu0 %v2096
  %2525 = vmatprep.subr.mxu0 %v2095
  %2526 = vmatpush1.msra.mxu0 %v2094
  %2527 = vmatprep.subr.mxu0 %v2044
  %2528 = vmatpush1.msra.mxu0 %v2043
  %2529 = vmatprep.subr.mxu0 %v2042
  %2530 = vmatpush1.msra.mxu0 %v2041
  %2531 = vmatprep.subr.mxu0 %v1526
  %2532 = vmatpush1.msra.mxu0 %v1525
  %2533 = vmatprep.subr.mxu0 %v1524
  %2534 = vmatpush1.msra.mxu0 %v1523
  %2535 = vmatprep.subr.mxu0 %v1992
  %2536 = vmatpush1.msra.mxu0 %v1991
  %2537 = vmatprep.subr.mxu0 %v1990
  %2538 = vmatpush1.msra.mxu0 %v1989
  %2539 = vmatprep.subr.mxu0 %v1940
  %2540 = vmatpush1.msra.mxu0 %v1939
  %2541 = vmatprep.subr.mxu0 %v1938
  %2542 = vmatpush1.msra.mxu0 %v1937
  %2543 = vmatprep.subr.mxu0 %v1887
  %2544 = vmatpush1.msra.mxu0 %v1886
  %2545 = vmatprep.subr.mxu0 %v1885
  %2546 = vmatpush1.msra.mxu0 %v1884
  %2547 = vmatprep.subr.mxu0 %v1835
  %2548 = vmatpush1.msra.mxu0 %v1834
  %2549 = vmatprep.subr.mxu0 %v1833
  %2550 = vmatpush1.msra.mxu0 %v1832
  %2551 = vmatprep.subr.mxu0 %v1783
  %2552 = vmatpush1.msra.mxu0 %v1782
  %2553 = vmatprep.subr.mxu0 %v1781
  %2554 = vmatpush1.msra.mxu0 %v1780
  %2555 = vmatprep.subr.mxu0 %v2518
  %2556 = vmatpush2.msra.mxu0 %v2517
  %2557 = vmatprep.subr.mxu0 %v2516
  %2558 = vmatpush2.msra.mxu0 %v2515
  %2559 = vmatprep.subr.mxu0 %v2465
  %2560 = vmatpush2.msra.mxu0 %v2464
  %2561 = vmatprep.subr.mxu0 %v2463
  %2562 = vmatpush2.msra.mxu0 %v2462
  %2563 = vmatprep.subr.mxu0 %v2412
  %2564 = vmatpush2.msra.mxu0 %v2411
  %2565 = vmatprep.subr.mxu0 %v2410
  %2566 = vmatpush2.msra.mxu0 %v2409
  %2567 = vmatprep.subr.mxu0 %v2359
  %2568 = vmatpush2.msra.mxu0 %v2358
  %2569 = vmatprep.subr.mxu0 %v2357
  %2570 = vmatpush2.msra.mxu0 %v2356
  %2571 = vmatprep.subr.mxu0 %v2306
  %2572 = vmatpush2.msra.mxu0 %v2305
  %2573 = vmatprep.subr.mxu0 %v2304
  %2574 = vmatpush2.msra.mxu0 %v2303
  %2575 = vmatprep.subr.mxu0 %v2253
  %2576 = vmatpush2.msra.mxu0 %v2252
  %2577 = vmatprep.subr.mxu0 %v2251
  %2578 = vmatpush2.msra.mxu0 %v2250
  %2579 = vmatprep.subr.mxu0 %v2201
  %2580 = vmatpush2.msra.mxu0 %v2200
  %2581 = vmatprep.subr.mxu0 %v2199
  %2582 = vmatpush2.msra.mxu0 %v2198
  %2583 = vmatprep.subr.mxu0 %v2149
  %2584 = vmatpush2.msra.mxu0 %v2148
  %2585 = vmatprep.subr.mxu0 %v2147
  %2586 = vmatpush2.msra.mxu0 %v2146
  %2587 = vmatprep.mubr.f32.mxu0 %v1690
  %2588 = vmatmul.mubr.f32.gmra.mxu0 %v1689
  %v2589 = vpop.f32.mrf.mxu0
  %v2590 = vadd.f32 0.0, %v2589
  %v2591 = vpop.f32.mrf.mxu0
  %v2592 = vadd.f32 0.0, %v2591
  %2593 = vdwg.mxu0
  %2595 = vset.pattern.permute.xlu0 0
  %2596 = vperm.xlu0 %2595, %v1691
  %v2597 = vpop.permute.xlu0 %2596
  %2599 = vmatprep.subr.mxu0 0.0
  %2600 = vmatpush1.msra.mxu0 %v1711
  %2601 = vmatprep.subr.mxu0 0.0
  %2602 = vmatpush1.msra.mxu0 %v1710
  %2603 = vmatprep.subr.mxu0 0.0
  %2604 = vmatpush1.msra.mxu0 %v1709
  %2605 = vmatprep.subr.mxu0 0.0
  %2606 = vmatpush1.msra.mxu0 %v1708
  %2607 = vmatprep.subr.mxu0 0.0
  %2608 = vmatpush1.msra.mxu0 %v1707
  %2609 = vmatprep.subr.mxu0 0.0
  %2610 = vmatpush1.msra.mxu0 %v1706
  %2611 = vmatprep.subr.mxu0 0.0
  %2612 = vmatpush1.msra.mxu0 %v1705
  %2613 = vmatprep.subr.mxu0 0.0
  %2614 = vmatpush1.msra.mxu0 %v1704
  %2615 = vmatprep.subr.mxu0 0.0
  %2616 = vmatpush1.msra.mxu0 %v1703
  %2617 = vmatprep.subr.mxu0 0.0
  %2618 = vmatpush1.msra.mxu0 %v1702
  %2619 = vmatprep.subr.mxu0 0.0
  %2620 = vmatpush1.msra.mxu0 %v1701
  %2621 = vmatprep.subr.mxu0 0.0
  %2622 = vmatpush1.msra.mxu0 %v1700
  %2623 = vmatprep.subr.mxu0 0.0
  %2624 = vmatpush1.msra.mxu0 %v1699
  %2625 = vmatprep.subr.mxu0 0.0
  %2626 = vmatpush1.msra.mxu0 %v1698
  %2627 = vmatprep.subr.mxu0 0.0
  %2628 = vmatpush1.msra.mxu0 %v1697
  %2629 = vmatprep.subr.mxu0 0.0
  %2630 = vmatpush1.msra.mxu0 %v1696
  %2631 = vmatprep.subr.mxu0 0.0
  %2632 = vmatpush2.msra.mxu0 %v1727
  %2633 = vmatprep.subr.mxu0 0.0
  %2634 = vmatpush2.msra.mxu0 %v1726
  %2635 = vmatprep.subr.mxu0 0.0
  %2636 = vmatpush2.msra.mxu0 %v1725
  %2637 = vmatprep.subr.mxu0 0.0
  %2638 = vmatpush2.msra.mxu0 %v1724
  %2639 = vmatprep.subr.mxu0 0.0
  %2640 = vmatpush2.msra.mxu0 %v1723
  %2641 = vmatprep.subr.mxu0 0.0
  %2642 = vmatpush2.msra.mxu0 %v1722
  %2643 = vmatprep.subr.mxu0 0.0
  %2644 = vmatpush2.msra.mxu0 %v1721
  %2645 = vmatprep.subr.mxu0 0.0
  %2646 = vmatpush2.msra.mxu0 %v1720
  %2647 = vmatprep.subr.mxu0 0.0
  %2648 = vmatpush2.msra.mxu0 %v1719
  %2649 = vmatprep.subr.mxu0 0.0
  %2650 = vmatpush2.msra.mxu0 %v1718
  %2651 = vmatprep.subr.mxu0 0.0
  %2652 = vmatpush2.msra.mxu0 %v1717
  %2653 = vmatprep.subr.mxu0 0.0
  %2654 = vmatpush2.msra.mxu0 %v1716
  %2655 = vmatprep.subr.mxu0 0.0
  %2656 = vmatpush2.msra.mxu0 %v1715
  %2657 = vmatprep.subr.mxu0 0.0
  %2658 = vmatpush2.msra.mxu0 %v1714
  %2659 = vmatprep.subr.mxu0 0.0
  %2660 = vmatpush2.msra.mxu0 %v1713
  %2661 = vmatprep.subr.mxu0 0.0
  %2662 = vmatpush2.msra.mxu0 %v1712
  %2663 = vmatprep.mubr.f32.mxu0 %v2592
  %2664 = vmatmul.mubr.f32.gmra.mxu0 %v2590
  %v2665 = vpop.f32.mrf.mxu0
  %v2666 = vadd.f32 %v2597, %v2665
  %v2667 = vpop.f32.mrf.mxu0
  %2668 = vdwg.mxu0
  %vm2669 = vcmask 523264
  %2670 = vst.msk [vmem:[%s13] sm:$0xff] %vm2669, %v2666
  %2671 = vmatprep.subr.mxu0 %v2101
  %2672 = vmatpush1.msra.mxu0 %v2100
  %2673 = vmatprep.subr.mxu0 %v2099
  %2674 = vmatpush1.msra.mxu0 %v2098
  %2675 = vmatprep.subr.mxu0 %v2048
  %2676 = vmatpush1.msra.mxu0 %v2047
  %2677 = vmatprep.subr.mxu0 %v2046
  %2678 = vmatpush1.msra.mxu0 %v2045
  %2679 = vmatprep.subr.mxu0 %v1688
  %2680 = vmatpush1.msra.mxu0 %v1687
  %2681 = vmatprep.subr.mxu0 %v1686
  %2682 = vmatpush1.msra.mxu0 %v1685
  %2683 = vmatprep.subr.mxu0 %v1996
  %2684 = vmatpush1.msra.mxu0 %v1995
  %2685 = vmatprep.subr.mxu0 %v1994
  %2686 = vmatpush1.msra.mxu0 %v1993
  %2687 = vmatprep.subr.mxu0 %v1944
  %2688 = vmatpush1.msra.mxu0 %v1943
  %2689 = vmatprep.subr.mxu0 %v1942
  %2690 = vmatpush1.msra.mxu0 %v1941
  %2691 = vmatprep.subr.mxu0 %v1891
  %2692 = vmatpush1.msra.mxu0 %v1890
  %2693 = vmatprep.subr.mxu0 %v1889
  %2694 = vmatpush1.msra.mxu0 %v1888
  %2695 = vmatprep.subr.mxu0 %v1839
  %2696 = vmatpush1.msra.mxu0 %v1838
  %2697 = vmatprep.subr.mxu0 %v1837
  %2698 = vmatpush1.msra.mxu0 %v1836
  %2699 = vmatprep.subr.mxu0 %v1787
  %2700 = vmatpush1.msra.mxu0 %v1786
  %2701 = vmatprep.subr.mxu0 %v1785
  %2702 = vmatpush1.msra.mxu0 %v1784
  %2703 = vmatprep.subr.mxu0 %v2522
  %2704 = vmatpush2.msra.mxu0 %v2521
  %2705 = vmatprep.subr.mxu0 %v2520
  %2706 = vmatpush2.msra.mxu0 %v2519
  %2707 = vmatprep.subr.mxu0 %v2469
  %2708 = vmatpush2.msra.mxu0 %v2468
  %2709 = vmatprep.subr.mxu0 %v2467
  %2710 = vmatpush2.msra.mxu0 %v2466
  %2711 = vmatprep.subr.mxu0 %v2416
  %2712 = vmatpush2.msra.mxu0 %v2415
  %2713 = vmatprep.subr.mxu0 %v2414
  %2714 = vmatpush2.msra.mxu0 %v2413
  %2715 = vmatprep.subr.mxu0 %v2363
  %2716 = vmatpush2.msra.mxu0 %v2362
  %2717 = vmatprep.subr.mxu0 %v2361
  %2718 = vmatpush2.msra.mxu0 %v2360
  %2719 = vmatprep.subr.mxu0 %v2310
  %2720 = vmatpush2.msra.mxu0 %v2309
  %2721 = vmatprep.subr.mxu0 %v2308
  %2722 = vmatpush2.msra.mxu0 %v2307
  %2723 = vmatprep.subr.mxu0 %v2257
  %2724 = vmatpush2.msra.mxu0 %v2256
  %2725 = vmatprep.subr.mxu0 %v2255
  %2726 = vmatpush2.msra.mxu0 %v2254
  %2727 = vmatprep.subr.mxu0 %v2205
  %2728 = vmatpush2.msra.mxu0 %v2204
  %2729 = vmatprep.subr.mxu0 %v2203
  %2730 = vmatpush2.msra.mxu0 %v2202
  %2731 = vmatprep.subr.mxu0 %v2153
  %2732 = vmatpush2.msra.mxu0 %v2152
  %2733 = vmatprep.subr.mxu0 %v2151
  %2734 = vmatpush2.msra.mxu0 %v2150
  %2735 = vmatprep.mubr.f32.mxu0 %v1690
  %2736 = vmatmul.mubr.f32.gmra.mxu0 %v1689
  %v2737 = vpop.f32.mrf.mxu0
  %v2738 = vadd.f32 0.0, %v2737
  %v2739 = vpop.f32.mrf.mxu0
  %v2740 = vadd.f32 0.0, %v2739
  %2741 = vdwg.mxu0
  %2742 = vmatprep.subr.mxu0 0.0
  %2743 = vmatpush1.msra.mxu0 %v1711
  %2744 = vmatprep.subr.mxu0 0.0
  %2745 = vmatpush1.msra.mxu0 %v1710
  %2746 = vmatprep.subr.mxu0 0.0
  %2747 = vmatpush1.msra.mxu0 %v1709
  %2748 = vmatprep.subr.mxu0 0.0
  %2749 = vmatpush1.msra.mxu0 %v1708
  %2750 = vmatprep.subr.mxu0 0.0
  %2751 = vmatpush1.msra.mxu0 %v1707
  %2752 = vmatprep.subr.mxu0 0.0
  %2753 = vmatpush1.msra.mxu0 %v1706
  %2754 = vmatprep.subr.mxu0 0.0
  %2755 = vmatpush1.msra.mxu0 %v1705
  %2756 = vmatprep.subr.mxu0 0.0
  %2757 = vmatpush1.msra.mxu0 %v1704
  %2758 = vmatprep.subr.mxu0 0.0
  %2759 = vmatpush1.msra.mxu0 %v1703
  %2760 = vmatprep.subr.mxu0 0.0
  %2761 = vmatpush1.msra.mxu0 %v1702
  %2762 = vmatprep.subr.mxu0 0.0
  %2763 = vmatpush1.msra.mxu0 %v1701
  %2764 = vmatprep.subr.mxu0 0.0
  %2765 = vmatpush1.msra.mxu0 %v1700
  %2766 = vmatprep.subr.mxu0 0.0
  %2767 = vmatpush1.msra.mxu0 %v1699
  %2768 = vmatprep.subr.mxu0 0.0
  %2769 = vmatpush1.msra.mxu0 %v1698
  %2770 = vmatprep.subr.mxu0 0.0
  %2771 = vmatpush1.msra.mxu0 %v1697
  %2772 = vmatprep.subr.mxu0 0.0
  %2773 = vmatpush1.msra.mxu0 %v1696
  %2774 = vmatprep.subr.mxu0 0.0
  %2775 = vmatpush2.msra.mxu0 %v1727
  %2776 = vmatprep.subr.mxu0 0.0
  %2777 = vmatpush2.msra.mxu0 %v1726
  %2778 = vmatprep.subr.mxu0 0.0
  %2779 = vmatpush2.msra.mxu0 %v1725
  %2780 = vmatprep.subr.mxu0 0.0
  %2781 = vmatpush2.msra.mxu0 %v1724
  %2782 = vmatprep.subr.mxu0 0.0
  %2783 = vmatpush2.msra.mxu0 %v1723
  %2784 = vmatprep.subr.mxu0 0.0
  %2785 = vmatpush2.msra.mxu0 %v1722
  %2786 = vmatprep.subr.mxu0 0.0
  %2787 = vmatpush2.msra.mxu0 %v1721
  %2788 = vmatprep.subr.mxu0 0.0
  %2789 = vmatpush2.msra.mxu0 %v1720
  %2790 = vmatprep.subr.mxu0 0.0
  %2791 = vmatpush2.msra.mxu0 %v1719
  %2792 = vmatprep.subr.mxu0 0.0
  %2793 = vmatpush2.msra.mxu0 %v1718
  %2794 = vmatprep.subr.mxu0 0.0
  %2795 = vmatpush2.msra.mxu0 %v1717
  %2796 = vmatprep.subr.mxu0 0.0
  %2797 = vmatpush2.msra.mxu0 %v1716
  %2798 = vmatprep.subr.mxu0 0.0
  %2799 = vmatpush2.msra.mxu0 %v1715
  %2800 = vmatprep.subr.mxu0 0.0
  %2801 = vmatpush2.msra.mxu0 %v1714
  %2802 = vmatprep.subr.mxu0 0.0
  %2803 = vmatpush2.msra.mxu0 %v1713
  %2804 = vmatprep.subr.mxu0 0.0
  %2805 = vmatpush2.msra.mxu0 %v1712
  %2806 = vmatprep.mubr.f32.mxu0 %v2740
  %2807 = vmatmul.mubr.f32.gmra.mxu0 %v2738
  %v2808 = vpop.f32.mrf.mxu0
  %v2809 = vadd.f32 %v2597, %v2808
  %v2810 = vpop.f32.mrf.mxu0
  %2811 = vdwg.mxu0
  %2812 = vst.msk [vmem:[%s13 + $0x8] sm:$0xff] %vm2669, %v2809
  // Predicated region
  $region46: #{_forward_impl.1} parent=0 // pred_check
    _
  $region47: #{_forward_impl.1} parent=0 // pred_check_branch
    %2814 = sbr.rel (0) target = $region49
  $region48: #{_forward_impl.1} parent=0 // pred_region
    _
  $region49: #{_forward_impl.1} parent=0 // pred_fallthru
    _
  // Predicated region
  $region50: #{_forward_impl.1} parent=0 // pred_check
    _
  $region51: #{_forward_impl.1} parent=0 // pred_check_branch
    %2816 = sbr.rel (0) target = $region53
  $region52: #{_forward_impl.1} parent=0 // pred_region
    _
  $region53: #{_forward_impl.1} parent=0 // pred_fallthru
    _
  // Predicated region
  $region54: #{_forward_impl.1} parent=0 // pred_check
    _
  $region55: #{_forward_impl.1} parent=0 // pred_check_branch
    %2818 = sbr.rel (0) target = $region57
  $region56: #{_forward_impl.1} parent=0 // pred_region
    _
  $region57: #{_forward_impl.1} parent=0 // pred_fallthru
    _
  // Predicated region
  $region58: #{_forward_impl.1} parent=0 // pred_check
    _
  $region59: #{_forward_impl.1} parent=0 // pred_check_branch
    %2820 = sbr.rel (0) target = $region61
  $region60: #{_forward_impl.1} parent=0 // pred_region
    _
  $region61: #{_forward_impl.1} parent=0 // pred_fallthru
    _
  // Predicated region
  $region62: #{_forward_impl.1} parent=0 // pred_check
    _
  $region63: #{_forward_impl.1} parent=0 // pred_check_branch
    %2822 = sbr.rel (0) target = $region65
  $region64: #{_forward_impl.1} parent=0 // pred_region
    _
  $region65: #{_forward_impl.1} parent=0 // pred_fallthru
    _
  // Predicated region
  $region66: #{_forward_impl.1} parent=0 // pred_check
    _
  $region67: #{_forward_impl.1} parent=0 // pred_check_branch
    %2824 = sbr.rel (0) target = $region69
  $region68: #{_forward_impl.1} parent=0 // pred_region
    _
  $region69: #{_forward_impl.1} parent=0 // pred_fallthru
    _

</llo_original>
